<compile_context>
chip_gen: v6e
topology: v6e:2x2x1
jax: 0.10.0
libtpu: 0.0.40
codegen_flags: <defaults>
</compile_context>

<pallas_src>
import numpy as np

import jax
import jax.numpy as jnp
from jax.experimental import pallas as pl
from jax.experimental.pallas import tpu as pltpu


# ----------------------------------------------------------------------------
# Parameters (deterministic, synthetic) — PyTorch layouts (OIHW, [out,in])
# ----------------------------------------------------------------------------
def init_params(key):
    ks = jax.random.split(key, 8)

    def u(k, shape, fan_in):
        bound = 1.0 / jnp.sqrt(fan_in)
        return jax.random.uniform(k, shape, jnp.float32, -bound, bound)

    return {
        "conv1_w": u(ks[0], (8, 4, 3, 3), 4 * 9),
        "conv1_b": u(ks[1], (8,), 4 * 9),
        "conv2_w": u(ks[2], (16, 8, 3, 3), 8 * 9),
        "conv2_b": u(ks[3], (16,), 8 * 9),
        "fc1_w": u(ks[4], (32, 256), 256),
        "fc1_b": u(ks[5], (32,), 256),
        "fc2_w": u(ks[6], (10, 32), 32),
        "fc2_b": u(ks[7], (10,), 32),
    }


# ----------------------------------------------------------------------------
# One-time weight pre-transform (folds im2col, pooling selects, flatten, fc1)
# ----------------------------------------------------------------------------
def pack_params(p):
    f32 = jnp.float32
    k1 = p["conv1_w"].astype(f32)   # (O=8,  C=4,  3, 3)
    k2 = p["conv2_w"].astype(f32)   # (O=16, C=8,  3, 3)
    w1 = p["fc1_w"].astype(f32)     # (32, 256)
    w2 = p["fc2_w"].astype(f32)     # (10, 32)

    def conv_tap_mats(k, w_size):
        # M[ki, w_in*Cin + c, w*Cout + o] = K[o, c, ki, w_in - w + 1] (if valid)
        cout, cin, kh, kw = k.shape
        kj = np.arange(kw)[:, None, None]
        w_in = np.arange(w_size)[None, :, None]
        w = np.arange(w_size)[None, None, :]
        ind = (w_in == w + kj - 1).astype(np.float32)          # (3, W, W)
        m = jnp.einsum("ocij,jab->iacbo", k, jnp.asarray(ind))  # (ki,w_in,c,w,o)
        return m.reshape(kh, w_size * cin, w_size * cout)

    def row_shift_mats(h_size, kh=3):
        # (R[ki] @ A)[h, :] = A[h + ki - 1, :] with zero padding out of range
        r = np.zeros((kh, h_size, h_size), np.float32)
        for ki in range(kh):
            for h in range(h_size):
                g = h + ki - 1
                if 0 <= g < h_size:
                    r[ki, h, g] = 1.0
        return jnp.asarray(r)

    def h_pool_sel(h_out):
        e = np.zeros((h_out, 2 * h_out), np.float32)
        o = np.zeros((h_out, 2 * h_out), np.float32)
        for hp in range(h_out):
            e[hp, 2 * hp] = 1.0
            o[hp, 2 * hp + 1] = 1.0
        return jnp.asarray(e), jnp.asarray(o)

    def w_pool_sel(w_out, c):
        # select even / odd W lane-groups (group size = channels)
        e = np.zeros((2 * w_out * c, w_out * c), np.float32)
        o = np.zeros((2 * w_out * c, w_out * c), np.float32)
        for wp in range(w_out):
            for ch in range(c):
                e[(2 * wp) * c + ch, wp * c + ch] = 1.0
                o[(2 * wp + 1) * c + ch, wp * c + ch] = 1.0
        return jnp.asarray(e), jnp.asarray(o)

    hse, hso = h_pool_sel(8)        # (8, 16)
    wse, wso = w_pool_sel(8, 8)     # (128, 64)

    # Adaptive avg pool 8x8 -> 4x4 == 2x2 mean pool; H half as a left matmul.
    pavg = np.zeros((4, 8), np.float32)
    for hp in range(4):
        pavg[hp, 2 * hp] = 0.5
        pavg[hp, 2 * hp + 1] = 0.5

    # Fold avgpool-W + torch.flatten(NCHW) + fc1 weight:
    #   T[h', w*16 + c, j] = 0.5 * W1[j, c*16 + h'*4 + (w // 2)]
    w1r = w1.reshape(32, 16, 4, 4)                  # (j, c, h', w')
    bind = np.zeros((8, 4), np.float32)
    for w in range(8):
        bind[w, w // 2] = 1.0
    t = 0.5 * jnp.einsum("jchp,wp->hwcj", w1r, jnp.asarray(bind))  # (4,8,16,32)
    t = t.reshape(4, 128, 32)

    return dict(
        m1=conv_tap_mats(k1, 16),                                  # (3, 64, 128)
        r1=row_shift_mats(16),                                     # (3, 16, 16)
        b1t=jnp.tile(p["conv1_b"].astype(f32), 16).reshape(1, 128),
        hse=hse, hso=hso, wse=wse, wso=wso,
        m2=conv_tap_mats(k2, 8),                                   # (3, 64, 128)
        r2=row_shift_mats(8),                                      # (3, 8, 8)
        b2t=jnp.tile(p["conv2_b"].astype(f32), 8).reshape(1, 128),
        pavg=jnp.asarray(pavg),                                    # (4, 8)
        t=t,                                                       # (4, 128, 32)
        b1f=p["fc1_b"].astype(f32).reshape(1, 32),
        w2t=w2.T,                                                  # (32, 10)
        b2f=p["fc2_b"].astype(f32).reshape(1, 10),
    )


# ----------------------------------------------------------------------------
# Fused Pallas kernel: whole CNN1 forward, all activations resident in VMEM
# ----------------------------------------------------------------------------
def _cnn1_fused_kernel(x_ref, m1_ref, r1_ref, b1t_ref, hse_ref, hso_ref,
                       wse_ref, wso_ref, m2_ref, r2_ref, b2t_ref,
                       pavg_ref, t_ref, b1f_ref, w2t_ref, b2f_ref, out_ref):
    f32 = jnp.float32
    n_batch = x_ref.shape[0]

    def mm(a, b):
        return jnp.dot(a, b, preferred_element_type=f32)

    b1t, b2t = b1t_ref[...], b2t_ref[...]
    hse, hso = hse_ref[...], hso_ref[...]
    wse, wso = wse_ref[...], wso_ref[...]
    pavg = pavg_ref[...]
    b1f = b1f_ref[...]
    w2t = w2t_ref[...]
    b2f = b2f_ref[...]

    for n in range(n_batch):  # tiny static batch, unrolled
        a0 = x_ref[n]                                        # (16, 64) [h, w*4+c]

        # conv1 (3x3, pad 1, 4->8) + ReLU — 3 row-shift taps, lane-dense (128)
        o1 = mm(mm(r1_ref[0], a0), m1_ref[0])
        o1 = o1 + mm(mm(r1_ref[1], a0), m1_ref[1])
        o1 = o1 + mm(mm(r1_ref[2], a0), m1_ref[2])           # (16, 128) [h, w*8+o]
        a1 = jnp.maximum(o1 + b1t, 0.0)

        # MaxPool2d(2): H via even/odd row selects, W via even/odd lane-group selects
        rmax = jnp.maximum(mm(hse, a1), mm(hso, a1))         # (8, 128)
        pool1 = jnp.maximum(mm(rmax, wse), mm(rmax, wso))    # (8, 64)  [h', w'*8+c]

        # conv2 (3x3, pad 1, 8->16) + ReLU6
        o2 = mm(mm(r2_ref[0], pool1), m2_ref[0])
        o2 = o2 + mm(mm(r2_ref[1], pool1), m2_ref[1])
        o2 = o2 + mm(mm(r2_ref[2], pool1), m2_ref[2])        # (8, 128) [h, w*16+o]
        a2 = jnp.clip(o2 + b2t, 0.0, 6.0)

        # AdaptiveAvgPool2d((4,4)): H half as a matmul; W half + NCHW flatten
        # permutation + fc1 weight are folded into t_ref.
        d = mm(pavg, a2)                                     # (4, 128)
        y1 = b1f
        for hp in range(4):
            y1 = y1 + mm(d[hp:hp + 1, :], t_ref[hp])         # (1, 32)
        y1 = jnp.maximum(y1, 0.0)                            # fc1 + ReLU
        # TODO(synk): nn.Dropout(0.5) is identity in eval mode; no RNG mask applied.

        y2 = mm(y1, w2t) + b2f                               # fc2 -> (1, 10)
        out_ref[n:n + 1, :] = y2


def cnn1_forward(packed, x_nchw):
    n = x_nchw.shape[0]
    # Boundary-only layout fix: NCHW -> NHWC -> (N, H, W*C); everything else is
    # pre-folded into the packed weight matrices.
    x = jnp.transpose(x_nchw.astype(jnp.float32), (0, 2, 3, 1)).reshape(n, 16, 64)

    args = (x, packed["m1"], packed["r1"], packed["b1t"],
            packed["hse"], packed["hso"], packed["wse"], packed["wso"],
            packed["m2"], packed["r2"], packed["b2t"],
            packed["pavg"], packed["t"], packed["b1f"],
            packed["w2t"], packed["b2f"])
    vmem = lambda: pl.BlockSpec(memory_space=pltpu.MemorySpace.VMEM)
    return pl.pallas_call(
        _cnn1_fused_kernel,
        out_shape=jax.ShapeDtypeStruct((n, 10), jnp.float32),
        in_specs=[vmem() for _ in args],
        out_specs=vmem(),
    )(*args)


# ----------------------------------------------------------------------------
# Pure-JAX reference (same instantiation) for a correctness self-check
# ----------------------------------------------------------------------------
def reference_forward(params, x):
    x = x.astype(jnp.float32)
    dn = ("NCHW", "OIHW", "NCHW")
    y = jax.lax.conv_general_dilated(x, params["conv1_w"], (1, 1), "SAME",
                                     dimension_numbers=dn)
    y = jax.nn.relu(y + params["conv1_b"][None, :, None, None])
    y = jax.lax.reduce_window(y, -jnp.inf, jax.lax.max,
                              (1, 1, 2, 2), (1, 1, 2, 2), "VALID")
    y = jax.lax.conv_general_dilated(y, params["conv2_w"], (1, 1), "SAME",
                                     dimension_numbers=dn)
    y = jnp.clip(y + params["conv2_b"][None, :, None, None], 0.0, 6.0)
    y = jax.lax.reduce_window(y, 0.0, jax.lax.add,
                              (1, 1, 2, 2), (1, 1, 2, 2), "VALID") * 0.25
    y = y.reshape(y.shape[0], -1)
    y = jax.nn.relu(y @ params["fc1_w"].T + params["fc1_b"])
    return y @ params["fc2_w"].T + params["fc2_b"]


if __name__ == "__main__":
    key = jax.random.PRNGKey(0)
    k_param, k_x = jax.random.split(key)
    params = init_params(k_param)
    x = jax.random.normal(k_x, (2, 4, 16, 16), jnp.float32)  # NCHW, like PyTorch

    packed = pack_params(params)  # one-time weight pre-transform (outside jit)

    out = jax.block_until_ready(jax.jit(cnn1_forward)(packed, x))
    assert out.shape == (2, 10) and out.dtype == jnp.float32

    ref = jax.block_until_ready(jax.jit(reference_forward)(params, x))
    assert jnp.allclose(out, ref, rtol=2e-2, atol=2e-3), (out, ref)

    print("KERNEL_OK")
</pallas_src>

<mosaic_0001>
module attributes {stable_mosaic.version = 11 : i64} {
  func.func @_cnn1_fused_kernel(%arg0: memref<2x16x64xf32, #tpu.memory_space<vmem>>, %arg1: memref<3x64x128xf32, #tpu.memory_space<vmem>>, %arg2: memref<3x16x16xf32, #tpu.memory_space<vmem>>, %arg3: memref<1x128xf32, #tpu.memory_space<vmem>>, %arg4: memref<8x16xf32, #tpu.memory_space<vmem>>, %arg5: memref<8x16xf32, #tpu.memory_space<vmem>>, %arg6: memref<128x64xf32, #tpu.memory_space<vmem>>, %arg7: memref<128x64xf32, #tpu.memory_space<vmem>>, %arg8: memref<3x64x128xf32, #tpu.memory_space<vmem>>, %arg9: memref<3x8x8xf32, #tpu.memory_space<vmem>>, %arg10: memref<1x128xf32, #tpu.memory_space<vmem>>, %arg11: memref<4x8xf32, #tpu.memory_space<vmem>>, %arg12: memref<4x128x32xf32, #tpu.memory_space<vmem>>, %arg13: memref<1x32xf32, #tpu.memory_space<vmem>>, %arg14: memref<32x10xf32, #tpu.memory_space<vmem>>, %arg15: memref<1x10xf32, #tpu.memory_space<vmem>>, %arg16: memref<2x10xf32, #tpu.memory_space<vmem>>) attributes {dimension_semantics = [], scalar_prefetch = 0 : i64, scratch_operands = 0 : i64, tpu.core_type = #tpu.core_type<tc>} {
    %c0 = arith.constant 0 : index
    %c0_0 = arith.constant 0 : index
    %0 = vector.load %arg3[%c0, %c0_0] : memref<1x128xf32, #tpu.memory_space<vmem>>, vector<1x128xf32>
    %c0_1 = arith.constant 0 : index
    %c0_2 = arith.constant 0 : index
    %1 = vector.load %arg10[%c0_1, %c0_2] : memref<1x128xf32, #tpu.memory_space<vmem>>, vector<1x128xf32>
    %c0_3 = arith.constant 0 : index
    %c0_4 = arith.constant 0 : index
    %2 = vector.load %arg4[%c0_3, %c0_4] : memref<8x16xf32, #tpu.memory_space<vmem>>, vector<8x16xf32>
    %c0_5 = arith.constant 0 : index
    %c0_6 = arith.constant 0 : index
    %3 = vector.load %arg5[%c0_5, %c0_6] : memref<8x16xf32, #tpu.memory_space<vmem>>, vector<8x16xf32>
    %c0_7 = arith.constant 0 : index
    %c0_8 = arith.constant 0 : index
    %4 = vector.load %arg6[%c0_7, %c0_8] : memref<128x64xf32, #tpu.memory_space<vmem>>, vector<128x64xf32>
    %c0_9 = arith.constant 0 : index
    %c0_10 = arith.constant 0 : index
    %5 = vector.load %arg7[%c0_9, %c0_10] : memref<128x64xf32, #tpu.memory_space<vmem>>, vector<128x64xf32>
    %c0_11 = arith.constant 0 : index
    %c0_12 = arith.constant 0 : index
    %6 = vector.load %arg11[%c0_11, %c0_12] : memref<4x8xf32, #tpu.memory_space<vmem>>, vector<4x8xf32>
    %c0_13 = arith.constant 0 : index
    %c0_14 = arith.constant 0 : index
    %7 = vector.load %arg13[%c0_13, %c0_14] : memref<1x32xf32, #tpu.memory_space<vmem>>, vector<1x32xf32>
    %c0_15 = arith.constant 0 : index
    %c0_16 = arith.constant 0 : index
    %8 = vector.load %arg14[%c0_15, %c0_16] : memref<32x10xf32, #tpu.memory_space<vmem>>, vector<32x10xf32>
    %c0_17 = arith.constant 0 : index
    %c0_18 = arith.constant 0 : index
    %9 = vector.load %arg15[%c0_17, %c0_18] : memref<1x10xf32, #tpu.memory_space<vmem>>, vector<1x10xf32>
    %c0_19 = arith.constant 0 : index
    %c0_20 = arith.constant 0 : index
    %c0_21 = arith.constant 0 : index
    %10 = vector.load %arg0[%c0_19, %c0_20, %c0_21] : memref<2x16x64xf32, #tpu.memory_space<vmem>>, vector<1x16x64xf32>
    %11 = vector.shape_cast %10 : vector<1x16x64xf32> to vector<16x64xf32>
    %c0_22 = arith.constant 0 : index
    %c0_23 = arith.constant 0 : index
    %c0_24 = arith.constant 0 : index
    %12 = vector.load %arg2[%c0_22, %c0_23, %c0_24] : memref<3x16x16xf32, #tpu.memory_space<vmem>>, vector<1x16x16xf32>
    %13 = vector.shape_cast %12 : vector<1x16x16xf32> to vector<16x16xf32>
    %cst = arith.constant dense<0.000000e+00> : vector<16x64xf32>
    %14 = tpu.matmul %13, %11, %cst {dimension_numbers = #tpu.dot_dimension_numbers<[1], [0], [0], [1], [0, 0, 1, 1], [], []>} : vector<16x16xf32>, vector<16x64xf32>, vector<16x64xf32> -> vector<16x64xf32>
    %c0_25 = arith.constant 0 : index
    %c0_26 = arith.constant 0 : index
    %c0_27 = arith.constant 0 : index
    %15 = vector.load %arg1[%c0_25, %c0_26, %c0_27] : memref<3x64x128xf32, #tpu.memory_space<vmem>>, vector<1x64x128xf32>
    %16 = vector.shape_cast %15 : vector<1x64x128xf32> to vector<64x128xf32>
    %cst_28 = arith.constant dense<0.000000e+00> : vector<16x128xf32>
    %17 = tpu.matmul %14, %16, %cst_28 {dimension_numbers = #tpu.dot_dimension_numbers<[1], [0], [0], [1], [0, 0, 1, 1], [], []>} : vector<16x64xf32>, vector<64x128xf32>, vector<16x128xf32> -> vector<16x128xf32>
    %c1 = arith.constant 1 : index
    %c0_29 = arith.constant 0 : index
    %c0_30 = arith.constant 0 : index
    %18 = vector.load %arg2[%c1, %c0_29, %c0_30] : memref<3x16x16xf32, #tpu.memory_space<vmem>>, vector<1x16x16xf32>
    %19 = vector.shape_cast %18 : vector<1x16x16xf32> to vector<16x16xf32>
    %cst_31 = arith.constant dense<0.000000e+00> : vector<16x64xf32>
    %20 = tpu.matmul %19, %11, %cst_31 {dimension_numbers = #tpu.dot_dimension_numbers<[1], [0], [0], [1], [0, 0, 1, 1], [], []>} : vector<16x16xf32>, vector<16x64xf32>, vector<16x64xf32> -> vector<16x64xf32>
    %c1_32 = arith.constant 1 : index
    %c0_33 = arith.constant 0 : index
    %c0_34 = arith.constant 0 : index
    %21 = vector.load %arg1[%c1_32, %c0_33, %c0_34] : memref<3x64x128xf32, #tpu.memory_space<vmem>>, vector<1x64x128xf32>
    %22 = vector.shape_cast %21 : vector<1x64x128xf32> to vector<64x128xf32>
    %cst_35 = arith.constant dense<0.000000e+00> : vector<16x128xf32>
    %23 = tpu.matmul %20, %22, %cst_35 {dimension_numbers = #tpu.dot_dimension_numbers<[1], [0], [0], [1], [0, 0, 1, 1], [], []>} : vector<16x64xf32>, vector<64x128xf32>, vector<16x128xf32> -> vector<16x128xf32>
    %24 = arith.addf %17, %23 : vector<16x128xf32>
    %c2 = arith.constant 2 : index
    %c0_36 = arith.constant 0 : index
    %c0_37 = arith.constant 0 : index
    %25 = vector.load %arg2[%c2, %c0_36, %c0_37] : memref<3x16x16xf32, #tpu.memory_space<vmem>>, vector<1x16x16xf32>
    %26 = vector.shape_cast %25 : vector<1x16x16xf32> to vector<16x16xf32>
    %cst_38 = arith.constant dense<0.000000e+00> : vector<16x64xf32>
    %27 = tpu.matmul %26, %11, %cst_38 {dimension_numbers = #tpu.dot_dimension_numbers<[1], [0], [0], [1], [0, 0, 1, 1], [], []>} : vector<16x16xf32>, vector<16x64xf32>, vector<16x64xf32> -> vector<16x64xf32>
    %c2_39 = arith.constant 2 : index
    %c0_40 = arith.constant 0 : index
    %c0_41 = arith.constant 0 : index
    %28 = vector.load %arg1[%c2_39, %c0_40, %c0_41] : memref<3x64x128xf32, #tpu.memory_space<vmem>>, vector<1x64x128xf32>
    %29 = vector.shape_cast %28 : vector<1x64x128xf32> to vector<64x128xf32>
    %cst_42 = arith.constant dense<0.000000e+00> : vector<16x128xf32>
    %30 = tpu.matmul %27, %29, %cst_42 {dimension_numbers = #tpu.dot_dimension_numbers<[1], [0], [0], [1], [0, 0, 1, 1], [], []>} : vector<16x64xf32>, vector<64x128xf32>, vector<16x128xf32> -> vector<16x128xf32>
    %31 = arith.addf %24, %30 : vector<16x128xf32>
    %32 = vector.broadcast %0 : vector<1x128xf32> to vector<16x128xf32>
    %33 = arith.addf %31, %32 : vector<16x128xf32>
    %cst_43 = arith.constant 0.000000e+00 : f32
    %34 = vector.broadcast %cst_43 : f32 to vector<16x128xf32>
    %35 = arith.maximumf %33, %34 : vector<16x128xf32>
    %cst_44 = arith.constant dense<0.000000e+00> : vector<8x128xf32>
    %36 = tpu.matmul %2, %35, %cst_44 {dimension_numbers = #tpu.dot_dimension_numbers<[1], [0], [0], [1], [0, 0, 1, 1], [], []>} : vector<8x16xf32>, vector<16x128xf32>, vector<8x128xf32> -> vector<8x128xf32>
    %cst_45 = arith.constant dense<0.000000e+00> : vector<8x128xf32>
    %37 = tpu.matmul %3, %35, %cst_45 {dimension_numbers = #tpu.dot_dimension_numbers<[1], [0], [0], [1], [0, 0, 1, 1], [], []>} : vector<8x16xf32>, vector<16x128xf32>, vector<8x128xf32> -> vector<8x128xf32>
    %38 = arith.maximumf %36, %37 : vector<8x128xf32>
    %cst_46 = arith.constant dense<0.000000e+00> : vector<8x64xf32>
    %39 = tpu.matmul %38, %4, %cst_46 {dimension_numbers = #tpu.dot_dimension_numbers<[1], [0], [0], [1], [0, 0, 1, 1], [], []>} : vector<8x128xf32>, vector<128x64xf32>, vector<8x64xf32> -> vector<8x64xf32>
    %cst_47 = arith.constant dense<0.000000e+00> : vector<8x64xf32>
    %40 = tpu.matmul %38, %5, %cst_47 {dimension_numbers = #tpu.dot_dimension_numbers<[1], [0], [0], [1], [0, 0, 1, 1], [], []>} : vector<8x128xf32>, vector<128x64xf32>, vector<8x64xf32> -> vector<8x64xf32>
    %41 = arith.maximumf %39, %40 : vector<8x64xf32>
    %c0_48 = arith.constant 0 : index
    %c0_49 = arith.constant 0 : index
    %c0_50 = arith.constant 0 : index
    %42 = vector.load %arg9[%c0_48, %c0_49, %c0_50] : memref<3x8x8xf32, #tpu.memory_space<vmem>>, vector<1x8x8xf32>
    %43 = vector.shape_cast %42 : vector<1x8x8xf32> to vector<8x8xf32>
    %cst_51 = arith.constant dense<0.000000e+00> : vector<8x64xf32>
    %44 = tpu.matmul %43, %41, %cst_51 {dimension_numbers = #tpu.dot_dimension_numbers<[1], [0], [0], [1], [0, 0, 1, 1], [], []>} : vector<8x8xf32>, vector<8x64xf32>, vector<8x64xf32> -> vector<8x64xf32>
    %c0_52 = arith.constant 0 : index
    %c0_53 = arith.constant 0 : index
    %c0_54 = arith.constant 0 : index
    %45 = vector.load %arg8[%c0_52, %c0_53, %c0_54] : memref<3x64x128xf32, #tpu.memory_space<vmem>>, vector<1x64x128xf32>
    %46 = vector.shape_cast %45 : vector<1x64x128xf32> to vector<64x128xf32>
    %cst_55 = arith.constant dense<0.000000e+00> : vector<8x128xf32>
    %47 = tpu.matmul %44, %46, %cst_55 {dimension_numbers = #tpu.dot_dimension_numbers<[1], [0], [0], [1], [0, 0, 1, 1], [], []>} : vector<8x64xf32>, vector<64x128xf32>, vector<8x128xf32> -> vector<8x128xf32>
    %c1_56 = arith.constant 1 : index
    %c0_57 = arith.constant 0 : index
    %c0_58 = arith.constant 0 : index
    %48 = vector.load %arg9[%c1_56, %c0_57, %c0_58] : memref<3x8x8xf32, #tpu.memory_space<vmem>>, vector<1x8x8xf32>
    %49 = vector.shape_cast %48 : vector<1x8x8xf32> to vector<8x8xf32>
    %cst_59 = arith.constant dense<0.000000e+00> : vector<8x64xf32>
    %50 = tpu.matmul %49, %41, %cst_59 {dimension_numbers = #tpu.dot_dimension_numbers<[1], [0], [0], [1], [0, 0, 1, 1], [], []>} : vector<8x8xf32>, vector<8x64xf32>, vector<8x64xf32> -> vector<8x64xf32>
    %c1_60 = arith.constant 1 : index
    %c0_61 = arith.constant 0 : index
    %c0_62 = arith.constant 0 : index
    %51 = vector.load %arg8[%c1_60, %c0_61, %c0_62] : memref<3x64x128xf32, #tpu.memory_space<vmem>>, vector<1x64x128xf32>
    %52 = vector.shape_cast %51 : vector<1x64x128xf32> to vector<64x128xf32>
    %cst_63 = arith.constant dense<0.000000e+00> : vector<8x128xf32>
    %53 = tpu.matmul %50, %52, %cst_63 {dimension_numbers = #tpu.dot_dimension_numbers<[1], [0], [0], [1], [0, 0, 1, 1], [], []>} : vector<8x64xf32>, vector<64x128xf32>, vector<8x128xf32> -> vector<8x128xf32>
    %54 = arith.addf %47, %53 : vector<8x128xf32>
    %c2_64 = arith.constant 2 : index
    %c0_65 = arith.constant 0 : index
    %c0_66 = arith.constant 0 : index
    %55 = vector.load %arg9[%c2_64, %c0_65, %c0_66] : memref<3x8x8xf32, #tpu.memory_space<vmem>>, vector<1x8x8xf32>
    %56 = vector.shape_cast %55 : vector<1x8x8xf32> to vector<8x8xf32>
    %cst_67 = arith.constant dense<0.000000e+00> : vector<8x64xf32>
    %57 = tpu.matmul %56, %41, %cst_67 {dimension_numbers = #tpu.dot_dimension_numbers<[1], [0], [0], [1], [0, 0, 1, 1], [], []>} : vector<8x8xf32>, vector<8x64xf32>, vector<8x64xf32> -> vector<8x64xf32>
    %c2_68 = arith.constant 2 : index
    %c0_69 = arith.constant 0 : index
    %c0_70 = arith.constant 0 : index
    %58 = vector.load %arg8[%c2_68, %c0_69, %c0_70] : memref<3x64x128xf32, #tpu.memory_space<vmem>>, vector<1x64x128xf32>
    %59 = vector.shape_cast %58 : vector<1x64x128xf32> to vector<64x128xf32>
    %cst_71 = arith.constant dense<0.000000e+00> : vector<8x128xf32>
    %60 = tpu.matmul %57, %59, %cst_71 {dimension_numbers = #tpu.dot_dimension_numbers<[1], [0], [0], [1], [0, 0, 1, 1], [], []>} : vector<8x64xf32>, vector<64x128xf32>, vector<8x128xf32> -> vector<8x128xf32>
    %61 = arith.addf %54, %60 : vector<8x128xf32>
    %62 = vector.broadcast %1 : vector<1x128xf32> to vector<8x128xf32>
    %63 = arith.addf %61, %62 : vector<8x128xf32>
    %cst_72 = arith.constant 0.000000e+00 : f32
    %cst_73 = arith.constant 6.000000e+00 : f32
    %64 = vector.broadcast %cst_72 : f32 to vector<8x128xf32>
    %65 = arith.maximumf %64, %63 : vector<8x128xf32>
    %66 = vector.broadcast %cst_73 : f32 to vector<8x128xf32>
    %67 = arith.minimumf %66, %65 : vector<8x128xf32>
    %cst_74 = arith.constant dense<0.000000e+00> : vector<4x128xf32>
    %68 = tpu.matmul %6, %67, %cst_74 {dimension_numbers = #tpu.dot_dimension_numbers<[1], [0], [0], [1], [0, 0, 1, 1], [], []>} : vector<4x8xf32>, vector<8x128xf32>, vector<4x128xf32> -> vector<4x128xf32>
    %69 = vector.extract_strided_slice %68 {offsets = [0, 0], sizes = [1, 128], strides = [1, 1]} : vector<4x128xf32> to vector<1x128xf32>
    %c0_75 = arith.constant 0 : index
    %c0_76 = arith.constant 0 : index
    %c0_77 = arith.constant 0 : index
    %70 = vector.load %arg12[%c0_75, %c0_76, %c0_77] : memref<4x128x32xf32, #tpu.memory_space<vmem>>, vector<1x128x32xf32>
    %71 = vector.shape_cast %70 : vector<1x128x32xf32> to vector<128x32xf32>
    %cst_78 = arith.constant dense<0.000000e+00> : vector<1x32xf32>
    %72 = tpu.matmul %69, %71, %cst_78 {dimension_numbers = #tpu.dot_dimension_numbers<[1], [0], [0], [1], [0, 0, 1, 1], [], []>} : vector<1x128xf32>, vector<128x32xf32>, vector<1x32xf32> -> vector<1x32xf32>
    %73 = arith.addf %7, %72 : vector<1x32xf32>
    %74 = vector.extract_strided_slice %68 {offsets = [1, 0], sizes = [1, 128], strides = [1, 1]} : vector<4x128xf32> to vector<1x128xf32>
    %c1_79 = arith.constant 1 : index
    %c0_80 = arith.constant 0 : index
    %c0_81 = arith.constant 0 : index
    %75 = vector.load %arg12[%c1_79, %c0_80, %c0_81] : memref<4x128x32xf32, #tpu.memory_space<vmem>>, vector<1x128x32xf32>
    %76 = vector.shape_cast %75 : vector<1x128x32xf32> to vector<128x32xf32>
    %cst_82 = arith.constant dense<0.000000e+00> : vector<1x32xf32>
    %77 = tpu.matmul %74, %76, %cst_82 {dimension_numbers = #tpu.dot_dimension_numbers<[1], [0], [0], [1], [0, 0, 1, 1], [], []>} : vector<1x128xf32>, vector<128x32xf32>, vector<1x32xf32> -> vector<1x32xf32>
    %78 = arith.addf %73, %77 : vector<1x32xf32>
    %79 = vector.extract_strided_slice %68 {offsets = [2, 0], sizes = [1, 128], strides = [1, 1]} : vector<4x128xf32> to vector<1x128xf32>
    %c2_83 = arith.constant 2 : index
    %c0_84 = arith.constant 0 : index
    %c0_85 = arith.constant 0 : index
    %80 = vector.load %arg12[%c2_83, %c0_84, %c0_85] : memref<4x128x32xf32, #tpu.memory_space<vmem>>, vector<1x128x32xf32>
    %81 = vector.shape_cast %80 : vector<1x128x32xf32> to vector<128x32xf32>
    %cst_86 = arith.constant dense<0.000000e+00> : vector<1x32xf32>
    %82 = tpu.matmul %79, %81, %cst_86 {dimension_numbers = #tpu.dot_dimension_numbers<[1], [0], [0], [1], [0, 0, 1, 1], [], []>} : vector<1x128xf32>, vector<128x32xf32>, vector<1x32xf32> -> vector<1x32xf32>
    %83 = arith.addf %78, %82 : vector<1x32xf32>
    %84 = vector.extract_strided_slice %68 {offsets = [3, 0], sizes = [1, 128], strides = [1, 1]} : vector<4x128xf32> to vector<1x128xf32>
    %c3 = arith.constant 3 : index
    %c0_87 = arith.constant 0 : index
    %c0_88 = arith.constant 0 : index
    %85 = vector.load %arg12[%c3, %c0_87, %c0_88] : memref<4x128x32xf32, #tpu.memory_space<vmem>>, vector<1x128x32xf32>
    %86 = vector.shape_cast %85 : vector<1x128x32xf32> to vector<128x32xf32>
    %cst_89 = arith.constant dense<0.000000e+00> : vector<1x32xf32>
    %87 = tpu.matmul %84, %86, %cst_89 {dimension_numbers = #tpu.dot_dimension_numbers<[1], [0], [0], [1], [0, 0, 1, 1], [], []>} : vector<1x128xf32>, vector<128x32xf32>, vector<1x32xf32> -> vector<1x32xf32>
    %88 = arith.addf %83, %87 : vector<1x32xf32>
    %cst_90 = arith.constant 0.000000e+00 : f32
    %89 = vector.broadcast %cst_90 : f32 to vector<1x32xf32>
    %90 = arith.maximumf %88, %89 : vector<1x32xf32>
    %cst_91 = arith.constant dense<0.000000e+00> : vector<1x10xf32>
    %91 = tpu.matmul %90, %8, %cst_91 {dimension_numbers = #tpu.dot_dimension_numbers<[1], [0], [0], [1], [0, 0, 1, 1], [], []>} : vector<1x32xf32>, vector<32x10xf32>, vector<1x10xf32> -> vector<1x10xf32>
    %92 = arith.addf %91, %9 : vector<1x10xf32>
    %c0_92 = arith.constant 0 : index
    %c0_93 = arith.constant 0 : index
    %93 = vector.load %arg16[%c0_92, %c0_93] : memref<2x10xf32, #tpu.memory_space<vmem>>, vector<1x10xf32>
    tpu.vector_store %arg16[%c0_92, %c0_93], %92 {strides = array<i32>} : memref<2x10xf32, #tpu.memory_space<vmem>>, vector<1x10xf32>,
    %c1_94 = arith.constant 1 : index
    %c0_95 = arith.constant 0 : index
    %c0_96 = arith.constant 0 : index
    %94 = vector.load %arg0[%c1_94, %c0_95, %c0_96] : memref<2x16x64xf32, #tpu.memory_space<vmem>>, vector<1x16x64xf32>
    %95 = vector.shape_cast %94 : vector<1x16x64xf32> to vector<16x64xf32>
    %c0_97 = arith.constant 0 : index
    %c0_98 = arith.constant 0 : index
    %c0_99 = arith.constant 0 : index
    %96 = vector.load %arg2[%c0_97, %c0_98, %c0_99] : memref<3x16x16xf32, #tpu.memory_space<vmem>>, vector<1x16x16xf32>
    %97 = vector.shape_cast %96 : vector<1x16x16xf32> to vector<16x16xf32>
    %cst_100 = arith.constant dense<0.000000e+00> : vector<16x64xf32>
    %98 = tpu.matmul %97, %95, %cst_100 {dimension_numbers = #tpu.dot_dimension_numbers<[1], [0], [0], [1], [0, 0, 1, 1], [], []>} : vector<16x16xf32>, vector<16x64xf32>, vector<16x64xf32> -> vector<16x64xf32>
    %c0_101 = arith.constant 0 : index
    %c0_102 = arith.constant 0 : index
    %c0_103 = arith.constant 0 : index
    %99 = vector.load %arg1[%c0_101, %c0_102, %c0_103] : memref<3x64x128xf32, #tpu.memory_space<vmem>>, vector<1x64x128xf32>
    %100 = vector.shape_cast %99 : vector<1x64x128xf32> to vector<64x128xf32>
    %cst_104 = arith.constant dense<0.000000e+00> : vector<16x128xf32>
    %101 = tpu.matmul %98, %100, %cst_104 {dimension_numbers = #tpu.dot_dimension_numbers<[1], [0], [0], [1], [0, 0, 1, 1], [], []>} : vector<16x64xf32>, vector<64x128xf32>, vector<16x128xf32> -> vector<16x128xf32>
    %c1_105 = arith.constant 1 : index
    %c0_106 = arith.constant 0 : index
    %c0_107 = arith.constant 0 : index
    %102 = vector.load %arg2[%c1_105, %c0_106, %c0_107] : memref<3x16x16xf32, #tpu.memory_space<vmem>>, vector<1x16x16xf32>
    %103 = vector.shape_cast %102 : vector<1x16x16xf32> to vector<16x16xf32>
    %cst_108 = arith.constant dense<0.000000e+00> : vector<16x64xf32>
    %104 = tpu.matmul %103, %95, %cst_108 {dimension_numbers = #tpu.dot_dimension_numbers<[1], [0], [0], [1], [0, 0, 1, 1], [], []>} : vector<16x16xf32>, vector<16x64xf32>, vector<16x64xf32> -> vector<16x64xf32>
    %c1_109 = arith.constant 1 : index
    %c0_110 = arith.constant 0 : index
    %c0_111 = arith.constant 0 : index
    %105 = vector.load %arg1[%c1_109, %c0_110, %c0_111] : memref<3x64x128xf32, #tpu.memory_space<vmem>>, vector<1x64x128xf32>
    %106 = vector.shape_cast %105 : vector<1x64x128xf32> to vector<64x128xf32>
    %cst_112 = arith.constant dense<0.000000e+00> : vector<16x128xf32>
    %107 = tpu.matmul %104, %106, %cst_112 {dimension_numbers = #tpu.dot_dimension_numbers<[1], [0], [0], [1], [0, 0, 1, 1], [], []>} : vector<16x64xf32>, vector<64x128xf32>, vector<16x128xf32> -> vector<16x128xf32>
    %108 = arith.addf %101, %107 : vector<16x128xf32>
    %c2_113 = arith.constant 2 : index
    %c0_114 = arith.constant 0 : index
    %c0_115 = arith.constant 0 : index
    %109 = vector.load %arg2[%c2_113, %c0_114, %c0_115] : memref<3x16x16xf32, #tpu.memory_space<vmem>>, vector<1x16x16xf32>
    %110 = vector.shape_cast %109 : vector<1x16x16xf32> to vector<16x16xf32>
    %cst_116 = arith.constant dense<0.000000e+00> : vector<16x64xf32>
    %111 = tpu.matmul %110, %95, %cst_116 {dimension_numbers = #tpu.dot_dimension_numbers<[1], [0], [0], [1], [0, 0, 1, 1], [], []>} : vector<16x16xf32>, vector<16x64xf32>, vector<16x64xf32> -> vector<16x64xf32>
    %c2_117 = arith.constant 2 : index
    %c0_118 = arith.constant 0 : index
    %c0_119 = arith.constant 0 : index
    %112 = vector.load %arg1[%c2_117, %c0_118, %c0_119] : memref<3x64x128xf32, #tpu.memory_space<vmem>>, vector<1x64x128xf32>
    %113 = vector.shape_cast %112 : vector<1x64x128xf32> to vector<64x128xf32>
    %cst_120 = arith.constant dense<0.000000e+00> : vector<16x128xf32>
    %114 = tpu.matmul %111, %113, %cst_120 {dimension_numbers = #tpu.dot_dimension_numbers<[1], [0], [0], [1], [0, 0, 1, 1], [], []>} : vector<16x64xf32>, vector<64x128xf32>, vector<16x128xf32> -> vector<16x128xf32>
    %115 = arith.addf %108, %114 : vector<16x128xf32>
    %116 = vector.broadcast %0 : vector<1x128xf32> to vector<16x128xf32>
    %117 = arith.addf %115, %116 : vector<16x128xf32>
    %cst_121 = arith.constant 0.000000e+00 : f32
    %118 = vector.broadcast %cst_121 : f32 to vector<16x128xf32>
    %119 = arith.maximumf %117, %118 : vector<16x128xf32>
    %cst_122 = arith.constant dense<0.000000e+00> : vector<8x128xf32>
    %120 = tpu.matmul %2, %119, %cst_122 {dimension_numbers = #tpu.dot_dimension_numbers<[1], [0], [0], [1], [0, 0, 1, 1], [], []>} : vector<8x16xf32>, vector<16x128xf32>, vector<8x128xf32> -> vector<8x128xf32>
    %cst_123 = arith.constant dense<0.000000e+00> : vector<8x128xf32>
    %121 = tpu.matmul %3, %119, %cst_123 {dimension_numbers = #tpu.dot_dimension_numbers<[1], [0], [0], [1], [0, 0, 1, 1], [], []>} : vector<8x16xf32>, vector<16x128xf32>, vector<8x128xf32> -> vector<8x128xf32>
    %122 = arith.maximumf %120, %121 : vector<8x128xf32>
    %cst_124 = arith.constant dense<0.000000e+00> : vector<8x64xf32>
    %123 = tpu.matmul %122, %4, %cst_124 {dimension_numbers = #tpu.dot_dimension_numbers<[1], [0], [0], [1], [0, 0, 1, 1], [], []>} : vector<8x128xf32>, vector<128x64xf32>, vector<8x64xf32> -> vector<8x64xf32>
    %cst_125 = arith.constant dense<0.000000e+00> : vector<8x64xf32>
    %124 = tpu.matmul %122, %5, %cst_125 {dimension_numbers = #tpu.dot_dimension_numbers<[1], [0], [0], [1], [0, 0, 1, 1], [], []>} : vector<8x128xf32>, vector<128x64xf32>, vector<8x64xf32> -> vector<8x64xf32>
    %125 = arith.maximumf %123, %124 : vector<8x64xf32>
    %c0_126 = arith.constant 0 : index
    %c0_127 = arith.constant 0 : index
    %c0_128 = arith.constant 0 : index
    %126 = vector.load %arg9[%c0_126, %c0_127, %c0_128] : memref<3x8x8xf32, #tpu.memory_space<vmem>>, vector<1x8x8xf32>
    %127 = vector.shape_cast %126 : vector<1x8x8xf32> to vector<8x8xf32>
    %cst_129 = arith.constant dense<0.000000e+00> : vector<8x64xf32>
    %128 = tpu.matmul %127, %125, %cst_129 {dimension_numbers = #tpu.dot_dimension_numbers<[1], [0], [0], [1], [0, 0, 1, 1], [], []>} : vector<8x8xf32>, vector<8x64xf32>, vector<8x64xf32> -> vector<8x64xf32>
    %c0_130 = arith.constant 0 : index
    %c0_131 = arith.constant 0 : index
    %c0_132 = arith.constant 0 : index
    %129 = vector.load %arg8[%c0_130, %c0_131, %c0_132] : memref<3x64x128xf32, #tpu.memory_space<vmem>>, vector<1x64x128xf32>
    %130 = vector.shape_cast %129 : vector<1x64x128xf32> to vector<64x128xf32>
    %cst_133 = arith.constant dense<0.000000e+00> : vector<8x128xf32>
    %131 = tpu.matmul %128, %130, %cst_133 {dimension_numbers = #tpu.dot_dimension_numbers<[1], [0], [0], [1], [0, 0, 1, 1], [], []>} : vector<8x64xf32>, vector<64x128xf32>, vector<8x128xf32> -> vector<8x128xf32>
    %c1_134 = arith.constant 1 : index
    %c0_135 = arith.constant 0 : index
    %c0_136 = arith.constant 0 : index
    %132 = vector.load %arg9[%c1_134, %c0_135, %c0_136] : memref<3x8x8xf32, #tpu.memory_space<vmem>>, vector<1x8x8xf32>
    %133 = vector.shape_cast %132 : vector<1x8x8xf32> to vector<8x8xf32>
    %cst_137 = arith.constant dense<0.000000e+00> : vector<8x64xf32>
    %134 = tpu.matmul %133, %125, %cst_137 {dimension_numbers = #tpu.dot_dimension_numbers<[1], [0], [0], [1], [0, 0, 1, 1], [], []>} : vector<8x8xf32>, vector<8x64xf32>, vector<8x64xf32> -> vector<8x64xf32>
    %c1_138 = arith.constant 1 : index
    %c0_139 = arith.constant 0 : index
    %c0_140 = arith.constant 0 : index
    %135 = vector.load %arg8[%c1_138, %c0_139, %c0_140] : memref<3x64x128xf32, #tpu.memory_space<vmem>>, vector<1x64x128xf32>
    %136 = vector.shape_cast %135 : vector<1x64x128xf32> to vector<64x128xf32>
    %cst_141 = arith.constant dense<0.000000e+00> : vector<8x128xf32>
    %137 = tpu.matmul %134, %136, %cst_141 {dimension_numbers = #tpu.dot_dimension_numbers<[1], [0], [0], [1], [0, 0, 1, 1], [], []>} : vector<8x64xf32>, vector<64x128xf32>, vector<8x128xf32> -> vector<8x128xf32>
    %138 = arith.addf %131, %137 : vector<8x128xf32>
    %c2_142 = arith.constant 2 : index
    %c0_143 = arith.constant 0 : index
    %c0_144 = arith.constant 0 : index
    %139 = vector.load %arg9[%c2_142, %c0_143, %c0_144] : memref<3x8x8xf32, #tpu.memory_space<vmem>>, vector<1x8x8xf32>
    %140 = vector.shape_cast %139 : vector<1x8x8xf32> to vector<8x8xf32>
    %cst_145 = arith.constant dense<0.000000e+00> : vector<8x64xf32>
    %141 = tpu.matmul %140, %125, %cst_145 {dimension_numbers = #tpu.dot_dimension_numbers<[1], [0], [0], [1], [0, 0, 1, 1], [], []>} : vector<8x8xf32>, vector<8x64xf32>, vector<8x64xf32> -> vector<8x64xf32>
    %c2_146 = arith.constant 2 : index
    %c0_147 = arith.constant 0 : index
    %c0_148 = arith.constant 0 : index
    %142 = vector.load %arg8[%c2_146, %c0_147, %c0_148] : memref<3x64x128xf32, #tpu.memory_space<vmem>>, vector<1x64x128xf32>
    %143 = vector.shape_cast %142 : vector<1x64x128xf32> to vector<64x128xf32>
    %cst_149 = arith.constant dense<0.000000e+00> : vector<8x128xf32>
    %144 = tpu.matmul %141, %143, %cst_149 {dimension_numbers = #tpu.dot_dimension_numbers<[1], [0], [0], [1], [0, 0, 1, 1], [], []>} : vector<8x64xf32>, vector<64x128xf32>, vector<8x128xf32> -> vector<8x128xf32>
    %145 = arith.addf %138, %144 : vector<8x128xf32>
    %146 = vector.broadcast %1 : vector<1x128xf32> to vector<8x128xf32>
    %147 = arith.addf %145, %146 : vector<8x128xf32>
    %cst_150 = arith.constant 0.000000e+00 : f32
    %cst_151 = arith.constant 6.000000e+00 : f32
    %148 = vector.broadcast %cst_150 : f32 to vector<8x128xf32>
    %149 = arith.maximumf %148, %147 : vector<8x128xf32>
    %150 = vector.broadcast %cst_151 : f32 to vector<8x128xf32>
    %151 = arith.minimumf %150, %149 : vector<8x128xf32>
    %cst_152 = arith.constant dense<0.000000e+00> : vector<4x128xf32>
    %152 = tpu.matmul %6, %151, %cst_152 {dimension_numbers = #tpu.dot_dimension_numbers<[1], [0], [0], [1], [0, 0, 1, 1], [], []>} : vector<4x8xf32>, vector<8x128xf32>, vector<4x128xf32> -> vector<4x128xf32>
    %153 = vector.extract_strided_slice %152 {offsets = [0, 0], sizes = [1, 128], strides = [1, 1]} : vector<4x128xf32> to vector<1x128xf32>
    %c0_153 = arith.constant 0 : index
    %c0_154 = arith.constant 0 : index
    %c0_155 = arith.constant 0 : index
    %154 = vector.load %arg12[%c0_153, %c0_154, %c0_155] : memref<4x128x32xf32, #tpu.memory_space<vmem>>, vector<1x128x32xf32>
    %155 = vector.shape_cast %154 : vector<1x128x32xf32> to vector<128x32xf32>
    %cst_156 = arith.constant dense<0.000000e+00> : vector<1x32xf32>
    %156 = tpu.matmul %153, %155, %cst_156 {dimension_numbers = #tpu.dot_dimension_numbers<[1], [0], [0], [1], [0, 0, 1, 1], [], []>} : vector<1x128xf32>, vector<128x32xf32>, vector<1x32xf32> -> vector<1x32xf32>
    %157 = arith.addf %7, %156 : vector<1x32xf32>
    %158 = vector.extract_strided_slice %152 {offsets = [1, 0], sizes = [1, 128], strides = [1, 1]} : vector<4x128xf32> to vector<1x128xf32>
    %c1_157 = arith.constant 1 : index
    %c0_158 = arith.constant 0 : index
    %c0_159 = arith.constant 0 : index
    %159 = vector.load %arg12[%c1_157, %c0_158, %c0_159] : memref<4x128x32xf32, #tpu.memory_space<vmem>>, vector<1x128x32xf32>
    %160 = vector.shape_cast %159 : vector<1x128x32xf32> to vector<128x32xf32>
    %cst_160 = arith.constant dense<0.000000e+00> : vector<1x32xf32>
    %161 = tpu.matmul %158, %160, %cst_160 {dimension_numbers = #tpu.dot_dimension_numbers<[1], [0], [0], [1], [0, 0, 1, 1], [], []>} : vector<1x128xf32>, vector<128x32xf32>, vector<1x32xf32> -> vector<1x32xf32>
    %162 = arith.addf %157, %161 : vector<1x32xf32>
    %163 = vector.extract_strided_slice %152 {offsets = [2, 0], sizes = [1, 128], strides = [1, 1]} : vector<4x128xf32> to vector<1x128xf32>
    %c2_161 = arith.constant 2 : index
    %c0_162 = arith.constant 0 : index
    %c0_163 = arith.constant 0 : index
    %164 = vector.load %arg12[%c2_161, %c0_162, %c0_163] : memref<4x128x32xf32, #tpu.memory_space<vmem>>, vector<1x128x32xf32>
    %165 = vector.shape_cast %164 : vector<1x128x32xf32> to vector<128x32xf32>
    %cst_164 = arith.constant dense<0.000000e+00> : vector<1x32xf32>
    %166 = tpu.matmul %163, %165, %cst_164 {dimension_numbers = #tpu.dot_dimension_numbers<[1], [0], [0], [1], [0, 0, 1, 1], [], []>} : vector<1x128xf32>, vector<128x32xf32>, vector<1x32xf32> -> vector<1x32xf32>
    %167 = arith.addf %162, %166 : vector<1x32xf32>
    %168 = vector.extract_strided_slice %152 {offsets = [3, 0], sizes = [1, 128], strides = [1, 1]} : vector<4x128xf32> to vector<1x128xf32>
    %c3_165 = arith.constant 3 : index
    %c0_166 = arith.constant 0 : index
    %c0_167 = arith.constant 0 : index
    %169 = vector.load %arg12[%c3_165, %c0_166, %c0_167] : memref<4x128x32xf32, #tpu.memory_space<vmem>>, vector<1x128x32xf32>
    %170 = vector.shape_cast %169 : vector<1x128x32xf32> to vector<128x32xf32>
    %cst_168 = arith.constant dense<0.000000e+00> : vector<1x32xf32>
    %171 = tpu.matmul %168, %170, %cst_168 {dimension_numbers = #tpu.dot_dimension_numbers<[1], [0], [0], [1], [0, 0, 1, 1], [], []>} : vector<1x128xf32>, vector<128x32xf32>, vector<1x32xf32> -> vector<1x32xf32>
    %172 = arith.addf %167, %171 : vector<1x32xf32>
    %cst_169 = arith.constant 0.000000e+00 : f32
    %173 = vector.broadcast %cst_169 : f32 to vector<1x32xf32>
    %174 = arith.maximumf %172, %173 : vector<1x32xf32>
    %cst_170 = arith.constant dense<0.000000e+00> : vector<1x10xf32>
    %175 = tpu.matmul %174, %8, %cst_170 {dimension_numbers = #tpu.dot_dimension_numbers<[1], [0], [0], [1], [0, 0, 1, 1], [], []>} : vector<1x32xf32>, vector<32x10xf32>, vector<1x10xf32> -> vector<1x10xf32>
    %176 = arith.addf %175, %9 : vector<1x10xf32>
    %c1_171 = arith.constant 1 : index
    %c0_172 = arith.constant 0 : index
    %177 = vector.load %arg16[%c1_171, %c0_172] : memref<2x10xf32, #tpu.memory_space<vmem>>, vector<1x10xf32>
    tpu.vector_store %arg16[%c1_171, %c0_172], %176 {strides = array<i32>} : memref<2x10xf32, #tpu.memory_space<vmem>>, vector<1x10xf32>,
    return
  }
}

</mosaic_0001>

<llo_original>
// kernel: cnn1_forward.1
$region0: #{cnn1_forward.1}
  #allocation0 [shape = 'u32[]', space=smem, size = 0x4, offset = 0x4, fixed_abs, tag = 'smem constant byte address 0x4 - core index']
  #allocation1 [shape = 'u32[144,128]{1,0:T(1,128)}', space=vmem, size = 0x12000, scoped, tag = 'internal scratch']
  %s0 = inlined_call_operand.vmem [shape: f32[2,16,64], index: 0, kind: input, shape index: {}]
  %s1 = inlined_call_operand.vmem [shape: f32[3,64,128], index: 1, kind: input, shape index: {}]
  %s2 = inlined_call_operand.vmem [shape: f32[3,16,16], index: 2, kind: input, shape index: {}]
  %s3 = inlined_call_operand.vmem [shape: f32[1,128], index: 3, kind: input, shape index: {}]
  %s4 = inlined_call_operand.vmem [shape: f32[8,16], index: 4, kind: input, shape index: {}]
  %s5 = inlined_call_operand.vmem [shape: f32[8,16], index: 5, kind: input, shape index: {}]
  %s6 = inlined_call_operand.vmem [shape: f32[128,64], index: 6, kind: input, shape index: {}]
  %s7 = inlined_call_operand.vmem [shape: f32[128,64], index: 7, kind: input, shape index: {}]
  %s8 = inlined_call_operand.vmem [shape: f32[3,64,128], index: 8, kind: input, shape index: {}]
  %s9 = inlined_call_operand.vmem [shape: f32[3,8,8], index: 9, kind: input, shape index: {}]
  %s10 = inlined_call_operand.vmem [shape: f32[1,128], index: 10, kind: input, shape index: {}]
  %s11 = inlined_call_operand.vmem [shape: f32[4,8], index: 11, kind: input, shape index: {}]
  %s12 = inlined_call_operand.vmem [shape: f32[4,128,32], index: 12, kind: input, shape index: {}]
  %s13 = inlined_call_operand.vmem [shape: f32[1,32], index: 13, kind: input, shape index: {}]
  %s14 = inlined_call_operand.vmem [shape: f32[32,10], index: 14, kind: input, shape index: {}]
  %s15 = inlined_call_operand.vmem [shape: f32[1,10], index: 15, kind: input, shape index: {}]
  %s16 = inlined_call_operand.hbm [shape: f32[2,10], index: 16, kind: output, shape index: {}]
  %s17 = sld [smem:[#allocation0]]
  $region74: #{cnn1_forward.1} parent=0
    _
  %s19 = ssub.s32 1, %s17
  %s20 = scalar_select 0, %s19, %s17
  $region1: #{cnn1_forward.1} parent=0
    #allocation2 [shape = 'u8[1024]{0}', space=vmem, size = 0x400, scoped, tag = 'output window, operand 0, single buffered']
    #allocation3 [shape = 's32[1]{0}', space=sflag, size = 0x4, scoped, tag = 'scoped memory for cnn1_forward.1']
    %21 = vsyncpa [#allocation3], 0
    // Predicated region
    $region2: #{cnn1_forward.1} parent=1 // pred_check
      _
    $region3: #{cnn1_forward.1} parent=1 // pred_check_branch
      %23 = sbr.rel (0) target = $region5
    $region4: #{cnn1_forward.1} parent=1 // pred_region
      _
    $region5: #{cnn1_forward.1} parent=1 // pred_fallthru
      _
    // Predicated region
    $region6: #{cnn1_forward.1} parent=1 // pred_check
      _
    $region7: #{cnn1_forward.1} parent=1 // pred_check_branch
      %25 = sbr.rel (0) target = $region9
    $region8: #{cnn1_forward.1} parent=1 // pred_region
      _
    $region9: #{cnn1_forward.1} parent=1 // pred_fallthru
      _
    // Predicated region
    $region10: #{cnn1_forward.1} parent=1 // pred_check
      _
    $region11: #{cnn1_forward.1} parent=1 // pred_check_branch
      %27 = sbr.rel (0) target = $region13
    $region12: #{cnn1_forward.1} parent=1 // pred_region
      _
    $region13: #{cnn1_forward.1} parent=1 // pred_fallthru
      _
    // Predicated region
    $region14: #{cnn1_forward.1} parent=1 // pred_check
      _
    $region15: #{cnn1_forward.1} parent=1 // pred_check_branch
      %29 = sbr.rel (0) target = $region17
    $region16: #{cnn1_forward.1} parent=1 // pred_region
      _
    $region17: #{cnn1_forward.1} parent=1 // pred_fallthru
      _
    // Predicated region
    $region18: #{cnn1_forward.1} parent=1 // pred_check
      _
    $region19: #{cnn1_forward.1} parent=1 // pred_check_branch
      %31 = sbr.rel (0) target = $region21
    $region20: #{cnn1_forward.1} parent=1 // pred_region
      _
    $region21: #{cnn1_forward.1} parent=1 // pred_fallthru
      _
    // Predicated region
    $region22: #{cnn1_forward.1} parent=1 // pred_check
      _
    $region23: #{cnn1_forward.1} parent=1 // pred_check_branch
      %33 = sbr.rel (0) target = $region25
    $region24: #{cnn1_forward.1} parent=1 // pred_region
      _
    $region25: #{cnn1_forward.1} parent=1 // pred_fallthru
      _
    // Predicated region
    $region26: #{cnn1_forward.1} parent=1 // pred_check
      _
    $region27: #{cnn1_forward.1} parent=1 // pred_check_branch
      %35 = sbr.rel (0) target = $region29
    $region28: #{cnn1_forward.1} parent=1 // pred_region
      _
    $region29: #{cnn1_forward.1} parent=1 // pred_fallthru
      _
    // Predicated region
    $region30: #{cnn1_forward.1} parent=1 // pred_check
      _
    $region31: #{cnn1_forward.1} parent=1 // pred_check_branch
      %37 = sbr.rel (0) target = $region33
    $region32: #{cnn1_forward.1} parent=1 // pred_region
      _
    $region33: #{cnn1_forward.1} parent=1 // pred_fallthru
      _
    // Predicated region
    $region34: #{cnn1_forward.1} parent=1 // pred_check
      _
    $region35: #{cnn1_forward.1} parent=1 // pred_check_branch
      %39 = sbr.rel (0) target = $region37
    $region36: #{cnn1_forward.1} parent=1 // pred_region
      _
    $region37: #{cnn1_forward.1} parent=1 // pred_fallthru
      _
    // Predicated region
    $region38: #{cnn1_forward.1} parent=1 // pred_check
      _
    $region39: #{cnn1_forward.1} parent=1 // pred_check_branch
      %41 = sbr.rel (0) target = $region41
    $region40: #{cnn1_forward.1} parent=1 // pred_region
      _
    $region41: #{cnn1_forward.1} parent=1 // pred_fallthru
      _
    // Predicated region
    $region42: #{cnn1_forward.1} parent=1 // pred_check
      _
    $region43: #{cnn1_forward.1} parent=1 // pred_check_branch
      %43 = sbr.rel (0) target = $region45
    $region44: #{cnn1_forward.1} parent=1 // pred_region
      _
    $region45: #{cnn1_forward.1} parent=1 // pred_fallthru
      _
    // Predicated region
    $region46: #{cnn1_forward.1} parent=1 // pred_check
      _
    $region47: #{cnn1_forward.1} parent=1 // pred_check_branch
      %45 = sbr.rel (0) target = $region49
    $region48: #{cnn1_forward.1} parent=1 // pred_region
      _
    $region49: #{cnn1_forward.1} parent=1 // pred_fallthru
      _
    // Predicated region
    $region50: #{cnn1_forward.1} parent=1 // pred_check
      _
    $region51: #{cnn1_forward.1} parent=1 // pred_check_branch
      %47 = sbr.rel (0) target = $region53
    $region52: #{cnn1_forward.1} parent=1 // pred_region
      _
    $region53: #{cnn1_forward.1} parent=1 // pred_fallthru
      _
    // Predicated region
    $region54: #{cnn1_forward.1} parent=1 // pred_check
      _
    $region55: #{cnn1_forward.1} parent=1 // pred_check_branch
      %49 = sbr.rel (0) target = $region57
    $region56: #{cnn1_forward.1} parent=1 // pred_region
      _
    $region57: #{cnn1_forward.1} parent=1 // pred_fallthru
      _
    // Predicated region
    $region58: #{cnn1_forward.1} parent=1 // pred_check
      _
    $region59: #{cnn1_forward.1} parent=1 // pred_check_branch
      %51 = sbr.rel (0) target = $region61
    $region60: #{cnn1_forward.1} parent=1 // pred_region
      _
    $region61: #{cnn1_forward.1} parent=1 // pred_fallthru
      _
    // Predicated region
    $region62: #{cnn1_forward.1} parent=1 // pred_check
      _
    $region63: #{cnn1_forward.1} parent=1 // pred_check_branch
      %53 = sbr.rel (0) target = $region65
    $region64: #{cnn1_forward.1} parent=1 // pred_region
      _
    $region65: #{cnn1_forward.1} parent=1 // pred_fallthru
      _
    %v54 = vld [vmem:[%s3] sm:$0x1]
    %v55 = vld [vmem:[%s10] sm:$0x1]
    %v56 = vld [vmem:[%s4] sm:$0xff]
    %v57 = vld [vmem:[%s5] sm:$0xff]
    %v58 = vld [vmem:[%s6] sm:$0xff]
    %v59 = vld [vmem:[%s6 + $0x8] sm:$0xff]
    %v60 = vld [vmem:[%s6 + $0x10] sm:$0xff]
    %v61 = vld [vmem:[%s6 + $0x18] sm:$0xff]
    %v62 = vld [vmem:[%s6 + $0x20] sm:$0xff]
    %v63 = vld [vmem:[%s6 + $0x28] sm:$0xff]
    %v64 = vld [vmem:[%s6 + $0x30] sm:$0xff]
    %v65 = vld [vmem:[%s6 + $0x38] sm:$0xff]
    %v66 = vld [vmem:[%s6 + $0x40] sm:$0xff]
    %v67 = vld [vmem:[%s6 + $0x48] sm:$0xff]
    %v68 = vld [vmem:[%s6 + $0x50] sm:$0xff]
    %v69 = vld [vmem:[%s6 + $0x58] sm:$0xff]
    %v70 = vld [vmem:[%s6 + $0x60] sm:$0xff]
    %v71 = vld [vmem:[%s6 + $0x68] sm:$0xff]
    %v72 = vld [vmem:[%s6 + $0x70] sm:$0xff]
    %v73 = vld [vmem:[%s6 + $0x78] sm:$0xff]
    %v74 = vld [vmem:[%s7] sm:$0xff]
    %v75 = vld [vmem:[%s7 + $0x8] sm:$0xff]
    %v76 = vld [vmem:[%s7 + $0x10] sm:$0xff]
    %v77 = vld [vmem:[%s7 + $0x18] sm:$0xff]
    %v78 = vld [vmem:[%s7 + $0x20] sm:$0xff]
    %v79 = vld [vmem:[%s7 + $0x28] sm:$0xff]
    %v80 = vld [vmem:[%s7 + $0x30] sm:$0xff]
    %v81 = vld [vmem:[%s7 + $0x38] sm:$0xff]
    %v82 = vld [vmem:[%s7 + $0x40] sm:$0xff]
    %v83 = vld [vmem:[%s7 + $0x48] sm:$0xff]
    %v84 = vld [vmem:[%s7 + $0x50] sm:$0xff]
    %v85 = vld [vmem:[%s7 + $0x58] sm:$0xff]
    %v86 = vld [vmem:[%s7 + $0x60] sm:$0xff]
    %v87 = vld [vmem:[%s7 + $0x68] sm:$0xff]
    %v88 = vld [vmem:[%s7 + $0x70] sm:$0xff]
    %v89 = vld [vmem:[%s7 + $0x78] sm:$0xff]
    %v90 = vld [vmem:[%s11] sm:$0xf]
    %v91 = vld [vmem:[%s13] sm:$0x1]
    %v92 = vld [vmem:[%s14] sm:$0xff]
    %v93 = vld [vmem:[%s14 + $0x8] sm:$0xff]
    %v94 = vld [vmem:[%s14 + $0x10] sm:$0xff]
    %v95 = vld [vmem:[%s14 + $0x18] sm:$0xff]
    %v96 = vld [vmem:[%s15] sm:$0x1]
    %v97 = vld [vmem:[%s0] sm:$0xff]
    %v98 = vld [vmem:[%s0 + $0x8] sm:$0xff]
    %v99 = vld [vmem:[%s2] sm:$0xff]
    %v100 = vld [vmem:[%s2 + $0x8] sm:$0xff]
    %vm101 = vcmask 130048
    %v103 = vsel %vm101, %v99, 0
    %v106 = vsel %vm101, %v100, 0
    %108 = vmatprep.subr.mxu0 0.0
    %109 = vmatpush1.msra.mxu0 0.0
    %110 = vmatprep.subr.mxu0 0.0
    %111 = vmatpush1.msra.mxu0 0.0
    %112 = vmatprep.subr.mxu0 0.0
    %113 = vmatpush1.msra.mxu0 0.0
    %114 = vmatprep.subr.mxu0 0.0
    %115 = vmatpush1.msra.mxu0 0.0
    %116 = vmatprep.subr.mxu0 0.0
    %117 = vmatpush1.msra.mxu0 0.0
    %118 = vmatprep.subr.mxu0 0.0
    %119 = vmatpush1.msra.mxu0 0.0
    %120 = vmatprep.subr.mxu0 0.0
    %121 = vmatpush1.msra.mxu0 0.0
    %122 = vmatprep.subr.mxu0 0.0
    %123 = vmatpush1.msra.mxu0 0.0
    %124 = vmatprep.subr.mxu0 0.0
    %125 = vmatpush1.msra.mxu0 0.0
    %126 = vmatprep.subr.mxu0 0.0
    %127 = vmatpush1.msra.mxu0 0.0
    %128 = vmatprep.subr.mxu0 0.0
    %129 = vmatpush1.msra.mxu0 0.0
    %130 = vmatprep.subr.mxu0 0.0
    %131 = vmatpush1.msra.mxu0 0.0
    %132 = vmatprep.subr.mxu0 0.0
    %133 = vmatpush1.msra.mxu0 0.0
    %134 = vmatprep.subr.mxu0 0.0
    %135 = vmatpush1.msra.mxu0 0.0
    %136 = vmatprep.subr.mxu0 0.0
    %137 = vmatpush1.msra.mxu0 %v98
    %138 = vmatprep.subr.mxu0 0.0
    %139 = vmatpush1.msra.mxu0 %v97
    %140 = vmatprep.subr.mxu0 0.0
    %141 = vmatpush2.msra.mxu0 0.0
    %142 = vmatprep.subr.mxu0 0.0
    %143 = vmatpush2.msra.mxu0 0.0
    %144 = vmatprep.subr.mxu0 0.0
    %145 = vmatpush2.msra.mxu0 0.0
    %146 = vmatprep.subr.mxu0 0.0
    %147 = vmatpush2.msra.mxu0 0.0
    %148 = vmatprep.subr.mxu0 0.0
    %149 = vmatpush2.msra.mxu0 0.0
    %150 = vmatprep.subr.mxu0 0.0
    %151 = vmatpush2.msra.mxu0 0.0
    %152 = vmatprep.subr.mxu0 0.0
    %153 = vmatpush2.msra.mxu0 0.0
    %154 = vmatprep.subr.mxu0 0.0
    %155 = vmatpush2.msra.mxu0 0.0
    %156 = vmatprep.subr.mxu0 0.0
    %157 = vmatpush2.msra.mxu0 0.0
    %158 = vmatprep.subr.mxu0 0.0
    %159 = vmatpush2.msra.mxu0 0.0
    %160 = vmatprep.subr.mxu0 0.0
    %161 = vmatpush2.msra.mxu0 0.0
    %162 = vmatprep.subr.mxu0 0.0
    %163 = vmatpush2.msra.mxu0 0.0
    %164 = vmatprep.subr.mxu0 0.0
    %165 = vmatpush2.msra.mxu0 0.0
    %166 = vmatprep.subr.mxu0 0.0
    %167 = vmatpush2.msra.mxu0 0.0
    %168 = vmatprep.subr.mxu0 0.0
    %169 = vmatpush2.msra.mxu0 0.0
    %170 = vmatprep.subr.mxu0 0.0
    %171 = vmatpush2.msra.mxu0 0.0
    %172 = vmatprep.mubr.f32.mxu0 0.0
    %173 = vmatmul.mubr.f32.gmra.mxu0 %v103
    %v174 = vpop.f32.mrf.mxu0
    %v175 = vadd.f32 0.0, %v174
    %v176 = vpop.f32.mrf.mxu0
    %177 = vmatprep.mubr.f32.mxu0 0.0
    %178 = vmatmul.mubr.f32.gmra.mxu0 %v106
    %v179 = vpop.f32.mrf.mxu0
    %v180 = vadd.f32 0.0, %v179
    %v181 = vpop.f32.mrf.mxu0
    %182 = vdwg.mxu0
    %v183 = vld [vmem:[%s1] sm:$0xff]
    %v184 = vld [vmem:[%s1 + $0x8] sm:$0xff]
    %v185 = vld [vmem:[%s1 + $0x10] sm:$0xff]
    %v186 = vld [vmem:[%s1 + $0x18] sm:$0xff]
    %v187 = vld [vmem:[%s1 + $0x20] sm:$0xff]
    %v188 = vld [vmem:[%s1 + $0x28] sm:$0xff]
    %v189 = vld [vmem:[%s1 + $0x30] sm:$0xff]
    %v190 = vld [vmem:[%s1 + $0x38] sm:$0xff]
    %s191 = scalar_lea.vmem %s2, 16
    %v192 = vld [vmem:[%s191] sm:$0xff]
    %v193 = vld [vmem:[%s191 + $0x8] sm:$0xff]
    %v195 = vsel %vm101, %v192, 0
    %v198 = vsel %vm101, %v193, 0
    %200 = vmatprep.subr.mxu0 0.0
    %201 = vmatpush1.msra.mxu0 0.0
    %202 = vmatprep.subr.mxu0 0.0
    %203 = vmatpush1.msra.mxu0 0.0
    %204 = vmatprep.subr.mxu0 0.0
    %205 = vmatpush1.msra.mxu0 0.0
    %206 = vmatprep.subr.mxu0 0.0
    %207 = vmatpush1.msra.mxu0 0.0
    %208 = vmatprep.subr.mxu0 0.0
    %209 = vmatpush1.msra.mxu0 0.0
    %210 = vmatprep.subr.mxu0 0.0
    %211 = vmatpush1.msra.mxu0 0.0
    %212 = vmatprep.subr.mxu0 0.0
    %213 = vmatpush1.msra.mxu0 0.0
    %214 = vmatprep.subr.mxu0 0.0
    %215 = vmatpush1.msra.mxu0 0.0
    %216 = vmatprep.subr.mxu0 0.0
    %217 = vmatpush1.msra.mxu0 0.0
    %218 = vmatprep.subr.mxu0 0.0
    %219 = vmatpush1.msra.mxu0 0.0
    %220 = vmatprep.subr.mxu0 0.0
    %221 = vmatpush1.msra.mxu0 0.0
    %222 = vmatprep.subr.mxu0 0.0
    %223 = vmatpush1.msra.mxu0 0.0
    %224 = vmatprep.subr.mxu0 0.0
    %225 = vmatpush1.msra.mxu0 0.0
    %226 = vmatprep.subr.mxu0 0.0
    %227 = vmatpush1.msra.mxu0 0.0
    %228 = vmatprep.subr.mxu0 0.0
    %229 = vmatpush1.msra.mxu0 %v98
    %230 = vmatprep.subr.mxu0 0.0
    %231 = vmatpush1.msra.mxu0 %v97
    %232 = vmatprep.subr.mxu0 0.0
    %233 = vmatpush2.msra.mxu0 0.0
    %234 = vmatprep.subr.mxu0 0.0
    %235 = vmatpush2.msra.mxu0 0.0
    %236 = vmatprep.subr.mxu0 0.0
    %237 = vmatpush2.msra.mxu0 0.0
    %238 = vmatprep.subr.mxu0 0.0
    %239 = vmatpush2.msra.mxu0 0.0
    %240 = vmatprep.subr.mxu0 0.0
    %241 = vmatpush2.msra.mxu0 0.0
    %242 = vmatprep.subr.mxu0 0.0
    %243 = vmatpush2.msra.mxu0 0.0
    %244 = vmatprep.subr.mxu0 0.0
    %245 = vmatpush2.msra.mxu0 0.0
    %246 = vmatprep.subr.mxu0 0.0
    %247 = vmatpush2.msra.mxu0 0.0
    %248 = vmatprep.subr.mxu0 0.0
    %249 = vmatpush2.msra.mxu0 0.0
    %250 = vmatprep.subr.mxu0 0.0
    %251 = vmatpush2.msra.mxu0 0.0
    %252 = vmatprep.subr.mxu0 0.0
    %253 = vmatpush2.msra.mxu0 0.0
    %254 = vmatprep.subr.mxu0 0.0
    %255 = vmatpush2.msra.mxu0 0.0
    %256 = vmatprep.subr.mxu0 0.0
    %257 = vmatpush2.msra.mxu0 0.0
    %258 = vmatprep.subr.mxu0 0.0
    %259 = vmatpush2.msra.mxu0 0.0
    %260 = vmatprep.subr.mxu0 0.0
    %261 = vmatpush2.msra.mxu0 0.0
    %262 = vmatprep.subr.mxu0 0.0
    %263 = vmatpush2.msra.mxu0 0.0
    %264 = vmatprep.mubr.f32.mxu0 0.0
    %265 = vmatmul.mubr.f32.gmra.mxu0 %v195
    %v266 = vpop.f32.mrf.mxu0
    %v267 = vadd.f32 0.0, %v266
    %v268 = vpop.f32.mrf.mxu0
    %269 = vmatprep.mubr.f32.mxu0 0.0
    %270 = vmatmul.mubr.f32.gmra.mxu0 %v198
    %v271 = vpop.f32.mrf.mxu0
    %v272 = vadd.f32 0.0, %v271
    %v273 = vpop.f32.mrf.mxu0
    %274 = vdwg.mxu0
    %s275 = scalar_lea.vmem %s1, 64
    %v276 = vld [vmem:[%s275] sm:$0xff]
    %v277 = vld [vmem:[%s275 + $0x8] sm:$0xff]
    %v278 = vld [vmem:[%s275 + $0x10] sm:$0xff]
    %v279 = vld [vmem:[%s275 + $0x18] sm:$0xff]
    %v280 = vld [vmem:[%s275 + $0x20] sm:$0xff]
    %v281 = vld [vmem:[%s275 + $0x28] sm:$0xff]
    %v282 = vld [vmem:[%s275 + $0x30] sm:$0xff]
    %v283 = vld [vmem:[%s275 + $0x38] sm:$0xff]
    %vm284 = vcmask 523264
    %v286 = vsel %vm284, %v267, 0
    %v289 = vsel %vm284, %v272, 0
    %291 = vmatprep.subr.mxu0 0.0
    %292 = vmatpush1.msra.mxu0 0.0
    %293 = vmatprep.subr.mxu0 0.0
    %294 = vmatpush1.msra.mxu0 0.0
    %295 = vmatprep.subr.mxu0 0.0
    %296 = vmatpush1.msra.mxu0 0.0
    %297 = vmatprep.subr.mxu0 0.0
    %298 = vmatpush1.msra.mxu0 0.0
    %299 = vmatprep.subr.mxu0 0.0
    %300 = vmatpush1.msra.mxu0 0.0
    %301 = vmatprep.subr.mxu0 0.0
    %302 = vmatpush1.msra.mxu0 0.0
    %303 = vmatprep.subr.mxu0 0.0
    %304 = vmatpush1.msra.mxu0 0.0
    %305 = vmatprep.subr.mxu0 0.0
    %306 = vmatpush1.msra.mxu0 0.0
    %307 = vmatprep.subr.mxu0 0.0
    %308 = vmatpush1.msra.mxu0 %v283
    %309 = vmatprep.subr.mxu0 0.0
    %310 = vmatpush1.msra.mxu0 %v282
    %311 = vmatprep.subr.mxu0 0.0
    %312 = vmatpush1.msra.mxu0 %v281
    %313 = vmatprep.subr.mxu0 0.0
    %314 = vmatpush1.msra.mxu0 %v280
    %315 = vmatprep.subr.mxu0 0.0
    %316 = vmatpush1.msra.mxu0 %v279
    %317 = vmatprep.subr.mxu0 0.0
    %318 = vmatpush1.msra.mxu0 %v278
    %319 = vmatprep.subr.mxu0 0.0
    %320 = vmatpush1.msra.mxu0 %v277
    %321 = vmatprep.subr.mxu0 0.0
    %322 = vmatpush1.msra.mxu0 %v276
    %323 = vmatprep.subr.mxu0 0.0
    %324 = vmatpush2.msra.mxu0 0.0
    %325 = vmatprep.subr.mxu0 0.0
    %326 = vmatpush2.msra.mxu0 0.0
    %327 = vmatprep.subr.mxu0 0.0
    %328 = vmatpush2.msra.mxu0 0.0
    %329 = vmatprep.subr.mxu0 0.0
    %330 = vmatpush2.msra.mxu0 0.0
    %331 = vmatprep.subr.mxu0 0.0
    %332 = vmatpush2.msra.mxu0 0.0
    %333 = vmatprep.subr.mxu0 0.0
    %334 = vmatpush2.msra.mxu0 0.0
    %335 = vmatprep.subr.mxu0 0.0
    %336 = vmatpush2.msra.mxu0 0.0
    %337 = vmatprep.subr.mxu0 0.0
    %338 = vmatpush2.msra.mxu0 0.0
    %339 = vmatprep.subr.mxu0 0.0
    %340 = vmatpush2.msra.mxu0 0.0
    %341 = vmatprep.subr.mxu0 0.0
    %342 = vmatpush2.msra.mxu0 0.0
    %343 = vmatprep.subr.mxu0 0.0
    %344 = vmatpush2.msra.mxu0 0.0
    %345 = vmatprep.subr.mxu0 0.0
    %346 = vmatpush2.msra.mxu0 0.0
    %347 = vmatprep.subr.mxu0 0.0
    %348 = vmatpush2.msra.mxu0 0.0
    %349 = vmatprep.subr.mxu0 0.0
    %350 = vmatpush2.msra.mxu0 0.0
    %351 = vmatprep.subr.mxu0 0.0
    %352 = vmatpush2.msra.mxu0 0.0
    %353 = vmatprep.subr.mxu0 0.0
    %354 = vmatpush2.msra.mxu0 0.0
    %355 = vmatprep.mubr.f32.mxu0 0.0
    %356 = vmatmul.mubr.f32.gmra.mxu0 %v286
    %v357 = vpop.f32.mrf.mxu0
    %v358 = vadd.f32 0.0, %v357
    %v359 = vpop.f32.mrf.mxu0
    %360 = vmatprep.mubr.f32.mxu0 0.0
    %361 = vmatmul.mubr.f32.gmra.mxu0 %v289
    %v362 = vpop.f32.mrf.mxu0
    %v363 = vadd.f32 0.0, %v362
    %v364 = vpop.f32.mrf.mxu0
    %365 = vdwg.mxu0
    %v367 = vsel %vm284, %v175, 0
    %v370 = vsel %vm284, %v180, 0
    %372 = vmatprep.subr.mxu0 0.0
    %373 = vmatpush1.msra.mxu0 0.0
    %374 = vmatprep.subr.mxu0 0.0
    %375 = vmatpush1.msra.mxu0 0.0
    %376 = vmatprep.subr.mxu0 0.0
    %377 = vmatpush1.msra.mxu0 0.0
    %378 = vmatprep.subr.mxu0 0.0
    %379 = vmatpush1.msra.mxu0 0.0
    %380 = vmatprep.subr.mxu0 0.0
    %381 = vmatpush1.msra.mxu0 0.0
    %382 = vmatprep.subr.mxu0 0.0
    %383 = vmatpush1.msra.mxu0 0.0
    %384 = vmatprep.subr.mxu0 0.0
    %385 = vmatpush1.msra.mxu0 0.0
    %386 = vmatprep.subr.mxu0 0.0
    %387 = vmatpush1.msra.mxu0 0.0
    %388 = vmatprep.subr.mxu0 0.0
    %389 = vmatpush1.msra.mxu0 %v190
    %390 = vmatprep.subr.mxu0 0.0
    %391 = vmatpush1.msra.mxu0 %v189
    %392 = vmatprep.subr.mxu0 0.0
    %393 = vmatpush1.msra.mxu0 %v188
    %394 = vmatprep.subr.mxu0 0.0
    %395 = vmatpush1.msra.mxu0 %v187
    %396 = vmatprep.subr.mxu0 0.0
    %397 = vmatpush1.msra.mxu0 %v186
    %398 = vmatprep.subr.mxu0 0.0
    %399 = vmatpush1.msra.mxu0 %v185
    %400 = vmatprep.subr.mxu0 0.0
    %401 = vmatpush1.msra.mxu0 %v184
    %402 = vmatprep.subr.mxu0 0.0
    %403 = vmatpush1.msra.mxu0 %v183
    %404 = vmatprep.subr.mxu0 0.0
    %405 = vmatpush2.msra.mxu0 0.0
    %406 = vmatprep.subr.mxu0 0.0
    %407 = vmatpush2.msra.mxu0 0.0
    %408 = vmatprep.subr.mxu0 0.0
    %409 = vmatpush2.msra.mxu0 0.0
    %410 = vmatprep.subr.mxu0 0.0
    %411 = vmatpush2.msra.mxu0 0.0
    %412 = vmatprep.subr.mxu0 0.0
    %413 = vmatpush2.msra.mxu0 0.0
    %414 = vmatprep.subr.mxu0 0.0
    %415 = vmatpush2.msra.mxu0 0.0
    %416 = vmatprep.subr.mxu0 0.0
    %417 = vmatpush2.msra.mxu0 0.0
    %418 = vmatprep.subr.mxu0 0.0
    %419 = vmatpush2.msra.mxu0 0.0
    %420 = vmatprep.subr.mxu0 0.0
    %421 = vmatpush2.msra.mxu0 0.0
    %422 = vmatprep.subr.mxu0 0.0
    %423 = vmatpush2.msra.mxu0 0.0
    %424 = vmatprep.subr.mxu0 0.0
    %425 = vmatpush2.msra.mxu0 0.0
    %426 = vmatprep.subr.mxu0 0.0
    %427 = vmatpush2.msra.mxu0 0.0
    %428 = vmatprep.subr.mxu0 0.0
    %429 = vmatpush2.msra.mxu0 0.0
    %430 = vmatprep.subr.mxu0 0.0
    %431 = vmatpush2.msra.mxu0 0.0
    %432 = vmatprep.subr.mxu0 0.0
    %433 = vmatpush2.msra.mxu0 0.0
    %434 = vmatprep.subr.mxu0 0.0
    %435 = vmatpush2.msra.mxu0 0.0
    %436 = vmatprep.mubr.f32.mxu0 0.0
    %437 = vmatmul.mubr.f32.gmra.mxu0 %v367
    %v438 = vpop.f32.mrf.mxu0
    %v439 = vadd.f32 %v358, %v438
    %v440 = vpop.f32.mrf.mxu0
    %441 = vmatprep.mubr.f32.mxu0 0.0
    %442 = vmatmul.mubr.f32.gmra.mxu0 %v370
    %v443 = vpop.f32.mrf.mxu0
    %v444 = vadd.f32 %v363, %v443
    %v445 = vpop.f32.mrf.mxu0
    %446 = vdwg.mxu0
    %s447 = scalar_lea.vmem %s2, 32
    %v448 = vld [vmem:[%s447] sm:$0xff]
    %v449 = vld [vmem:[%s447 + $0x8] sm:$0xff]
    %v451 = vsel %vm101, %v448, 0
    %v454 = vsel %vm101, %v449, 0
    %456 = vmatprep.subr.mxu0 0.0
    %457 = vmatpush1.msra.mxu0 0.0
    %458 = vmatprep.subr.mxu0 0.0
    %459 = vmatpush1.msra.mxu0 0.0
    %460 = vmatprep.subr.mxu0 0.0
    %461 = vmatpush1.msra.mxu0 0.0
    %462 = vmatprep.subr.mxu0 0.0
    %463 = vmatpush1.msra.mxu0 0.0
    %464 = vmatprep.subr.mxu0 0.0
    %465 = vmatpush1.msra.mxu0 0.0
    %466 = vmatprep.subr.mxu0 0.0
    %467 = vmatpush1.msra.mxu0 0.0
    %468 = vmatprep.subr.mxu0 0.0
    %469 = vmatpush1.msra.mxu0 0.0
    %470 = vmatprep.subr.mxu0 0.0
    %471 = vmatpush1.msra.mxu0 0.0
    %472 = vmatprep.subr.mxu0 0.0
    %473 = vmatpush1.msra.mxu0 0.0
    %474 = vmatprep.subr.mxu0 0.0
    %475 = vmatpush1.msra.mxu0 0.0
    %476 = vmatprep.subr.mxu0 0.0
    %477 = vmatpush1.msra.mxu0 0.0
    %478 = vmatprep.subr.mxu0 0.0
    %479 = vmatpush1.msra.mxu0 0.0
    %480 = vmatprep.subr.mxu0 0.0
    %481 = vmatpush1.msra.mxu0 0.0
    %482 = vmatprep.subr.mxu0 0.0
    %483 = vmatpush1.msra.mxu0 0.0
    %484 = vmatprep.subr.mxu0 0.0
    %485 = vmatpush1.msra.mxu0 %v98
    %486 = vmatprep.subr.mxu0 0.0
    %487 = vmatpush1.msra.mxu0 %v97
    %488 = vmatprep.subr.mxu0 0.0
    %489 = vmatpush2.msra.mxu0 0.0
    %490 = vmatprep.subr.mxu0 0.0
    %491 = vmatpush2.msra.mxu0 0.0
    %492 = vmatprep.subr.mxu0 0.0
    %493 = vmatpush2.msra.mxu0 0.0
    %494 = vmatprep.subr.mxu0 0.0
    %495 = vmatpush2.msra.mxu0 0.0
    %496 = vmatprep.subr.mxu0 0.0
    %497 = vmatpush2.msra.mxu0 0.0
    %498 = vmatprep.subr.mxu0 0.0
    %499 = vmatpush2.msra.mxu0 0.0
    %500 = vmatprep.subr.mxu0 0.0
    %501 = vmatpush2.msra.mxu0 0.0
    %502 = vmatprep.subr.mxu0 0.0
    %503 = vmatpush2.msra.mxu0 0.0
    %504 = vmatprep.subr.mxu0 0.0
    %505 = vmatpush2.msra.mxu0 0.0
    %506 = vmatprep.subr.mxu0 0.0
    %507 = vmatpush2.msra.mxu0 0.0
    %508 = vmatprep.subr.mxu0 0.0
    %509 = vmatpush2.msra.mxu0 0.0
    %510 = vmatprep.subr.mxu0 0.0
    %511 = vmatpush2.msra.mxu0 0.0
    %512 = vmatprep.subr.mxu0 0.0
    %513 = vmatpush2.msra.mxu0 0.0
    %514 = vmatprep.subr.mxu0 0.0
    %515 = vmatpush2.msra.mxu0 0.0
    %516 = vmatprep.subr.mxu0 0.0
    %517 = vmatpush2.msra.mxu0 0.0
    %518 = vmatprep.subr.mxu0 0.0
    %519 = vmatpush2.msra.mxu0 0.0
    %520 = vmatprep.mubr.f32.mxu0 0.0
    %521 = vmatmul.mubr.f32.gmra.mxu0 %v451
    %v522 = vpop.f32.mrf.mxu0
    %v523 = vadd.f32 0.0, %v522
    %v524 = vpop.f32.mrf.mxu0
    %525 = vmatprep.mubr.f32.mxu0 0.0
    %526 = vmatmul.mubr.f32.gmra.mxu0 %v454
    %v527 = vpop.f32.mrf.mxu0
    %v528 = vadd.f32 0.0, %v527
    %v529 = vpop.f32.mrf.mxu0
    %530 = vdwg.mxu0
    %s531 = scalar_lea.vmem %s1, 128
    %v532 = vld [vmem:[%s531] sm:$0xff]
    %v533 = vld [vmem:[%s531 + $0x8] sm:$0xff]
    %v534 = vld [vmem:[%s531 + $0x10] sm:$0xff]
    %v535 = vld [vmem:[%s531 + $0x18] sm:$0xff]
    %v536 = vld [vmem:[%s531 + $0x20] sm:$0xff]
    %v537 = vld [vmem:[%s531 + $0x28] sm:$0xff]
    %v538 = vld [vmem:[%s531 + $0x30] sm:$0xff]
    %v539 = vld [vmem:[%s531 + $0x38] sm:$0xff]
    %v541 = vsel %vm284, %v523, 0
    %v544 = vsel %vm284, %v528, 0
    %546 = vmatprep.subr.mxu0 0.0
    %547 = vmatpush1.msra.mxu0 0.0
    %548 = vmatprep.subr.mxu0 0.0
    %549 = vmatpush1.msra.mxu0 0.0
    %550 = vmatprep.subr.mxu0 0.0
    %551 = vmatpush1.msra.mxu0 0.0
    %552 = vmatprep.subr.mxu0 0.0
    %553 = vmatpush1.msra.mxu0 0.0
    %554 = vmatprep.subr.mxu0 0.0
    %555 = vmatpush1.msra.mxu0 0.0
    %556 = vmatprep.subr.mxu0 0.0
    %557 = vmatpush1.msra.mxu0 0.0
    %558 = vmatprep.subr.mxu0 0.0
    %559 = vmatpush1.msra.mxu0 0.0
    %560 = vmatprep.subr.mxu0 0.0
    %561 = vmatpush1.msra.mxu0 0.0
    %562 = vmatprep.subr.mxu0 0.0
    %563 = vmatpush1.msra.mxu0 %v539
    %564 = vmatprep.subr.mxu0 0.0
    %565 = vmatpush1.msra.mxu0 %v538
    %566 = vmatprep.subr.mxu0 0.0
    %567 = vmatpush1.msra.mxu0 %v537
    %568 = vmatprep.subr.mxu0 0.0
    %569 = vmatpush1.msra.mxu0 %v536
    %570 = vmatprep.subr.mxu0 0.0
    %571 = vmatpush1.msra.mxu0 %v535
    %572 = vmatprep.subr.mxu0 0.0
    %573 = vmatpush1.msra.mxu0 %v534
    %574 = vmatprep.subr.mxu0 0.0
    %575 = vmatpush1.msra.mxu0 %v533
    %576 = vmatprep.subr.mxu0 0.0
    %577 = vmatpush1.msra.mxu0 %v532
    %578 = vmatprep.subr.mxu0 0.0
    %579 = vmatpush2.msra.mxu0 0.0
    %580 = vmatprep.subr.mxu0 0.0
    %581 = vmatpush2.msra.mxu0 0.0
    %582 = vmatprep.subr.mxu0 0.0
    %583 = vmatpush2.msra.mxu0 0.0
    %584 = vmatprep.subr.mxu0 0.0
    %585 = vmatpush2.msra.mxu0 0.0
    %586 = vmatprep.subr.mxu0 0.0
    %587 = vmatpush2.msra.mxu0 0.0
    %588 = vmatprep.subr.mxu0 0.0
    %589 = vmatpush2.msra.mxu0 0.0
    %590 = vmatprep.subr.mxu0 0.0
    %591 = vmatpush2.msra.mxu0 0.0
    %592 = vmatprep.subr.mxu0 0.0
    %593 = vmatpush2.msra.mxu0 0.0
    %594 = vmatprep.subr.mxu0 0.0
    %595 = vmatpush2.msra.mxu0 0.0
    %596 = vmatprep.subr.mxu0 0.0
    %597 = vmatpush2.msra.mxu0 0.0
    %598 = vmatprep.subr.mxu0 0.0
    %599 = vmatpush2.msra.mxu0 0.0
    %600 = vmatprep.subr.mxu0 0.0
    %601 = vmatpush2.msra.mxu0 0.0
    %602 = vmatprep.subr.mxu0 0.0
    %603 = vmatpush2.msra.mxu0 0.0
    %604 = vmatprep.subr.mxu0 0.0
    %605 = vmatpush2.msra.mxu0 0.0
    %606 = vmatprep.subr.mxu0 0.0
    %607 = vmatpush2.msra.mxu0 0.0
    %608 = vmatprep.subr.mxu0 0.0
    %609 = vmatpush2.msra.mxu0 0.0
    %610 = vmatprep.mubr.f32.mxu0 0.0
    %611 = vmatmul.mubr.f32.gmra.mxu0 %v541
    %v612 = vpop.f32.mrf.mxu0
    %v613 = vadd.f32 0.0, %v612
    %v614 = vpop.f32.mrf.mxu0
    %615 = vmatprep.mubr.f32.mxu0 0.0
    %616 = vmatmul.mubr.f32.gmra.mxu0 %v544
    %v617 = vpop.f32.mrf.mxu0
    %v618 = vadd.f32 0.0, %v617
    %v619 = vpop.f32.mrf.mxu0
    %620 = vdwg.mxu0
    %v621 = vadd.f32 %v439, %v613
    %v622 = vadd.f32 %v444, %v618
    %v624 = vlaneseq
    %v625 = vshrl.u32 %v624, 7
    %v626 = vsub.s32 0, %v625
    %v627 = vrot.slane %v54, %v626
    %v629 = vadd.f32 %v621, %v627
    %v630 = vadd.f32 %v622, %v627
    %v631 = vmax.f32 %v629, 0.0
    %v632 = vmax.f32 %v630, 0.0
    %v634 = vsel %vm101, %v56, 0
    %636 = vmatprep.subr.mxu0 0.0
    %637 = vmatpush1.msra.mxu0 0.0
    %638 = vmatprep.subr.mxu0 0.0
    %639 = vmatpush1.msra.mxu0 0.0
    %640 = vmatprep.subr.mxu0 0.0
    %641 = vmatpush1.msra.mxu0 0.0
    %642 = vmatprep.subr.mxu0 0.0
    %643 = vmatpush1.msra.mxu0 0.0
    %644 = vmatprep.subr.mxu0 0.0
    %645 = vmatpush1.msra.mxu0 0.0
    %646 = vmatprep.subr.mxu0 0.0
    %647 = vmatpush1.msra.mxu0 0.0
    %648 = vmatprep.subr.mxu0 0.0
    %649 = vmatpush1.msra.mxu0 0.0
    %650 = vmatprep.subr.mxu0 0.0
    %651 = vmatpush1.msra.mxu0 0.0
    %652 = vmatprep.subr.mxu0 0.0
    %653 = vmatpush1.msra.mxu0 0.0
    %654 = vmatprep.subr.mxu0 0.0
    %655 = vmatpush1.msra.mxu0 0.0
    %656 = vmatprep.subr.mxu0 0.0
    %657 = vmatpush1.msra.mxu0 0.0
    %658 = vmatprep.subr.mxu0 0.0
    %659 = vmatpush1.msra.mxu0 0.0
    %660 = vmatprep.subr.mxu0 0.0
    %661 = vmatpush1.msra.mxu0 0.0
    %662 = vmatprep.subr.mxu0 0.0
    %663 = vmatpush1.msra.mxu0 0.0
    %664 = vmatprep.subr.mxu0 0.0
    %665 = vmatpush1.msra.mxu0 %v632
    %666 = vmatprep.subr.mxu0 0.0
    %667 = vmatpush1.msra.mxu0 %v631
    %668 = vmatprep.subr.mxu0 0.0
    %669 = vmatpush2.msra.mxu0 0.0
    %670 = vmatprep.subr.mxu0 0.0
    %671 = vmatpush2.msra.mxu0 0.0
    %672 = vmatprep.subr.mxu0 0.0
    %673 = vmatpush2.msra.mxu0 0.0
    %674 = vmatprep.subr.mxu0 0.0
    %675 = vmatpush2.msra.mxu0 0.0
    %676 = vmatprep.subr.mxu0 0.0
    %677 = vmatpush2.msra.mxu0 0.0
    %678 = vmatprep.subr.mxu0 0.0
    %679 = vmatpush2.msra.mxu0 0.0
    %680 = vmatprep.subr.mxu0 0.0
    %681 = vmatpush2.msra.mxu0 0.0
    %682 = vmatprep.subr.mxu0 0.0
    %683 = vmatpush2.msra.mxu0 0.0
    %684 = vmatprep.subr.mxu0 0.0
    %685 = vmatpush2.msra.mxu0 0.0
    %686 = vmatprep.subr.mxu0 0.0
    %687 = vmatpush2.msra.mxu0 0.0
    %688 = vmatprep.subr.mxu0 0.0
    %689 = vmatpush2.msra.mxu0 0.0
    %690 = vmatprep.subr.mxu0 0.0
    %691 = vmatpush2.msra.mxu0 0.0
    %692 = vmatprep.subr.mxu0 0.0
    %693 = vmatpush2.msra.mxu0 0.0
    %694 = vmatprep.subr.mxu0 0.0
    %695 = vmatpush2.msra.mxu0 0.0
    %696 = vmatprep.subr.mxu0 0.0
    %697 = vmatpush2.msra.mxu0 0.0
    %698 = vmatprep.subr.mxu0 0.0
    %699 = vmatpush2.msra.mxu0 0.0
    %700 = vmatprep.mubr.f32.mxu0 0.0
    %701 = vmatmul.mubr.f32.gmra.mxu0 %v634
    %v702 = vpop.f32.mrf.mxu0
    %v703 = vadd.f32 0.0, %v702
    %v704 = vpop.f32.mrf.mxu0
    %705 = vdwg.mxu0
    %v707 = vsel %vm101, %v57, 0
    %709 = vmatprep.subr.mxu0 0.0
    %710 = vmatpush1.msra.mxu0 0.0
    %711 = vmatprep.subr.mxu0 0.0
    %712 = vmatpush1.msra.mxu0 0.0
    %713 = vmatprep.subr.mxu0 0.0
    %714 = vmatpush1.msra.mxu0 0.0
    %715 = vmatprep.subr.mxu0 0.0
    %716 = vmatpush1.msra.mxu0 0.0
    %717 = vmatprep.subr.mxu0 0.0
    %718 = vmatpush1.msra.mxu0 0.0
    %719 = vmatprep.subr.mxu0 0.0
    %720 = vmatpush1.msra.mxu0 0.0
    %721 = vmatprep.subr.mxu0 0.0
    %722 = vmatpush1.msra.mxu0 0.0
    %723 = vmatprep.subr.mxu0 0.0
    %724 = vmatpush1.msra.mxu0 0.0
    %725 = vmatprep.subr.mxu0 0.0
    %726 = vmatpush1.msra.mxu0 0.0
    %727 = vmatprep.subr.mxu0 0.0
    %728 = vmatpush1.msra.mxu0 0.0
    %729 = vmatprep.subr.mxu0 0.0
    %730 = vmatpush1.msra.mxu0 0.0
    %731 = vmatprep.subr.mxu0 0.0
    %732 = vmatpush1.msra.mxu0 0.0
    %733 = vmatprep.subr.mxu0 0.0
    %734 = vmatpush1.msra.mxu0 0.0
    %735 = vmatprep.subr.mxu0 0.0
    %736 = vmatpush1.msra.mxu0 0.0
    %737 = vmatprep.subr.mxu0 0.0
    %738 = vmatpush1.msra.mxu0 %v632
    %739 = vmatprep.subr.mxu0 0.0
    %740 = vmatpush1.msra.mxu0 %v631
    %741 = vmatprep.subr.mxu0 0.0
    %742 = vmatpush2.msra.mxu0 0.0
    %743 = vmatprep.subr.mxu0 0.0
    %744 = vmatpush2.msra.mxu0 0.0
    %745 = vmatprep.subr.mxu0 0.0
    %746 = vmatpush2.msra.mxu0 0.0
    %747 = vmatprep.subr.mxu0 0.0
    %748 = vmatpush2.msra.mxu0 0.0
    %749 = vmatprep.subr.mxu0 0.0
    %750 = vmatpush2.msra.mxu0 0.0
    %751 = vmatprep.subr.mxu0 0.0
    %752 = vmatpush2.msra.mxu0 0.0
    %753 = vmatprep.subr.mxu0 0.0
    %754 = vmatpush2.msra.mxu0 0.0
    %755 = vmatprep.subr.mxu0 0.0
    %756 = vmatpush2.msra.mxu0 0.0
    %757 = vmatprep.subr.mxu0 0.0
    %758 = vmatpush2.msra.mxu0 0.0
    %759 = vmatprep.subr.mxu0 0.0
    %760 = vmatpush2.msra.mxu0 0.0
    %761 = vmatprep.subr.mxu0 0.0
    %762 = vmatpush2.msra.mxu0 0.0
    %763 = vmatprep.subr.mxu0 0.0
    %764 = vmatpush2.msra.mxu0 0.0
    %765 = vmatprep.subr.mxu0 0.0
    %766 = vmatpush2.msra.mxu0 0.0
    %767 = vmatprep.subr.mxu0 0.0
    %768 = vmatpush2.msra.mxu0 0.0
    %769 = vmatprep.subr.mxu0 0.0
    %770 = vmatpush2.msra.mxu0 0.0
    %771 = vmatprep.subr.mxu0 0.0
    %772 = vmatpush2.msra.mxu0 0.0
    %773 = vmatprep.mubr.f32.mxu0 0.0
    %774 = vmatmul.mubr.f32.gmra.mxu0 %v707
    %v775 = vpop.f32.mrf.mxu0
    %v776 = vadd.f32 0.0, %v775
    %v777 = vpop.f32.mrf.mxu0
    %778 = vdwg.mxu0
    %v779 = vmax.f32 %v703, %v776
    %780 = vmatprep.subr.mxu0 0.0
    %781 = vmatpush1.msra.mxu0 %v73
    %782 = vmatprep.subr.mxu0 0.0
    %783 = vmatpush1.msra.mxu0 %v72
    %784 = vmatprep.subr.mxu0 0.0
    %785 = vmatpush1.msra.mxu0 %v71
    %786 = vmatprep.subr.mxu0 0.0
    %787 = vmatpush1.msra.mxu0 %v70
    %788 = vmatprep.subr.mxu0 0.0
    %789 = vmatpush1.msra.mxu0 %v69
    %790 = vmatprep.subr.mxu0 0.0
    %791 = vmatpush1.msra.mxu0 %v68
    %792 = vmatprep.subr.mxu0 0.0
    %793 = vmatpush1.msra.mxu0 %v67
    %794 = vmatprep.subr.mxu0 0.0
    %795 = vmatpush1.msra.mxu0 %v66
    %796 = vmatprep.subr.mxu0 0.0
    %797 = vmatpush1.msra.mxu0 %v65
    %798 = vmatprep.subr.mxu0 0.0
    %799 = vmatpush1.msra.mxu0 %v64
    %800 = vmatprep.subr.mxu0 0.0
    %801 = vmatpush1.msra.mxu0 %v63
    %802 = vmatprep.subr.mxu0 0.0
    %803 = vmatpush1.msra.mxu0 %v62
    %804 = vmatprep.subr.mxu0 0.0
    %805 = vmatpush1.msra.mxu0 %v61
    %806 = vmatprep.subr.mxu0 0.0
    %807 = vmatpush1.msra.mxu0 %v60
    %808 = vmatprep.subr.mxu0 0.0
    %809 = vmatpush1.msra.mxu0 %v59
    %810 = vmatprep.subr.mxu0 0.0
    %811 = vmatpush1.msra.mxu0 %v58
    %812 = vmatprep.subr.mxu0 0.0
    %813 = vmatpush2.msra.mxu0 0.0
    %814 = vmatprep.subr.mxu0 0.0
    %815 = vmatpush2.msra.mxu0 0.0
    %816 = vmatprep.subr.mxu0 0.0
    %817 = vmatpush2.msra.mxu0 0.0
    %818 = vmatprep.subr.mxu0 0.0
    %819 = vmatpush2.msra.mxu0 0.0
    %820 = vmatprep.subr.mxu0 0.0
    %821 = vmatpush2.msra.mxu0 0.0
    %822 = vmatprep.subr.mxu0 0.0
    %823 = vmatpush2.msra.mxu0 0.0
    %824 = vmatprep.subr.mxu0 0.0
    %825 = vmatpush2.msra.mxu0 0.0
    %826 = vmatprep.subr.mxu0 0.0
    %827 = vmatpush2.msra.mxu0 0.0
    %828 = vmatprep.subr.mxu0 0.0
    %829 = vmatpush2.msra.mxu0 0.0
    %830 = vmatprep.subr.mxu0 0.0
    %831 = vmatpush2.msra.mxu0 0.0
    %832 = vmatprep.subr.mxu0 0.0
    %833 = vmatpush2.msra.mxu0 0.0
    %834 = vmatprep.subr.mxu0 0.0
    %835 = vmatpush2.msra.mxu0 0.0
    %836 = vmatprep.subr.mxu0 0.0
    %837 = vmatpush2.msra.mxu0 0.0
    %838 = vmatprep.subr.mxu0 0.0
    %839 = vmatpush2.msra.mxu0 0.0
    %840 = vmatprep.subr.mxu0 0.0
    %841 = vmatpush2.msra.mxu0 0.0
    %842 = vmatprep.subr.mxu0 0.0
    %843 = vmatpush2.msra.mxu0 0.0
    %844 = vmatprep.mubr.f32.mxu0 0.0
    %845 = vmatmul.mubr.f32.gmra.mxu0 %v779
    %v846 = vpop.f32.mrf.mxu0
    %v847 = vadd.f32 0.0, %v846
    %v848 = vpop.f32.mrf.mxu0
    %849 = vdwg.mxu0
    %850 = vmatprep.subr.mxu0 0.0
    %851 = vmatpush1.msra.mxu0 %v89
    %852 = vmatprep.subr.mxu0 0.0
    %853 = vmatpush1.msra.mxu0 %v88
    %854 = vmatprep.subr.mxu0 0.0
    %855 = vmatpush1.msra.mxu0 %v87
    %856 = vmatprep.subr.mxu0 0.0
    %857 = vmatpush1.msra.mxu0 %v86
    %858 = vmatprep.subr.mxu0 0.0
    %859 = vmatpush1.msra.mxu0 %v85
    %860 = vmatprep.subr.mxu0 0.0
    %861 = vmatpush1.msra.mxu0 %v84
    %862 = vmatprep.subr.mxu0 0.0
    %863 = vmatpush1.msra.mxu0 %v83
    %864 = vmatprep.subr.mxu0 0.0
    %865 = vmatpush1.msra.mxu0 %v82
    %866 = vmatprep.subr.mxu0 0.0
    %867 = vmatpush1.msra.mxu0 %v81
    %868 = vmatprep.subr.mxu0 0.0
    %869 = vmatpush1.msra.mxu0 %v80
    %870 = vmatprep.subr.mxu0 0.0
    %871 = vmatpush1.msra.mxu0 %v79
    %872 = vmatprep.subr.mxu0 0.0
    %873 = vmatpush1.msra.mxu0 %v78
    %874 = vmatprep.subr.mxu0 0.0
    %875 = vmatpush1.msra.mxu0 %v77
    %876 = vmatprep.subr.mxu0 0.0
    %877 = vmatpush1.msra.mxu0 %v76
    %878 = vmatprep.subr.mxu0 0.0
    %879 = vmatpush1.msra.mxu0 %v75
    %880 = vmatprep.subr.mxu0 0.0
    %881 = vmatpush1.msra.mxu0 %v74
    %882 = vmatprep.subr.mxu0 0.0
    %883 = vmatpush2.msra.mxu0 0.0
    %884 = vmatprep.subr.mxu0 0.0
    %885 = vmatpush2.msra.mxu0 0.0
    %886 = vmatprep.subr.mxu0 0.0
    %887 = vmatpush2.msra.mxu0 0.0
    %888 = vmatprep.subr.mxu0 0.0
    %889 = vmatpush2.msra.mxu0 0.0
    %890 = vmatprep.subr.mxu0 0.0
    %891 = vmatpush2.msra.mxu0 0.0
    %892 = vmatprep.subr.mxu0 0.0
    %893 = vmatpush2.msra.mxu0 0.0
    %894 = vmatprep.subr.mxu0 0.0
    %895 = vmatpush2.msra.mxu0 0.0
    %896 = vmatprep.subr.mxu0 0.0
    %897 = vmatpush2.msra.mxu0 0.0
    %898 = vmatprep.subr.mxu0 0.0
    %899 = vmatpush2.msra.mxu0 0.0
    %900 = vmatprep.subr.mxu0 0.0
    %901 = vmatpush2.msra.mxu0 0.0
    %902 = vmatprep.subr.mxu0 0.0
    %903 = vmatpush2.msra.mxu0 0.0
    %904 = vmatprep.subr.mxu0 0.0
    %905 = vmatpush2.msra.mxu0 0.0
    %906 = vmatprep.subr.mxu0 0.0
    %907 = vmatpush2.msra.mxu0 0.0
    %908 = vmatprep.subr.mxu0 0.0
    %909 = vmatpush2.msra.mxu0 0.0
    %910 = vmatprep.subr.mxu0 0.0
    %911 = vmatpush2.msra.mxu0 0.0
    %912 = vmatprep.subr.mxu0 0.0
    %913 = vmatpush2.msra.mxu0 0.0
    %914 = vmatprep.mubr.f32.mxu0 0.0
    %915 = vmatmul.mubr.f32.gmra.mxu0 %v779
    %v916 = vpop.f32.mrf.mxu0
    %v917 = vadd.f32 0.0, %v916
    %v918 = vpop.f32.mrf.mxu0
    %919 = vdwg.mxu0
    %v920 = vmax.f32 %v847, %v917
    %v921 = vld [vmem:[%s9] sm:$0xff]
    %vm922 = vcmask 64512
    %v924 = vsel %vm922, %v921, 0
    %926 = vmatprep.subr.mxu0 0.0
    %927 = vmatpush1.msra.mxu0 0.0
    %928 = vmatprep.subr.mxu0 0.0
    %929 = vmatpush1.msra.mxu0 0.0
    %930 = vmatprep.subr.mxu0 0.0
    %931 = vmatpush1.msra.mxu0 0.0
    %932 = vmatprep.subr.mxu0 0.0
    %933 = vmatpush1.msra.mxu0 0.0
    %934 = vmatprep.subr.mxu0 0.0
    %935 = vmatpush1.msra.mxu0 0.0
    %936 = vmatprep.subr.mxu0 0.0
    %937 = vmatpush1.msra.mxu0 0.0
    %938 = vmatprep.subr.mxu0 0.0
    %939 = vmatpush1.msra.mxu0 0.0
    %940 = vmatprep.subr.mxu0 0.0
    %941 = vmatpush1.msra.mxu0 0.0
    %942 = vmatprep.subr.mxu0 0.0
    %943 = vmatpush1.msra.mxu0 0.0
    %944 = vmatprep.subr.mxu0 0.0
    %945 = vmatpush1.msra.mxu0 0.0
    %946 = vmatprep.subr.mxu0 0.0
    %947 = vmatpush1.msra.mxu0 0.0
    %948 = vmatprep.subr.mxu0 0.0
    %949 = vmatpush1.msra.mxu0 0.0
    %950 = vmatprep.subr.mxu0 0.0
    %951 = vmatpush1.msra.mxu0 0.0
    %952 = vmatprep.subr.mxu0 0.0
    %953 = vmatpush1.msra.mxu0 0.0
    %954 = vmatprep.subr.mxu0 0.0
    %955 = vmatpush1.msra.mxu0 0.0
    %956 = vmatprep.subr.mxu0 0.0
    %957 = vmatpush1.msra.mxu0 %v920
    %958 = vmatprep.subr.mxu0 0.0
    %959 = vmatpush2.msra.mxu0 0.0
    %960 = vmatprep.subr.mxu0 0.0
    %961 = vmatpush2.msra.mxu0 0.0
    %962 = vmatprep.subr.mxu0 0.0
    %963 = vmatpush2.msra.mxu0 0.0
    %964 = vmatprep.subr.mxu0 0.0
    %965 = vmatpush2.msra.mxu0 0.0
    %966 = vmatprep.subr.mxu0 0.0
    %967 = vmatpush2.msra.mxu0 0.0
    %968 = vmatprep.subr.mxu0 0.0
    %969 = vmatpush2.msra.mxu0 0.0
    %970 = vmatprep.subr.mxu0 0.0
    %971 = vmatpush2.msra.mxu0 0.0
    %972 = vmatprep.subr.mxu0 0.0
    %973 = vmatpush2.msra.mxu0 0.0
    %974 = vmatprep.subr.mxu0 0.0
    %975 = vmatpush2.msra.mxu0 0.0
    %976 = vmatprep.subr.mxu0 0.0
    %977 = vmatpush2.msra.mxu0 0.0
    %978 = vmatprep.subr.mxu0 0.0
    %979 = vmatpush2.msra.mxu0 0.0
    %980 = vmatprep.subr.mxu0 0.0
    %981 = vmatpush2.msra.mxu0 0.0
    %982 = vmatprep.subr.mxu0 0.0
    %983 = vmatpush2.msra.mxu0 0.0
    %984 = vmatprep.subr.mxu0 0.0
    %985 = vmatpush2.msra.mxu0 0.0
    %986 = vmatprep.subr.mxu0 0.0
    %987 = vmatpush2.msra.mxu0 0.0
    %988 = vmatprep.subr.mxu0 0.0
    %989 = vmatpush2.msra.mxu0 0.0
    %990 = vmatprep.mubr.f32.mxu0 0.0
    %991 = vmatmul.mubr.f32.gmra.mxu0 %v924
    %v992 = vpop.f32.mrf.mxu0
    %v993 = vadd.f32 0.0, %v992
    %v994 = vpop.f32.mrf.mxu0
    %995 = vdwg.mxu0
    %v996 = vld [vmem:[%s8] sm:$0xff]
    %v997 = vld [vmem:[%s8 + $0x8] sm:$0xff]
    %v998 = vld [vmem:[%s8 + $0x10] sm:$0xff]
    %v999 = vld [vmem:[%s8 + $0x18] sm:$0xff]
    %v1000 = vld [vmem:[%s8 + $0x20] sm:$0xff]
    %v1001 = vld [vmem:[%s8 + $0x28] sm:$0xff]
    %v1002 = vld [vmem:[%s8 + $0x30] sm:$0xff]
    %v1003 = vld [vmem:[%s8 + $0x38] sm:$0xff]
    %s1004 = scalar_lea.vmem %s9, 8
    %v1005 = vld [vmem:[%s1004] sm:$0xff]
    %v1007 = vsel %vm922, %v1005, 0
    %1009 = vmatprep.subr.mxu0 0.0
    %1010 = vmatpush1.msra.mxu0 0.0
    %1011 = vmatprep.subr.mxu0 0.0
    %1012 = vmatpush1.msra.mxu0 0.0
    %1013 = vmatprep.subr.mxu0 0.0
    %1014 = vmatpush1.msra.mxu0 0.0
    %1015 = vmatprep.subr.mxu0 0.0
    %1016 = vmatpush1.msra.mxu0 0.0
    %1017 = vmatprep.subr.mxu0 0.0
    %1018 = vmatpush1.msra.mxu0 0.0
    %1019 = vmatprep.subr.mxu0 0.0
    %1020 = vmatpush1.msra.mxu0 0.0
    %1021 = vmatprep.subr.mxu0 0.0
    %1022 = vmatpush1.msra.mxu0 0.0
    %1023 = vmatprep.subr.mxu0 0.0
    %1024 = vmatpush1.msra.mxu0 0.0
    %1025 = vmatprep.subr.mxu0 0.0
    %1026 = vmatpush1.msra.mxu0 0.0
    %1027 = vmatprep.subr.mxu0 0.0
    %1028 = vmatpush1.msra.mxu0 0.0
    %1029 = vmatprep.subr.mxu0 0.0
    %1030 = vmatpush1.msra.mxu0 0.0
    %1031 = vmatprep.subr.mxu0 0.0
    %1032 = vmatpush1.msra.mxu0 0.0
    %1033 = vmatprep.subr.mxu0 0.0
    %1034 = vmatpush1.msra.mxu0 0.0
    %1035 = vmatprep.subr.mxu0 0.0
    %1036 = vmatpush1.msra.mxu0 0.0
    %1037 = vmatprep.subr.mxu0 0.0
    %1038 = vmatpush1.msra.mxu0 0.0
    %1039 = vmatprep.subr.mxu0 0.0
    %1040 = vmatpush1.msra.mxu0 %v920
    %1041 = vmatprep.subr.mxu0 0.0
    %1042 = vmatpush2.msra.mxu0 0.0
    %1043 = vmatprep.subr.mxu0 0.0
    %1044 = vmatpush2.msra.mxu0 0.0
    %1045 = vmatprep.subr.mxu0 0.0
    %1046 = vmatpush2.msra.mxu0 0.0
    %1047 = vmatprep.subr.mxu0 0.0
    %1048 = vmatpush2.msra.mxu0 0.0
    %1049 = vmatprep.subr.mxu0 0.0
    %1050 = vmatpush2.msra.mxu0 0.0
    %1051 = vmatprep.subr.mxu0 0.0
    %1052 = vmatpush2.msra.mxu0 0.0
    %1053 = vmatprep.subr.mxu0 0.0
    %1054 = vmatpush2.msra.mxu0 0.0
    %1055 = vmatprep.subr.mxu0 0.0
    %1056 = vmatpush2.msra.mxu0 0.0
    %1057 = vmatprep.subr.mxu0 0.0
    %1058 = vmatpush2.msra.mxu0 0.0
    %1059 = vmatprep.subr.mxu0 0.0
    %1060 = vmatpush2.msra.mxu0 0.0
    %1061 = vmatprep.subr.mxu0 0.0
    %1062 = vmatpush2.msra.mxu0 0.0
    %1063 = vmatprep.subr.mxu0 0.0
    %1064 = vmatpush2.msra.mxu0 0.0
    %1065 = vmatprep.subr.mxu0 0.0
    %1066 = vmatpush2.msra.mxu0 0.0
    %1067 = vmatprep.subr.mxu0 0.0
    %1068 = vmatpush2.msra.mxu0 0.0
    %1069 = vmatprep.subr.mxu0 0.0
    %1070 = vmatpush2.msra.mxu0 0.0
    %1071 = vmatprep.subr.mxu0 0.0
    %1072 = vmatpush2.msra.mxu0 0.0
    %1073 = vmatprep.mubr.f32.mxu0 0.0
    %1074 = vmatmul.mubr.f32.gmra.mxu0 %v1007
    %v1075 = vpop.f32.mrf.mxu0
    %v1076 = vadd.f32 0.0, %v1075
    %v1077 = vpop.f32.mrf.mxu0
    %1078 = vdwg.mxu0
    %s1079 = scalar_lea.vmem %s8, 64
    %v1080 = vld [vmem:[%s1079] sm:$0xff]
    %v1081 = vld [vmem:[%s1079 + $0x8] sm:$0xff]
    %v1082 = vld [vmem:[%s1079 + $0x10] sm:$0xff]
    %v1083 = vld [vmem:[%s1079 + $0x18] sm:$0xff]
    %v1084 = vld [vmem:[%s1079 + $0x20] sm:$0xff]
    %v1085 = vld [vmem:[%s1079 + $0x28] sm:$0xff]
    %v1086 = vld [vmem:[%s1079 + $0x30] sm:$0xff]
    %v1087 = vld [vmem:[%s1079 + $0x38] sm:$0xff]
    %v1089 = vsel %vm284, %v1076, 0
    %1091 = vmatprep.subr.mxu0 0.0
    %1092 = vmatpush1.msra.mxu0 0.0
    %1093 = vmatprep.subr.mxu0 0.0
    %1094 = vmatpush1.msra.mxu0 0.0
    %1095 = vmatprep.subr.mxu0 0.0
    %1096 = vmatpush1.msra.mxu0 0.0
    %1097 = vmatprep.subr.mxu0 0.0
    %1098 = vmatpush1.msra.mxu0 0.0
    %1099 = vmatprep.subr.mxu0 0.0
    %1100 = vmatpush1.msra.mxu0 0.0
    %1101 = vmatprep.subr.mxu0 0.0
    %1102 = vmatpush1.msra.mxu0 0.0
    %1103 = vmatprep.subr.mxu0 0.0
    %1104 = vmatpush1.msra.mxu0 0.0
    %1105 = vmatprep.subr.mxu0 0.0
    %1106 = vmatpush1.msra.mxu0 0.0
    %1107 = vmatprep.subr.mxu0 0.0
    %1108 = vmatpush1.msra.mxu0 %v1087
    %1109 = vmatprep.subr.mxu0 0.0
    %1110 = vmatpush1.msra.mxu0 %v1086
    %1111 = vmatprep.subr.mxu0 0.0
    %1112 = vmatpush1.msra.mxu0 %v1085
    %1113 = vmatprep.subr.mxu0 0.0
    %1114 = vmatpush1.msra.mxu0 %v1084
    %1115 = vmatprep.subr.mxu0 0.0
    %1116 = vmatpush1.msra.mxu0 %v1083
    %1117 = vmatprep.subr.mxu0 0.0
    %1118 = vmatpush1.msra.mxu0 %v1082
    %1119 = vmatprep.subr.mxu0 0.0
    %1120 = vmatpush1.msra.mxu0 %v1081
    %1121 = vmatprep.subr.mxu0 0.0
    %1122 = vmatpush1.msra.mxu0 %v1080
    %1123 = vmatprep.subr.mxu0 0.0
    %1124 = vmatpush2.msra.mxu0 0.0
    %1125 = vmatprep.subr.mxu0 0.0
    %1126 = vmatpush2.msra.mxu0 0.0
    %1127 = vmatprep.subr.mxu0 0.0
    %1128 = vmatpush2.msra.mxu0 0.0
    %1129 = vmatprep.subr.mxu0 0.0
    %1130 = vmatpush2.msra.mxu0 0.0
    %1131 = vmatprep.subr.mxu0 0.0
    %1132 = vmatpush2.msra.mxu0 0.0
    %1133 = vmatprep.subr.mxu0 0.0
    %1134 = vmatpush2.msra.mxu0 0.0
    %1135 = vmatprep.subr.mxu0 0.0
    %1136 = vmatpush2.msra.mxu0 0.0
    %1137 = vmatprep.subr.mxu0 0.0
    %1138 = vmatpush2.msra.mxu0 0.0
    %1139 = vmatprep.subr.mxu0 0.0
    %1140 = vmatpush2.msra.mxu0 0.0
    %1141 = vmatprep.subr.mxu0 0.0
    %1142 = vmatpush2.msra.mxu0 0.0
    %1143 = vmatprep.subr.mxu0 0.0
    %1144 = vmatpush2.msra.mxu0 0.0
    %1145 = vmatprep.subr.mxu0 0.0
    %1146 = vmatpush2.msra.mxu0 0.0
    %1147 = vmatprep.subr.mxu0 0.0
    %1148 = vmatpush2.msra.mxu0 0.0
    %1149 = vmatprep.subr.mxu0 0.0
    %1150 = vmatpush2.msra.mxu0 0.0
    %1151 = vmatprep.subr.mxu0 0.0
    %1152 = vmatpush2.msra.mxu0 0.0
    %1153 = vmatprep.subr.mxu0 0.0
    %1154 = vmatpush2.msra.mxu0 0.0
    %1155 = vmatprep.mubr.f32.mxu0 0.0
    %1156 = vmatmul.mubr.f32.gmra.mxu0 %v1089
    %v1157 = vpop.f32.mrf.mxu0
    %v1158 = vadd.f32 0.0, %v1157
    %v1159 = vpop.f32.mrf.mxu0
    %1160 = vdwg.mxu0
    %v1162 = vsel %vm284, %v993, 0
    %1164 = vmatprep.subr.mxu0 0.0
    %1165 = vmatpush1.msra.mxu0 0.0
    %1166 = vmatprep.subr.mxu0 0.0
    %1167 = vmatpush1.msra.mxu0 0.0
    %1168 = vmatprep.subr.mxu0 0.0
    %1169 = vmatpush1.msra.mxu0 0.0
    %1170 = vmatprep.subr.mxu0 0.0
    %1171 = vmatpush1.msra.mxu0 0.0
    %1172 = vmatprep.subr.mxu0 0.0
    %1173 = vmatpush1.msra.mxu0 0.0
    %1174 = vmatprep.subr.mxu0 0.0
    %1175 = vmatpush1.msra.mxu0 0.0
    %1176 = vmatprep.subr.mxu0 0.0
    %1177 = vmatpush1.msra.mxu0 0.0
    %1178 = vmatprep.subr.mxu0 0.0
    %1179 = vmatpush1.msra.mxu0 0.0
    %1180 = vmatprep.subr.mxu0 0.0
    %1181 = vmatpush1.msra.mxu0 %v1003
    %1182 = vmatprep.subr.mxu0 0.0
    %1183 = vmatpush1.msra.mxu0 %v1002
    %1184 = vmatprep.subr.mxu0 0.0
    %1185 = vmatpush1.msra.mxu0 %v1001
    %1186 = vmatprep.subr.mxu0 0.0
    %1187 = vmatpush1.msra.mxu0 %v1000
    %1188 = vmatprep.subr.mxu0 0.0
    %1189 = vmatpush1.msra.mxu0 %v999
    %1190 = vmatprep.subr.mxu0 0.0
    %1191 = vmatpush1.msra.mxu0 %v998
    %1192 = vmatprep.subr.mxu0 0.0
    %1193 = vmatpush1.msra.mxu0 %v997
    %1194 = vmatprep.subr.mxu0 0.0
    %1195 = vmatpush1.msra.mxu0 %v996
    %1196 = vmatprep.subr.mxu0 0.0
    %1197 = vmatpush2.msra.mxu0 0.0
    %1198 = vmatprep.subr.mxu0 0.0
    %1199 = vmatpush2.msra.mxu0 0.0
    %1200 = vmatprep.subr.mxu0 0.0
    %1201 = vmatpush2.msra.mxu0 0.0
    %1202 = vmatprep.subr.mxu0 0.0
    %1203 = vmatpush2.msra.mxu0 0.0
    %1204 = vmatprep.subr.mxu0 0.0
    %1205 = vmatpush2.msra.mxu0 0.0
    %1206 = vmatprep.subr.mxu0 0.0
    %1207 = vmatpush2.msra.mxu0 0.0
    %1208 = vmatprep.subr.mxu0 0.0
    %1209 = vmatpush2.msra.mxu0 0.0
    %1210 = vmatprep.subr.mxu0 0.0
    %1211 = vmatpush2.msra.mxu0 0.0
    %1212 = vmatprep.subr.mxu0 0.0
    %1213 = vmatpush2.msra.mxu0 0.0
    %1214 = vmatprep.subr.mxu0 0.0
    %1215 = vmatpush2.msra.mxu0 0.0
    %1216 = vmatprep.subr.mxu0 0.0
    %1217 = vmatpush2.msra.mxu0 0.0
    %1218 = vmatprep.subr.mxu0 0.0
    %1219 = vmatpush2.msra.mxu0 0.0
    %1220 = vmatprep.subr.mxu0 0.0
    %1221 = vmatpush2.msra.mxu0 0.0
    %1222 = vmatprep.subr.mxu0 0.0
    %1223 = vmatpush2.msra.mxu0 0.0
    %1224 = vmatprep.subr.mxu0 0.0
    %1225 = vmatpush2.msra.mxu0 0.0
    %1226 = vmatprep.subr.mxu0 0.0
    %1227 = vmatpush2.msra.mxu0 0.0
    %1228 = vmatprep.mubr.f32.mxu0 0.0
    %1229 = vmatmul.mubr.f32.gmra.mxu0 %v1162
    %v1230 = vpop.f32.mrf.mxu0
    %v1231 = vadd.f32 %v1158, %v1230
    %v1232 = vpop.f32.mrf.mxu0
    %1233 = vdwg.mxu0
    %s1234 = scalar_lea.vmem %s9, 16
    %v1235 = vld [vmem:[%s1234] sm:$0xff]
    %v1237 = vsel %vm922, %v1235, 0
    %1239 = vmatprep.subr.mxu0 0.0
    %1240 = vmatpush1.msra.mxu0 0.0
    %1241 = vmatprep.subr.mxu0 0.0
    %1242 = vmatpush1.msra.mxu0 0.0
    %1243 = vmatprep.subr.mxu0 0.0
    %1244 = vmatpush1.msra.mxu0 0.0
    %1245 = vmatprep.subr.mxu0 0.0
    %1246 = vmatpush1.msra.mxu0 0.0
    %1247 = vmatprep.subr.mxu0 0.0
    %1248 = vmatpush1.msra.mxu0 0.0
    %1249 = vmatprep.subr.mxu0 0.0
    %1250 = vmatpush1.msra.mxu0 0.0
    %1251 = vmatprep.subr.mxu0 0.0
    %1252 = vmatpush1.msra.mxu0 0.0
    %1253 = vmatprep.subr.mxu0 0.0
    %1254 = vmatpush1.msra.mxu0 0.0
    %1255 = vmatprep.subr.mxu0 0.0
    %1256 = vmatpush1.msra.mxu0 0.0
    %1257 = vmatprep.subr.mxu0 0.0
    %1258 = vmatpush1.msra.mxu0 0.0
    %1259 = vmatprep.subr.mxu0 0.0
    %1260 = vmatpush1.msra.mxu0 0.0
    %1261 = vmatprep.subr.mxu0 0.0
    %1262 = vmatpush1.msra.mxu0 0.0
    %1263 = vmatprep.subr.mxu0 0.0
    %1264 = vmatpush1.msra.mxu0 0.0
    %1265 = vmatprep.subr.mxu0 0.0
    %1266 = vmatpush1.msra.mxu0 0.0
    %1267 = vmatprep.subr.mxu0 0.0
    %1268 = vmatpush1.msra.mxu0 0.0
    %1269 = vmatprep.subr.mxu0 0.0
    %1270 = vmatpush1.msra.mxu0 %v920
    %1271 = vmatprep.subr.mxu0 0.0
    %1272 = vmatpush2.msra.mxu0 0.0
    %1273 = vmatprep.subr.mxu0 0.0
    %1274 = vmatpush2.msra.mxu0 0.0
    %1275 = vmatprep.subr.mxu0 0.0
    %1276 = vmatpush2.msra.mxu0 0.0
    %1277 = vmatprep.subr.mxu0 0.0
    %1278 = vmatpush2.msra.mxu0 0.0
    %1279 = vmatprep.subr.mxu0 0.0
    %1280 = vmatpush2.msra.mxu0 0.0
    %1281 = vmatprep.subr.mxu0 0.0
    %1282 = vmatpush2.msra.mxu0 0.0
    %1283 = vmatprep.subr.mxu0 0.0
    %1284 = vmatpush2.msra.mxu0 0.0
    %1285 = vmatprep.subr.mxu0 0.0
    %1286 = vmatpush2.msra.mxu0 0.0
    %1287 = vmatprep.subr.mxu0 0.0
    %1288 = vmatpush2.msra.mxu0 0.0
    %1289 = vmatprep.subr.mxu0 0.0
    %1290 = vmatpush2.msra.mxu0 0.0
    %1291 = vmatprep.subr.mxu0 0.0
    %1292 = vmatpush2.msra.mxu0 0.0
    %1293 = vmatprep.subr.mxu0 0.0
    %1294 = vmatpush2.msra.mxu0 0.0
    %1295 = vmatprep.subr.mxu0 0.0
    %1296 = vmatpush2.msra.mxu0 0.0
    %1297 = vmatprep.subr.mxu0 0.0
    %1298 = vmatpush2.msra.mxu0 0.0
    %1299 = vmatprep.subr.mxu0 0.0
    %1300 = vmatpush2.msra.mxu0 0.0
    %1301 = vmatprep.subr.mxu0 0.0
    %1302 = vmatpush2.msra.mxu0 0.0
    %1303 = vmatprep.mubr.f32.mxu0 0.0
    %1304 = vmatmul.mubr.f32.gmra.mxu0 %v1237
    %v1305 = vpop.f32.mrf.mxu0
    %v1306 = vadd.f32 0.0, %v1305
    %v1307 = vpop.f32.mrf.mxu0
    %1308 = vdwg.mxu0
    %s1309 = scalar_lea.vmem %s8, 128
    %v1310 = vld [vmem:[%s1309] sm:$0xff]
    %v1311 = vld [vmem:[%s1309 + $0x8] sm:$0xff]
    %v1312 = vld [vmem:[%s1309 + $0x10] sm:$0xff]
    %v1313 = vld [vmem:[%s1309 + $0x18] sm:$0xff]
    %v1314 = vld [vmem:[%s1309 + $0x20] sm:$0xff]
    %v1315 = vld [vmem:[%s1309 + $0x28] sm:$0xff]
    %v1316 = vld [vmem:[%s1309 + $0x30] sm:$0xff]
    %v1317 = vld [vmem:[%s1309 + $0x38] sm:$0xff]
    %v1319 = vsel %vm284, %v1306, 0
    %1321 = vmatprep.subr.mxu0 0.0
    %1322 = vmatpush1.msra.mxu0 0.0
    %1323 = vmatprep.subr.mxu0 0.0
    %1324 = vmatpush1.msra.mxu0 0.0
    %1325 = vmatprep.subr.mxu0 0.0
    %1326 = vmatpush1.msra.mxu0 0.0
    %1327 = vmatprep.subr.mxu0 0.0
    %1328 = vmatpush1.msra.mxu0 0.0
    %1329 = vmatprep.subr.mxu0 0.0
    %1330 = vmatpush1.msra.mxu0 0.0
    %1331 = vmatprep.subr.mxu0 0.0
    %1332 = vmatpush1.msra.mxu0 0.0
    %1333 = vmatprep.subr.mxu0 0.0
    %1334 = vmatpush1.msra.mxu0 0.0
    %1335 = vmatprep.subr.mxu0 0.0
    %1336 = vmatpush1.msra.mxu0 0.0
    %1337 = vmatprep.subr.mxu0 0.0
    %1338 = vmatpush1.msra.mxu0 %v1317
    %1339 = vmatprep.subr.mxu0 0.0
    %1340 = vmatpush1.msra.mxu0 %v1316
    %1341 = vmatprep.subr.mxu0 0.0
    %1342 = vmatpush1.msra.mxu0 %v1315
    %1343 = vmatprep.subr.mxu0 0.0
    %1344 = vmatpush1.msra.mxu0 %v1314
    %1345 = vmatprep.subr.mxu0 0.0
    %1346 = vmatpush1.msra.mxu0 %v1313
    %1347 = vmatprep.subr.mxu0 0.0
    %1348 = vmatpush1.msra.mxu0 %v1312
    %1349 = vmatprep.subr.mxu0 0.0
    %1350 = vmatpush1.msra.mxu0 %v1311
    %1351 = vmatprep.subr.mxu0 0.0
    %1352 = vmatpush1.msra.mxu0 %v1310
    %1353 = vmatprep.subr.mxu0 0.0
    %1354 = vmatpush2.msra.mxu0 0.0
    %1355 = vmatprep.subr.mxu0 0.0
    %1356 = vmatpush2.msra.mxu0 0.0
    %1357 = vmatprep.subr.mxu0 0.0
    %1358 = vmatpush2.msra.mxu0 0.0
    %1359 = vmatprep.subr.mxu0 0.0
    %1360 = vmatpush2.msra.mxu0 0.0
    %1361 = vmatprep.subr.mxu0 0.0
    %1362 = vmatpush2.msra.mxu0 0.0
    %1363 = vmatprep.subr.mxu0 0.0
    %1364 = vmatpush2.msra.mxu0 0.0
    %1365 = vmatprep.subr.mxu0 0.0
    %1366 = vmatpush2.msra.mxu0 0.0
    %1367 = vmatprep.subr.mxu0 0.0
    %1368 = vmatpush2.msra.mxu0 0.0
    %1369 = vmatprep.subr.mxu0 0.0
    %1370 = vmatpush2.msra.mxu0 0.0
    %1371 = vmatprep.subr.mxu0 0.0
    %1372 = vmatpush2.msra.mxu0 0.0
    %1373 = vmatprep.subr.mxu0 0.0
    %1374 = vmatpush2.msra.mxu0 0.0
    %1375 = vmatprep.subr.mxu0 0.0
    %1376 = vmatpush2.msra.mxu0 0.0
    %1377 = vmatprep.subr.mxu0 0.0
    %1378 = vmatpush2.msra.mxu0 0.0
    %1379 = vmatprep.subr.mxu0 0.0
    %1380 = vmatpush2.msra.mxu0 0.0
    %1381 = vmatprep.subr.mxu0 0.0
    %1382 = vmatpush2.msra.mxu0 0.0
    %1383 = vmatprep.subr.mxu0 0.0
    %1384 = vmatpush2.msra.mxu0 0.0
    %1385 = vmatprep.mubr.f32.mxu0 0.0
    %1386 = vmatmul.mubr.f32.gmra.mxu0 %v1319
    %v1387 = vpop.f32.mrf.mxu0
    %v1388 = vadd.f32 0.0, %v1387
    %v1389 = vpop.f32.mrf.mxu0
    %1390 = vdwg.mxu0
    %v1391 = vadd.f32 %v1231, %v1388
    %v1393 = vlaneseq
    %v1394 = vshrl.u32 %v1393, 7
    %v1395 = vsub.s32 0, %v1394
    %v1396 = vrot.slane %v55, %v1395
    %v1398 = vadd.f32 %v1391, %v1396
    %v1399 = vmax.f32 %v1398, 0.0
    %v1400 = vmin.f32 %v1399, 6.0
    %v1402 = vsel %vm922, %v90, 0
    %1404 = vmatprep.subr.mxu0 0.0
    %1405 = vmatpush1.msra.mxu0 0.0
    %1406 = vmatprep.subr.mxu0 0.0
    %1407 = vmatpush1.msra.mxu0 0.0
    %1408 = vmatprep.subr.mxu0 0.0
    %1409 = vmatpush1.msra.mxu0 0.0
    %1410 = vmatprep.subr.mxu0 0.0
    %1411 = vmatpush1.msra.mxu0 0.0
    %1412 = vmatprep.subr.mxu0 0.0
    %1413 = vmatpush1.msra.mxu0 0.0
    %1414 = vmatprep.subr.mxu0 0.0
    %1415 = vmatpush1.msra.mxu0 0.0
    %1416 = vmatprep.subr.mxu0 0.0
    %1417 = vmatpush1.msra.mxu0 0.0
    %1418 = vmatprep.subr.mxu0 0.0
    %1419 = vmatpush1.msra.mxu0 0.0
    %1420 = vmatprep.subr.mxu0 0.0
    %1421 = vmatpush1.msra.mxu0 0.0
    %1422 = vmatprep.subr.mxu0 0.0
    %1423 = vmatpush1.msra.mxu0 0.0
    %1424 = vmatprep.subr.mxu0 0.0
    %1425 = vmatpush1.msra.mxu0 0.0
    %1426 = vmatprep.subr.mxu0 0.0
    %1427 = vmatpush1.msra.mxu0 0.0
    %1428 = vmatprep.subr.mxu0 0.0
    %1429 = vmatpush1.msra.mxu0 0.0
    %1430 = vmatprep.subr.mxu0 0.0
    %1431 = vmatpush1.msra.mxu0 0.0
    %1432 = vmatprep.subr.mxu0 0.0
    %1433 = vmatpush1.msra.mxu0 0.0
    %1434 = vmatprep.subr.mxu0 0.0
    %1435 = vmatpush1.msra.mxu0 %v1400
    %1436 = vmatprep.subr.mxu0 0.0
    %1437 = vmatpush2.msra.mxu0 0.0
    %1438 = vmatprep.subr.mxu0 0.0
    %1439 = vmatpush2.msra.mxu0 0.0
    %1440 = vmatprep.subr.mxu0 0.0
    %1441 = vmatpush2.msra.mxu0 0.0
    %1442 = vmatprep.subr.mxu0 0.0
    %1443 = vmatpush2.msra.mxu0 0.0
    %1444 = vmatprep.subr.mxu0 0.0
    %1445 = vmatpush2.msra.mxu0 0.0
    %1446 = vmatprep.subr.mxu0 0.0
    %1447 = vmatpush2.msra.mxu0 0.0
    %1448 = vmatprep.subr.mxu0 0.0
    %1449 = vmatpush2.msra.mxu0 0.0
    %1450 = vmatprep.subr.mxu0 0.0
    %1451 = vmatpush2.msra.mxu0 0.0
    %1452 = vmatprep.subr.mxu0 0.0
    %1453 = vmatpush2.msra.mxu0 0.0
    %1454 = vmatprep.subr.mxu0 0.0
    %1455 = vmatpush2.msra.mxu0 0.0
    %1456 = vmatprep.subr.mxu0 0.0
    %1457 = vmatpush2.msra.mxu0 0.0
    %1458 = vmatprep.subr.mxu0 0.0
    %1459 = vmatpush2.msra.mxu0 0.0
    %1460 = vmatprep.subr.mxu0 0.0
    %1461 = vmatpush2.msra.mxu0 0.0
    %1462 = vmatprep.subr.mxu0 0.0
    %1463 = vmatpush2.msra.mxu0 0.0
    %1464 = vmatprep.subr.mxu0 0.0
    %1465 = vmatpush2.msra.mxu0 0.0
    %1466 = vmatprep.subr.mxu0 0.0
    %1467 = vmatpush2.msra.mxu0 0.0
    %1468 = vmatprep.mubr.f32.mxu0 0.0
    %1469 = vmatmul.mubr.f32.gmra.mxu0 %v1402
    %v1470 = vpop.f32.mrf.mxu0
    %v1471 = vadd.f32 0.0, %v1470
    %v1472 = vpop.f32.mrf.mxu0
    %1473 = vdwg.mxu0
    %v1474 = vld [vmem:[%s12] sm:$0xff]
    %v1475 = vld [vmem:[%s12 + $0x8] sm:$0xff]
    %v1476 = vld [vmem:[%s12 + $0x10] sm:$0xff]
    %v1477 = vld [vmem:[%s12 + $0x18] sm:$0xff]
    %v1478 = vld [vmem:[%s12 + $0x20] sm:$0xff]
    %v1479 = vld [vmem:[%s12 + $0x28] sm:$0xff]
    %v1480 = vld [vmem:[%s12 + $0x30] sm:$0xff]
    %v1481 = vld [vmem:[%s12 + $0x38] sm:$0xff]
    %v1482 = vld [vmem:[%s12 + $0x40] sm:$0xff]
    %v1483 = vld [vmem:[%s12 + $0x48] sm:$0xff]
    %v1484 = vld [vmem:[%s12 + $0x50] sm:$0xff]
    %v1485 = vld [vmem:[%s12 + $0x58] sm:$0xff]
    %v1486 = vld [vmem:[%s12 + $0x60] sm:$0xff]
    %v1487 = vld [vmem:[%s12 + $0x68] sm:$0xff]
    %v1488 = vld [vmem:[%s12 + $0x70] sm:$0xff]
    %v1489 = vld [vmem:[%s12 + $0x78] sm:$0xff]
    %1490 = vmatprep.subr.mxu0 0.0
    %1491 = vmatpush1.msra.mxu0 %v1489
    %1492 = vmatprep.subr.mxu0 0.0
    %1493 = vmatpush1.msra.mxu0 %v1488
    %1494 = vmatprep.subr.mxu0 0.0
    %1495 = vmatpush1.msra.mxu0 %v1487
    %1496 = vmatprep.subr.mxu0 0.0
    %1497 = vmatpush1.msra.mxu0 %v1486
    %1498 = vmatprep.subr.mxu0 0.0
    %1499 = vmatpush1.msra.mxu0 %v1485
    %1500 = vmatprep.subr.mxu0 0.0
    %1501 = vmatpush1.msra.mxu0 %v1484
    %1502 = vmatprep.subr.mxu0 0.0
    %1503 = vmatpush1.msra.mxu0 %v1483
    %1504 = vmatprep.subr.mxu0 0.0
    %1505 = vmatpush1.msra.mxu0 %v1482
    %1506 = vmatprep.subr.mxu0 0.0
    %1507 = vmatpush1.msra.mxu0 %v1481
    %1508 = vmatprep.subr.mxu0 0.0
    %1509 = vmatpush1.msra.mxu0 %v1480
    %1510 = vmatprep.subr.mxu0 0.0
    %1511 = vmatpush1.msra.mxu0 %v1479
    %1512 = vmatprep.subr.mxu0 0.0
    %1513 = vmatpush1.msra.mxu0 %v1478
    %1514 = vmatprep.subr.mxu0 0.0
    %1515 = vmatpush1.msra.mxu0 %v1477
    %1516 = vmatprep.subr.mxu0 0.0
    %1517 = vmatpush1.msra.mxu0 %v1476
    %1518 = vmatprep.subr.mxu0 0.0
    %1519 = vmatpush1.msra.mxu0 %v1475
    %1520 = vmatprep.subr.mxu0 0.0
    %1521 = vmatpush1.msra.mxu0 %v1474
    %1522 = vmatprep.subr.mxu0 0.0
    %1523 = vmatpush2.msra.mxu0 0.0
    %1524 = vmatprep.subr.mxu0 0.0
    %1525 = vmatpush2.msra.mxu0 0.0
    %1526 = vmatprep.subr.mxu0 0.0
    %1527 = vmatpush2.msra.mxu0 0.0
    %1528 = vmatprep.subr.mxu0 0.0
    %1529 = vmatpush2.msra.mxu0 0.0
    %1530 = vmatprep.subr.mxu0 0.0
    %1531 = vmatpush2.msra.mxu0 0.0
    %1532 = vmatprep.subr.mxu0 0.0
    %1533 = vmatpush2.msra.mxu0 0.0
    %1534 = vmatprep.subr.mxu0 0.0
    %1535 = vmatpush2.msra.mxu0 0.0
    %1536 = vmatprep.subr.mxu0 0.0
    %1537 = vmatpush2.msra.mxu0 0.0
    %1538 = vmatprep.subr.mxu0 0.0
    %1539 = vmatpush2.msra.mxu0 0.0
    %1540 = vmatprep.subr.mxu0 0.0
    %1541 = vmatpush2.msra.mxu0 0.0
    %1542 = vmatprep.subr.mxu0 0.0
    %1543 = vmatpush2.msra.mxu0 0.0
    %1544 = vmatprep.subr.mxu0 0.0
    %1545 = vmatpush2.msra.mxu0 0.0
    %1546 = vmatprep.subr.mxu0 0.0
    %1547 = vmatpush2.msra.mxu0 0.0
    %1548 = vmatprep.subr.mxu0 0.0
    %1549 = vmatpush2.msra.mxu0 0.0
    %1550 = vmatprep.subr.mxu0 0.0
    %1551 = vmatpush2.msra.mxu0 0.0
    %1552 = vmatprep.subr.mxu0 0.0
    %1553 = vmatpush2.msra.mxu0 0.0
    %1554 = vmatprep.mubr.f32.mxu0 0.0
    %1555 = vmatmul.mubr.f32.gmra.mxu0 %v1471
    %v1556 = vpop.f32.mrf.mxu0
    %v1557 = vadd.f32 0.0, %v1556
    %v1558 = vpop.f32.mrf.mxu0
    %1559 = vdwg.mxu0
    %v1560 = vadd.f32 %v91, %v1557
    %s1561 = scalar_lea.vmem %s12, 128
    %v1562 = vld [vmem:[%s1561] sm:$0xff]
    %v1563 = vld [vmem:[%s1561 + $0x8] sm:$0xff]
    %v1564 = vld [vmem:[%s1561 + $0x10] sm:$0xff]
    %v1565 = vld [vmem:[%s1561 + $0x18] sm:$0xff]
    %v1566 = vld [vmem:[%s1561 + $0x20] sm:$0xff]
    %v1567 = vld [vmem:[%s1561 + $0x28] sm:$0xff]
    %v1568 = vld [vmem:[%s1561 + $0x30] sm:$0xff]
    %v1569 = vld [vmem:[%s1561 + $0x38] sm:$0xff]
    %v1570 = vld [vmem:[%s1561 + $0x40] sm:$0xff]
    %v1571 = vld [vmem:[%s1561 + $0x48] sm:$0xff]
    %v1572 = vld [vmem:[%s1561 + $0x50] sm:$0xff]
    %v1573 = vld [vmem:[%s1561 + $0x58] sm:$0xff]
    %v1574 = vld [vmem:[%s1561 + $0x60] sm:$0xff]
    %v1575 = vld [vmem:[%s1561 + $0x68] sm:$0xff]
    %v1576 = vld [vmem:[%s1561 + $0x70] sm:$0xff]
    %v1577 = vld [vmem:[%s1561 + $0x78] sm:$0xff]
    %v1579 = vrot.slane %v1471, 1
    %1581 = vmatprep.subr.mxu0 0.0
    %1582 = vmatpush1.msra.mxu0 %v1577
    %1583 = vmatprep.subr.mxu0 0.0
    %1584 = vmatpush1.msra.mxu0 %v1576
    %1585 = vmatprep.subr.mxu0 0.0
    %1586 = vmatpush1.msra.mxu0 %v1575
    %1587 = vmatprep.subr.mxu0 0.0
    %1588 = vmatpush1.msra.mxu0 %v1574
    %1589 = vmatprep.subr.mxu0 0.0
    %1590 = vmatpush1.msra.mxu0 %v1573
    %1591 = vmatprep.subr.mxu0 0.0
    %1592 = vmatpush1.msra.mxu0 %v1572
    %1593 = vmatprep.subr.mxu0 0.0
    %1594 = vmatpush1.msra.mxu0 %v1571
    %1595 = vmatprep.subr.mxu0 0.0
    %1596 = vmatpush1.msra.mxu0 %v1570
    %1597 = vmatprep.subr.mxu0 0.0
    %1598 = vmatpush1.msra.mxu0 %v1569
    %1599 = vmatprep.subr.mxu0 0.0
    %1600 = vmatpush1.msra.mxu0 %v1568
    %1601 = vmatprep.subr.mxu0 0.0
    %1602 = vmatpush1.msra.mxu0 %v1567
    %1603 = vmatprep.subr.mxu0 0.0
    %1604 = vmatpush1.msra.mxu0 %v1566
    %1605 = vmatprep.subr.mxu0 0.0
    %1606 = vmatpush1.msra.mxu0 %v1565
    %1607 = vmatprep.subr.mxu0 0.0
    %1608 = vmatpush1.msra.mxu0 %v1564
    %1609 = vmatprep.subr.mxu0 0.0
    %1610 = vmatpush1.msra.mxu0 %v1563
    %1611 = vmatprep.subr.mxu0 0.0
    %1612 = vmatpush1.msra.mxu0 %v1562
    %1613 = vmatprep.subr.mxu0 0.0
    %1614 = vmatpush2.msra.mxu0 0.0
    %1615 = vmatprep.subr.mxu0 0.0
    %1616 = vmatpush2.msra.mxu0 0.0
    %1617 = vmatprep.subr.mxu0 0.0
    %1618 = vmatpush2.msra.mxu0 0.0
    %1619 = vmatprep.subr.mxu0 0.0
    %1620 = vmatpush2.msra.mxu0 0.0
    %1621 = vmatprep.subr.mxu0 0.0
    %1622 = vmatpush2.msra.mxu0 0.0
    %1623 = vmatprep.subr.mxu0 0.0
    %1624 = vmatpush2.msra.mxu0 0.0
    %1625 = vmatprep.subr.mxu0 0.0
    %1626 = vmatpush2.msra.mxu0 0.0
    %1627 = vmatprep.subr.mxu0 0.0
    %1628 = vmatpush2.msra.mxu0 0.0
    %1629 = vmatprep.subr.mxu0 0.0
    %1630 = vmatpush2.msra.mxu0 0.0
    %1631 = vmatprep.subr.mxu0 0.0
    %1632 = vmatpush2.msra.mxu0 0.0
    %1633 = vmatprep.subr.mxu0 0.0
    %1634 = vmatpush2.msra.mxu0 0.0
    %1635 = vmatprep.subr.mxu0 0.0
    %1636 = vmatpush2.msra.mxu0 0.0
    %1637 = vmatprep.subr.mxu0 0.0
    %1638 = vmatpush2.msra.mxu0 0.0
    %1639 = vmatprep.subr.mxu0 0.0
    %1640 = vmatpush2.msra.mxu0 0.0
    %1641 = vmatprep.subr.mxu0 0.0
    %1642 = vmatpush2.msra.mxu0 0.0
    %1643 = vmatprep.subr.mxu0 0.0
    %1644 = vmatpush2.msra.mxu0 0.0
    %1645 = vmatprep.mubr.f32.mxu0 0.0
    %1646 = vmatmul.mubr.f32.gmra.mxu0 %v1579
    %v1647 = vpop.f32.mrf.mxu0
    %v1648 = vadd.f32 0.0, %v1647
    %v1649 = vpop.f32.mrf.mxu0
    %1650 = vdwg.mxu0
    %v1651 = vadd.f32 %v1560, %v1648
    %s1652 = scalar_lea.vmem %s12, 256
    %v1653 = vld [vmem:[%s1652] sm:$0xff]
    %v1654 = vld [vmem:[%s1652 + $0x8] sm:$0xff]
    %v1655 = vld [vmem:[%s1652 + $0x10] sm:$0xff]
    %v1656 = vld [vmem:[%s1652 + $0x18] sm:$0xff]
    %v1657 = vld [vmem:[%s1652 + $0x20] sm:$0xff]
    %v1658 = vld [vmem:[%s1652 + $0x28] sm:$0xff]
    %v1659 = vld [vmem:[%s1652 + $0x30] sm:$0xff]
    %v1660 = vld [vmem:[%s1652 + $0x38] sm:$0xff]
    %v1661 = vld [vmem:[%s1652 + $0x40] sm:$0xff]
    %v1662 = vld [vmem:[%s1652 + $0x48] sm:$0xff]
    %v1663 = vld [vmem:[%s1652 + $0x50] sm:$0xff]
    %v1664 = vld [vmem:[%s1652 + $0x58] sm:$0xff]
    %v1665 = vld [vmem:[%s1652 + $0x60] sm:$0xff]
    %v1666 = vld [vmem:[%s1652 + $0x68] sm:$0xff]
    %v1667 = vld [vmem:[%s1652 + $0x70] sm:$0xff]
    %v1668 = vld [vmem:[%s1652 + $0x78] sm:$0xff]
    %v1669 = vrot.slane %v1471, 2
    %1671 = vmatprep.subr.mxu0 0.0
    %1672 = vmatpush1.msra.mxu0 %v1668
    %1673 = vmatprep.subr.mxu0 0.0
    %1674 = vmatpush1.msra.mxu0 %v1667
    %1675 = vmatprep.subr.mxu0 0.0
    %1676 = vmatpush1.msra.mxu0 %v1666
    %1677 = vmatprep.subr.mxu0 0.0
    %1678 = vmatpush1.msra.mxu0 %v1665
    %1679 = vmatprep.subr.mxu0 0.0
    %1680 = vmatpush1.msra.mxu0 %v1664
    %1681 = vmatprep.subr.mxu0 0.0
    %1682 = vmatpush1.msra.mxu0 %v1663
    %1683 = vmatprep.subr.mxu0 0.0
    %1684 = vmatpush1.msra.mxu0 %v1662
    %1685 = vmatprep.subr.mxu0 0.0
    %1686 = vmatpush1.msra.mxu0 %v1661
    %1687 = vmatprep.subr.mxu0 0.0
    %1688 = vmatpush1.msra.mxu0 %v1660
    %1689 = vmatprep.subr.mxu0 0.0
    %1690 = vmatpush1.msra.mxu0 %v1659
    %1691 = vmatprep.subr.mxu0 0.0
    %1692 = vmatpush1.msra.mxu0 %v1658
    %1693 = vmatprep.subr.mxu0 0.0
    %1694 = vmatpush1.msra.mxu0 %v1657
    %1695 = vmatprep.subr.mxu0 0.0
    %1696 = vmatpush1.msra.mxu0 %v1656
    %1697 = vmatprep.subr.mxu0 0.0
    %1698 = vmatpush1.msra.mxu0 %v1655
    %1699 = vmatprep.subr.mxu0 0.0
    %1700 = vmatpush1.msra.mxu0 %v1654
    %1701 = vmatprep.subr.mxu0 0.0
    %1702 = vmatpush1.msra.mxu0 %v1653
    %1703 = vmatprep.subr.mxu0 0.0
    %1704 = vmatpush2.msra.mxu0 0.0
    %1705 = vmatprep.subr.mxu0 0.0
    %1706 = vmatpush2.msra.mxu0 0.0
    %1707 = vmatprep.subr.mxu0 0.0
    %1708 = vmatpush2.msra.mxu0 0.0
    %1709 = vmatprep.subr.mxu0 0.0
    %1710 = vmatpush2.msra.mxu0 0.0
    %1711 = vmatprep.subr.mxu0 0.0
    %1712 = vmatpush2.msra.mxu0 0.0
    %1713 = vmatprep.subr.mxu0 0.0
    %1714 = vmatpush2.msra.mxu0 0.0
    %1715 = vmatprep.subr.mxu0 0.0
    %1716 = vmatpush2.msra.mxu0 0.0
    %1717 = vmatprep.subr.mxu0 0.0
    %1718 = vmatpush2.msra.mxu0 0.0
    %1719 = vmatprep.subr.mxu0 0.0
    %1720 = vmatpush2.msra.mxu0 0.0
    %1721 = vmatprep.subr.mxu0 0.0
    %1722 = vmatpush2.msra.mxu0 0.0
    %1723 = vmatprep.subr.mxu0 0.0
    %1724 = vmatpush2.msra.mxu0 0.0
    %1725 = vmatprep.subr.mxu0 0.0
    %1726 = vmatpush2.msra.mxu0 0.0
    %1727 = vmatprep.subr.mxu0 0.0
    %1728 = vmatpush2.msra.mxu0 0.0
    %1729 = vmatprep.subr.mxu0 0.0
    %1730 = vmatpush2.msra.mxu0 0.0
    %1731 = vmatprep.subr.mxu0 0.0
    %1732 = vmatpush2.msra.mxu0 0.0
    %1733 = vmatprep.subr.mxu0 0.0
    %1734 = vmatpush2.msra.mxu0 0.0
    %1735 = vmatprep.mubr.f32.mxu0 0.0
    %1736 = vmatmul.mubr.f32.gmra.mxu0 %v1669
    %v1737 = vpop.f32.mrf.mxu0
    %v1738 = vadd.f32 0.0, %v1737
    %v1739 = vpop.f32.mrf.mxu0
    %1740 = vdwg.mxu0
    %v1741 = vadd.f32 %v1651, %v1738
    %s1742 = scalar_lea.vmem %s12, 384
    %v1743 = vld [vmem:[%s1742] sm:$0xff]
    %v1744 = vld [vmem:[%s1742 + $0x8] sm:$0xff]
    %v1745 = vld [vmem:[%s1742 + $0x10] sm:$0xff]
    %v1746 = vld [vmem:[%s1742 + $0x18] sm:$0xff]
    %v1747 = vld [vmem:[%s1742 + $0x20] sm:$0xff]
    %v1748 = vld [vmem:[%s1742 + $0x28] sm:$0xff]
    %v1749 = vld [vmem:[%s1742 + $0x30] sm:$0xff]
    %v1750 = vld [vmem:[%s1742 + $0x38] sm:$0xff]
    %v1751 = vld [vmem:[%s1742 + $0x40] sm:$0xff]
    %v1752 = vld [vmem:[%s1742 + $0x48] sm:$0xff]
    %v1753 = vld [vmem:[%s1742 + $0x50] sm:$0xff]
    %v1754 = vld [vmem:[%s1742 + $0x58] sm:$0xff]
    %v1755 = vld [vmem:[%s1742 + $0x60] sm:$0xff]
    %v1756 = vld [vmem:[%s1742 + $0x68] sm:$0xff]
    %v1757 = vld [vmem:[%s1742 + $0x70] sm:$0xff]
    %v1758 = vld [vmem:[%s1742 + $0x78] sm:$0xff]
    %v1759 = vrot.slane %v1471, 3
    %1761 = vmatprep.subr.mxu0 0.0
    %1762 = vmatpush1.msra.mxu0 %v1758
    %1763 = vmatprep.subr.mxu0 0.0
    %1764 = vmatpush1.msra.mxu0 %v1757
    %1765 = vmatprep.subr.mxu0 0.0
    %1766 = vmatpush1.msra.mxu0 %v1756
    %1767 = vmatprep.subr.mxu0 0.0
    %1768 = vmatpush1.msra.mxu0 %v1755
    %1769 = vmatprep.subr.mxu0 0.0
    %1770 = vmatpush1.msra.mxu0 %v1754
    %1771 = vmatprep.subr.mxu0 0.0
    %1772 = vmatpush1.msra.mxu0 %v1753
    %1773 = vmatprep.subr.mxu0 0.0
    %1774 = vmatpush1.msra.mxu0 %v1752
    %1775 = vmatprep.subr.mxu0 0.0
    %1776 = vmatpush1.msra.mxu0 %v1751
    %1777 = vmatprep.subr.mxu0 0.0
    %1778 = vmatpush1.msra.mxu0 %v1750
    %1779 = vmatprep.subr.mxu0 0.0
    %1780 = vmatpush1.msra.mxu0 %v1749
    %1781 = vmatprep.subr.mxu0 0.0
    %1782 = vmatpush1.msra.mxu0 %v1748
    %1783 = vmatprep.subr.mxu0 0.0
    %1784 = vmatpush1.msra.mxu0 %v1747
    %1785 = vmatprep.subr.mxu0 0.0
    %1786 = vmatpush1.msra.mxu0 %v1746
    %1787 = vmatprep.subr.mxu0 0.0
    %1788 = vmatpush1.msra.mxu0 %v1745
    %1789 = vmatprep.subr.mxu0 0.0
    %1790 = vmatpush1.msra.mxu0 %v1744
    %1791 = vmatprep.subr.mxu0 0.0
    %1792 = vmatpush1.msra.mxu0 %v1743
    %1793 = vmatprep.subr.mxu0 0.0
    %1794 = vmatpush2.msra.mxu0 0.0
    %1795 = vmatprep.subr.mxu0 0.0
    %1796 = vmatpush2.msra.mxu0 0.0
    %1797 = vmatprep.subr.mxu0 0.0
    %1798 = vmatpush2.msra.mxu0 0.0
    %1799 = vmatprep.subr.mxu0 0.0
    %1800 = vmatpush2.msra.mxu0 0.0
    %1801 = vmatprep.subr.mxu0 0.0
    %1802 = vmatpush2.msra.mxu0 0.0
    %1803 = vmatprep.subr.mxu0 0.0
    %1804 = vmatpush2.msra.mxu0 0.0
    %1805 = vmatprep.subr.mxu0 0.0
    %1806 = vmatpush2.msra.mxu0 0.0
    %1807 = vmatprep.subr.mxu0 0.0
    %1808 = vmatpush2.msra.mxu0 0.0
    %1809 = vmatprep.subr.mxu0 0.0
    %1810 = vmatpush2.msra.mxu0 0.0
    %1811 = vmatprep.subr.mxu0 0.0
    %1812 = vmatpush2.msra.mxu0 0.0
    %1813 = vmatprep.subr.mxu0 0.0
    %1814 = vmatpush2.msra.mxu0 0.0
    %1815 = vmatprep.subr.mxu0 0.0
    %1816 = vmatpush2.msra.mxu0 0.0
    %1817 = vmatprep.subr.mxu0 0.0
    %1818 = vmatpush2.msra.mxu0 0.0
    %1819 = vmatprep.subr.mxu0 0.0
    %1820 = vmatpush2.msra.mxu0 0.0
    %1821 = vmatprep.subr.mxu0 0.0
    %1822 = vmatpush2.msra.mxu0 0.0
    %1823 = vmatprep.subr.mxu0 0.0
    %1824 = vmatpush2.msra.mxu0 0.0
    %1825 = vmatprep.mubr.f32.mxu0 0.0
    %1826 = vmatmul.mubr.f32.gmra.mxu0 %v1759
    %v1827 = vpop.f32.mrf.mxu0
    %v1828 = vadd.f32 0.0, %v1827
    %v1829 = vpop.f32.mrf.mxu0
    %1830 = vdwg.mxu0
    %v1831 = vadd.f32 %v1741, %v1828
    %v1832 = vmax.f32 %v1831, 0.0
    %vm1833 = vcmask 261120
    %v1835 = vsel %vm1833, %v1832, 0
    %1837 = vmatprep.subr.mxu0 0.0
    %1838 = vmatpush1.msra.mxu0 0.0
    %1839 = vmatprep.subr.mxu0 0.0
    %1840 = vmatpush1.msra.mxu0 0.0
    %1841 = vmatprep.subr.mxu0 0.0
    %1842 = vmatpush1.msra.mxu0 0.0
    %1843 = vmatprep.subr.mxu0 0.0
    %1844 = vmatpush1.msra.mxu0 0.0
    %1845 = vmatprep.subr.mxu0 0.0
    %1846 = vmatpush1.msra.mxu0 0.0
    %1847 = vmatprep.subr.mxu0 0.0
    %1848 = vmatpush1.msra.mxu0 0.0
    %1849 = vmatprep.subr.mxu0 0.0
    %1850 = vmatpush1.msra.mxu0 0.0
    %1851 = vmatprep.subr.mxu0 0.0
    %1852 = vmatpush1.msra.mxu0 0.0
    %1853 = vmatprep.subr.mxu0 0.0
    %1854 = vmatpush1.msra.mxu0 0.0
    %1855 = vmatprep.subr.mxu0 0.0
    %1856 = vmatpush1.msra.mxu0 0.0
    %1857 = vmatprep.subr.mxu0 0.0
    %1858 = vmatpush1.msra.mxu0 0.0
    %1859 = vmatprep.subr.mxu0 0.0
    %1860 = vmatpush1.msra.mxu0 0.0
    %1861 = vmatprep.subr.mxu0 0.0
    %1862 = vmatpush1.msra.mxu0 %v95
    %1863 = vmatprep.subr.mxu0 0.0
    %1864 = vmatpush1.msra.mxu0 %v94
    %1865 = vmatprep.subr.mxu0 0.0
    %1866 = vmatpush1.msra.mxu0 %v93
    %1867 = vmatprep.subr.mxu0 0.0
    %1868 = vmatpush1.msra.mxu0 %v92
    %1869 = vmatprep.subr.mxu0 0.0
    %1870 = vmatpush2.msra.mxu0 0.0
    %1871 = vmatprep.subr.mxu0 0.0
    %1872 = vmatpush2.msra.mxu0 0.0
    %1873 = vmatprep.subr.mxu0 0.0
    %1874 = vmatpush2.msra.mxu0 0.0
    %1875 = vmatprep.subr.mxu0 0.0
    %1876 = vmatpush2.msra.mxu0 0.0
    %1877 = vmatprep.subr.mxu0 0.0
    %1878 = vmatpush2.msra.mxu0 0.0
    %1879 = vmatprep.subr.mxu0 0.0
    %1880 = vmatpush2.msra.mxu0 0.0
    %1881 = vmatprep.subr.mxu0 0.0
    %1882 = vmatpush2.msra.mxu0 0.0
    %1883 = vmatprep.subr.mxu0 0.0
    %1884 = vmatpush2.msra.mxu0 0.0
    %1885 = vmatprep.subr.mxu0 0.0
    %1886 = vmatpush2.msra.mxu0 0.0
    %1887 = vmatprep.subr.mxu0 0.0
    %1888 = vmatpush2.msra.mxu0 0.0
    %1889 = vmatprep.subr.mxu0 0.0
    %1890 = vmatpush2.msra.mxu0 0.0
    %1891 = vmatprep.subr.mxu0 0.0
    %1892 = vmatpush2.msra.mxu0 0.0
    %1893 = vmatprep.subr.mxu0 0.0
    %1894 = vmatpush2.msra.mxu0 0.0
    %1895 = vmatprep.subr.mxu0 0.0
    %1896 = vmatpush2.msra.mxu0 0.0
    %1897 = vmatprep.subr.mxu0 0.0
    %1898 = vmatpush2.msra.mxu0 0.0
    %1899 = vmatprep.subr.mxu0 0.0
    %1900 = vmatpush2.msra.mxu0 0.0
    %1901 = vmatprep.mubr.f32.mxu0 0.0
    %1902 = vmatmul.mubr.f32.gmra.mxu0 %v1835
    %v1903 = vpop.f32.mrf.mxu0
    %v1904 = vadd.f32 %v96, %v1903
    %v1905 = vpop.f32.mrf.mxu0
    %1906 = vdwg.mxu0
    %vm1907 = vcmask 73728
    %1908 = vst.msk [vmem:[#allocation2] sm:$0x1] %vm1907, %v1904
    %s1909 = scalar_lea.vmem %s0, 16
    %v1910 = vld [vmem:[%s1909] sm:$0xff]
    %v1911 = vld [vmem:[%s1909 + $0x8] sm:$0xff]
    %v1912 = vld [vmem:[%s2] sm:$0xff]
    %v1913 = vld [vmem:[%s2 + $0x8] sm:$0xff]
    %v1915 = vsel %vm101, %v1912, 0
    %v1918 = vsel %vm101, %v1913, 0
    %1920 = vmatprep.subr.mxu0 0.0
    %1921 = vmatpush1.msra.mxu0 0.0
    %1922 = vmatprep.subr.mxu0 0.0
    %1923 = vmatpush1.msra.mxu0 0.0
    %1924 = vmatprep.subr.mxu0 0.0
    %1925 = vmatpush1.msra.mxu0 0.0
    %1926 = vmatprep.subr.mxu0 0.0
    %1927 = vmatpush1.msra.mxu0 0.0
    %1928 = vmatprep.subr.mxu0 0.0
    %1929 = vmatpush1.msra.mxu0 0.0
    %1930 = vmatprep.subr.mxu0 0.0
    %1931 = vmatpush1.msra.mxu0 0.0
    %1932 = vmatprep.subr.mxu0 0.0
    %1933 = vmatpush1.msra.mxu0 0.0
    %1934 = vmatprep.subr.mxu0 0.0
    %1935 = vmatpush1.msra.mxu0 0.0
    %1936 = vmatprep.subr.mxu0 0.0
    %1937 = vmatpush1.msra.mxu0 0.0
    %1938 = vmatprep.subr.mxu0 0.0
    %1939 = vmatpush1.msra.mxu0 0.0
    %1940 = vmatprep.subr.mxu0 0.0
    %1941 = vmatpush1.msra.mxu0 0.0
    %1942 = vmatprep.subr.mxu0 0.0
    %1943 = vmatpush1.msra.mxu0 0.0
    %1944 = vmatprep.subr.mxu0 0.0
    %1945 = vmatpush1.msra.mxu0 0.0
    %1946 = vmatprep.subr.mxu0 0.0
    %1947 = vmatpush1.msra.mxu0 0.0
    %1948 = vmatprep.subr.mxu0 0.0
    %1949 = vmatpush1.msra.mxu0 %v1911
    %1950 = vmatprep.subr.mxu0 0.0
    %1951 = vmatpush1.msra.mxu0 %v1910
    %1952 = vmatprep.subr.mxu0 0.0
    %1953 = vmatpush2.msra.mxu0 0.0
    %1954 = vmatprep.subr.mxu0 0.0
    %1955 = vmatpush2.msra.mxu0 0.0
    %1956 = vmatprep.subr.mxu0 0.0
    %1957 = vmatpush2.msra.mxu0 0.0
    %1958 = vmatprep.subr.mxu0 0.0
    %1959 = vmatpush2.msra.mxu0 0.0
    %1960 = vmatprep.subr.mxu0 0.0
    %1961 = vmatpush2.msra.mxu0 0.0
    %1962 = vmatprep.subr.mxu0 0.0
    %1963 = vmatpush2.msra.mxu0 0.0
    %1964 = vmatprep.subr.mxu0 0.0
    %1965 = vmatpush2.msra.mxu0 0.0
    %1966 = vmatprep.subr.mxu0 0.0
    %1967 = vmatpush2.msra.mxu0 0.0
    %1968 = vmatprep.subr.mxu0 0.0
    %1969 = vmatpush2.msra.mxu0 0.0
    %1970 = vmatprep.subr.mxu0 0.0
    %1971 = vmatpush2.msra.mxu0 0.0
    %1972 = vmatprep.subr.mxu0 0.0
    %1973 = vmatpush2.msra.mxu0 0.0
    %1974 = vmatprep.subr.mxu0 0.0
    %1975 = vmatpush2.msra.mxu0 0.0
    %1976 = vmatprep.subr.mxu0 0.0
    %1977 = vmatpush2.msra.mxu0 0.0
    %1978 = vmatprep.subr.mxu0 0.0
    %1979 = vmatpush2.msra.mxu0 0.0
    %1980 = vmatprep.subr.mxu0 0.0
    %1981 = vmatpush2.msra.mxu0 0.0
    %1982 = vmatprep.subr.mxu0 0.0
    %1983 = vmatpush2.msra.mxu0 0.0
    %1984 = vmatprep.mubr.f32.mxu0 0.0
    %1985 = vmatmul.mubr.f32.gmra.mxu0 %v1915
    %v1986 = vpop.f32.mrf.mxu0
    %v1987 = vadd.f32 0.0, %v1986
    %v1988 = vpop.f32.mrf.mxu0
    %1989 = vmatprep.mubr.f32.mxu0 0.0
    %1990 = vmatmul.mubr.f32.gmra.mxu0 %v1918
    %v1991 = vpop.f32.mrf.mxu0
    %v1992 = vadd.f32 0.0, %v1991
    %v1993 = vpop.f32.mrf.mxu0
    %1994 = vdwg.mxu0
    %v1995 = vld [vmem:[%s1] sm:$0xff]
    %v1996 = vld [vmem:[%s1 + $0x8] sm:$0xff]
    %v1997 = vld [vmem:[%s1 + $0x10] sm:$0xff]
    %v1998 = vld [vmem:[%s1 + $0x18] sm:$0xff]
    %v1999 = vld [vmem:[%s1 + $0x20] sm:$0xff]
    %v2000 = vld [vmem:[%s1 + $0x28] sm:$0xff]
    %v2001 = vld [vmem:[%s1 + $0x30] sm:$0xff]
    %v2002 = vld [vmem:[%s1 + $0x38] sm:$0xff]
    %v2003 = vld [vmem:[%s191] sm:$0xff]
    %v2004 = vld [vmem:[%s191 + $0x8] sm:$0xff]
    %v2006 = vsel %vm101, %v2003, 0
    %v2009 = vsel %vm101, %v2004, 0
    %2011 = vmatprep.subr.mxu0 0.0
    %2012 = vmatpush1.msra.mxu0 0.0
    %2013 = vmatprep.subr.mxu0 0.0
    %2014 = vmatpush1.msra.mxu0 0.0
    %2015 = vmatprep.subr.mxu0 0.0
    %2016 = vmatpush1.msra.mxu0 0.0
    %2017 = vmatprep.subr.mxu0 0.0
    %2018 = vmatpush1.msra.mxu0 0.0
    %2019 = vmatprep.subr.mxu0 0.0
    %2020 = vmatpush1.msra.mxu0 0.0
    %2021 = vmatprep.subr.mxu0 0.0
    %2022 = vmatpush1.msra.mxu0 0.0
    %2023 = vmatprep.subr.mxu0 0.0
    %2024 = vmatpush1.msra.mxu0 0.0
    %2025 = vmatprep.subr.mxu0 0.0
    %2026 = vmatpush1.msra.mxu0 0.0
    %2027 = vmatprep.subr.mxu0 0.0
    %2028 = vmatpush1.msra.mxu0 0.0
    %2029 = vmatprep.subr.mxu0 0.0
    %2030 = vmatpush1.msra.mxu0 0.0
    %2031 = vmatprep.subr.mxu0 0.0
    %2032 = vmatpush1.msra.mxu0 0.0
    %2033 = vmatprep.subr.mxu0 0.0
    %2034 = vmatpush1.msra.mxu0 0.0
    %2035 = vmatprep.subr.mxu0 0.0
    %2036 = vmatpush1.msra.mxu0 0.0
    %2037 = vmatprep.subr.mxu0 0.0
    %2038 = vmatpush1.msra.mxu0 0.0
    %2039 = vmatprep.subr.mxu0 0.0
    %2040 = vmatpush1.msra.mxu0 %v1911
    %2041 = vmatprep.subr.mxu0 0.0
    %2042 = vmatpush1.msra.mxu0 %v1910
    %2043 = vmatprep.subr.mxu0 0.0
    %2044 = vmatpush2.msra.mxu0 0.0
    %2045 = vmatprep.subr.mxu0 0.0
    %2046 = vmatpush2.msra.mxu0 0.0
    %2047 = vmatprep.subr.mxu0 0.0
    %2048 = vmatpush2.msra.mxu0 0.0
    %2049 = vmatprep.subr.mxu0 0.0
    %2050 = vmatpush2.msra.mxu0 0.0
    %2051 = vmatprep.subr.mxu0 0.0
    %2052 = vmatpush2.msra.mxu0 0.0
    %2053 = vmatprep.subr.mxu0 0.0
    %2054 = vmatpush2.msra.mxu0 0.0
    %2055 = vmatprep.subr.mxu0 0.0
    %2056 = vmatpush2.msra.mxu0 0.0
    %2057 = vmatprep.subr.mxu0 0.0
    %2058 = vmatpush2.msra.mxu0 0.0
    %2059 = vmatprep.subr.mxu0 0.0
    %2060 = vmatpush2.msra.mxu0 0.0
    %2061 = vmatprep.subr.mxu0 0.0
    %2062 = vmatpush2.msra.mxu0 0.0
    %2063 = vmatprep.subr.mxu0 0.0
    %2064 = vmatpush2.msra.mxu0 0.0
    %2065 = vmatprep.subr.mxu0 0.0
    %2066 = vmatpush2.msra.mxu0 0.0
    %2067 = vmatprep.subr.mxu0 0.0
    %2068 = vmatpush2.msra.mxu0 0.0
    %2069 = vmatprep.subr.mxu0 0.0
    %2070 = vmatpush2.msra.mxu0 0.0
    %2071 = vmatprep.subr.mxu0 0.0
    %2072 = vmatpush2.msra.mxu0 0.0
    %2073 = vmatprep.subr.mxu0 0.0
    %2074 = vmatpush2.msra.mxu0 0.0
    %2075 = vmatprep.mubr.f32.mxu0 0.0
    %2076 = vmatmul.mubr.f32.gmra.mxu0 %v2006
    %v2077 = vpop.f32.mrf.mxu0
    %v2078 = vadd.f32 0.0, %v2077
    %v2079 = vpop.f32.mrf.mxu0
    %2080 = vmatprep.mubr.f32.mxu0 0.0
    %2081 = vmatmul.mubr.f32.gmra.mxu0 %v2009
    %v2082 = vpop.f32.mrf.mxu0
    %v2083 = vadd.f32 0.0, %v2082
    %v2084 = vpop.f32.mrf.mxu0
    %2085 = vdwg.mxu0
    %v2086 = vld [vmem:[%s275] sm:$0xff]
    %v2087 = vld [vmem:[%s275 + $0x8] sm:$0xff]
    %v2088 = vld [vmem:[%s275 + $0x10] sm:$0xff]
    %v2089 = vld [vmem:[%s275 + $0x18] sm:$0xff]
    %v2090 = vld [vmem:[%s275 + $0x20] sm:$0xff]
    %v2091 = vld [vmem:[%s275 + $0x28] sm:$0xff]
    %v2092 = vld [vmem:[%s275 + $0x30] sm:$0xff]
    %v2093 = vld [vmem:[%s275 + $0x38] sm:$0xff]
    %v2095 = vsel %vm284, %v2078, 0
    %v2098 = vsel %vm284, %v2083, 0
    %2100 = vmatprep.subr.mxu0 0.0
    %2101 = vmatpush1.msra.mxu0 0.0
    %2102 = vmatprep.subr.mxu0 0.0
    %2103 = vmatpush1.msra.mxu0 0.0
    %2104 = vmatprep.subr.mxu0 0.0
    %2105 = vmatpush1.msra.mxu0 0.0
    %2106 = vmatprep.subr.mxu0 0.0
    %2107 = vmatpush1.msra.mxu0 0.0
    %2108 = vmatprep.subr.mxu0 0.0
    %2109 = vmatpush1.msra.mxu0 0.0
    %2110 = vmatprep.subr.mxu0 0.0
    %2111 = vmatpush1.msra.mxu0 0.0
    %2112 = vmatprep.subr.mxu0 0.0
    %2113 = vmatpush1.msra.mxu0 0.0
    %2114 = vmatprep.subr.mxu0 0.0
    %2115 = vmatpush1.msra.mxu0 0.0
    %2116 = vmatprep.subr.mxu0 0.0
    %2117 = vmatpush1.msra.mxu0 %v2093
    %2118 = vmatprep.subr.mxu0 0.0
    %2119 = vmatpush1.msra.mxu0 %v2092
    %2120 = vmatprep.subr.mxu0 0.0
    %2121 = vmatpush1.msra.mxu0 %v2091
    %2122 = vmatprep.subr.mxu0 0.0
    %2123 = vmatpush1.msra.mxu0 %v2090
    %2124 = vmatprep.subr.mxu0 0.0
    %2125 = vmatpush1.msra.mxu0 %v2089
    %2126 = vmatprep.subr.mxu0 0.0
    %2127 = vmatpush1.msra.mxu0 %v2088
    %2128 = vmatprep.subr.mxu0 0.0
    %2129 = vmatpush1.msra.mxu0 %v2087
    %2130 = vmatprep.subr.mxu0 0.0
    %2131 = vmatpush1.msra.mxu0 %v2086
    %2132 = vmatprep.subr.mxu0 0.0
    %2133 = vmatpush2.msra.mxu0 0.0
    %2134 = vmatprep.subr.mxu0 0.0
    %2135 = vmatpush2.msra.mxu0 0.0
    %2136 = vmatprep.subr.mxu0 0.0
    %2137 = vmatpush2.msra.mxu0 0.0
    %2138 = vmatprep.subr.mxu0 0.0
    %2139 = vmatpush2.msra.mxu0 0.0
    %2140 = vmatprep.subr.mxu0 0.0
    %2141 = vmatpush2.msra.mxu0 0.0
    %2142 = vmatprep.subr.mxu0 0.0
    %2143 = vmatpush2.msra.mxu0 0.0
    %2144 = vmatprep.subr.mxu0 0.0
    %2145 = vmatpush2.msra.mxu0 0.0
    %2146 = vmatprep.subr.mxu0 0.0
    %2147 = vmatpush2.msra.mxu0 0.0
    %2148 = vmatprep.subr.mxu0 0.0
    %2149 = vmatpush2.msra.mxu0 0.0
    %2150 = vmatprep.subr.mxu0 0.0
    %2151 = vmatpush2.msra.mxu0 0.0
    %2152 = vmatprep.subr.mxu0 0.0
    %2153 = vmatpush2.msra.mxu0 0.0
    %2154 = vmatprep.subr.mxu0 0.0
    %2155 = vmatpush2.msra.mxu0 0.0
    %2156 = vmatprep.subr.mxu0 0.0
    %2157 = vmatpush2.msra.mxu0 0.0
    %2158 = vmatprep.subr.mxu0 0.0
    %2159 = vmatpush2.msra.mxu0 0.0
    %2160 = vmatprep.subr.mxu0 0.0
    %2161 = vmatpush2.msra.mxu0 0.0
    %2162 = vmatprep.subr.mxu0 0.0
    %2163 = vmatpush2.msra.mxu0 0.0
    %2164 = vmatprep.mubr.f32.mxu0 0.0
    %2165 = vmatmul.mubr.f32.gmra.mxu0 %v2095
    %v2166 = vpop.f32.mrf.mxu0
    %v2167 = vadd.f32 0.0, %v2166
    %v2168 = vpop.f32.mrf.mxu0
    %2169 = vmatprep.mubr.f32.mxu0 0.0
    %2170 = vmatmul.mubr.f32.gmra.mxu0 %v2098
    %v2171 = vpop.f32.mrf.mxu0
    %v2172 = vadd.f32 0.0, %v2171
    %v2173 = vpop.f32.mrf.mxu0
    %2174 = vdwg.mxu0
    %v2176 = vsel %vm284, %v1987, 0
    %v2179 = vsel %vm284, %v1992, 0
    %2181 = vmatprep.subr.mxu0 0.0
    %2182 = vmatpush1.msra.mxu0 0.0
    %2183 = vmatprep.subr.mxu0 0.0
    %2184 = vmatpush1.msra.mxu0 0.0
    %2185 = vmatprep.subr.mxu0 0.0
    %2186 = vmatpush1.msra.mxu0 0.0
    %2187 = vmatprep.subr.mxu0 0.0
    %2188 = vmatpush1.msra.mxu0 0.0
    %2189 = vmatprep.subr.mxu0 0.0
    %2190 = vmatpush1.msra.mxu0 0.0
    %2191 = vmatprep.subr.mxu0 0.0
    %2192 = vmatpush1.msra.mxu0 0.0
    %2193 = vmatprep.subr.mxu0 0.0
    %2194 = vmatpush1.msra.mxu0 0.0
    %2195 = vmatprep.subr.mxu0 0.0
    %2196 = vmatpush1.msra.mxu0 0.0
    %2197 = vmatprep.subr.mxu0 0.0
    %2198 = vmatpush1.msra.mxu0 %v2002
    %2199 = vmatprep.subr.mxu0 0.0
    %2200 = vmatpush1.msra.mxu0 %v2001
    %2201 = vmatprep.subr.mxu0 0.0
    %2202 = vmatpush1.msra.mxu0 %v2000
    %2203 = vmatprep.subr.mxu0 0.0
    %2204 = vmatpush1.msra.mxu0 %v1999
    %2205 = vmatprep.subr.mxu0 0.0
    %2206 = vmatpush1.msra.mxu0 %v1998
    %2207 = vmatprep.subr.mxu0 0.0
    %2208 = vmatpush1.msra.mxu0 %v1997
    %2209 = vmatprep.subr.mxu0 0.0
    %2210 = vmatpush1.msra.mxu0 %v1996
    %2211 = vmatprep.subr.mxu0 0.0
    %2212 = vmatpush1.msra.mxu0 %v1995
    %2213 = vmatprep.subr.mxu0 0.0
    %2214 = vmatpush2.msra.mxu0 0.0
    %2215 = vmatprep.subr.mxu0 0.0
    %2216 = vmatpush2.msra.mxu0 0.0
    %2217 = vmatprep.subr.mxu0 0.0
    %2218 = vmatpush2.msra.mxu0 0.0
    %2219 = vmatprep.subr.mxu0 0.0
    %2220 = vmatpush2.msra.mxu0 0.0
    %2221 = vmatprep.subr.mxu0 0.0
    %2222 = vmatpush2.msra.mxu0 0.0
    %2223 = vmatprep.subr.mxu0 0.0
    %2224 = vmatpush2.msra.mxu0 0.0
    %2225 = vmatprep.subr.mxu0 0.0
    %2226 = vmatpush2.msra.mxu0 0.0
    %2227 = vmatprep.subr.mxu0 0.0
    %2228 = vmatpush2.msra.mxu0 0.0
    %2229 = vmatprep.subr.mxu0 0.0
    %2230 = vmatpush2.msra.mxu0 0.0
    %2231 = vmatprep.subr.mxu0 0.0
    %2232 = vmatpush2.msra.mxu0 0.0
    %2233 = vmatprep.subr.mxu0 0.0
    %2234 = vmatpush2.msra.mxu0 0.0
    %2235 = vmatprep.subr.mxu0 0.0
    %2236 = vmatpush2.msra.mxu0 0.0
    %2237 = vmatprep.subr.mxu0 0.0
    %2238 = vmatpush2.msra.mxu0 0.0
    %2239 = vmatprep.subr.mxu0 0.0
    %2240 = vmatpush2.msra.mxu0 0.0
    %2241 = vmatprep.subr.mxu0 0.0
    %2242 = vmatpush2.msra.mxu0 0.0
    %2243 = vmatprep.subr.mxu0 0.0
    %2244 = vmatpush2.msra.mxu0 0.0
    %2245 = vmatprep.mubr.f32.mxu0 0.0
    %2246 = vmatmul.mubr.f32.gmra.mxu0 %v2176
    %v2247 = vpop.f32.mrf.mxu0
    %v2248 = vadd.f32 %v2167, %v2247
    %v2249 = vpop.f32.mrf.mxu0
    %2250 = vmatprep.mubr.f32.mxu0 0.0
    %2251 = vmatmul.mubr.f32.gmra.mxu0 %v2179
    %v2252 = vpop.f32.mrf.mxu0
    %v2253 = vadd.f32 %v2172, %v2252
    %v2254 = vpop.f32.mrf.mxu0
    %2255 = vdwg.mxu0
    %v2256 = vld [vmem:[%s447] sm:$0xff]
    %v2257 = vld [vmem:[%s447 + $0x8] sm:$0xff]
    %v2259 = vsel %vm101, %v2256, 0
    %v2262 = vsel %vm101, %v2257, 0
    %2264 = vmatprep.subr.mxu0 0.0
    %2265 = vmatpush1.msra.mxu0 0.0
    %2266 = vmatprep.subr.mxu0 0.0
    %2267 = vmatpush1.msra.mxu0 0.0
    %2268 = vmatprep.subr.mxu0 0.0
    %2269 = vmatpush1.msra.mxu0 0.0
    %2270 = vmatprep.subr.mxu0 0.0
    %2271 = vmatpush1.msra.mxu0 0.0
    %2272 = vmatprep.subr.mxu0 0.0
    %2273 = vmatpush1.msra.mxu0 0.0
    %2274 = vmatprep.subr.mxu0 0.0
    %2275 = vmatpush1.msra.mxu0 0.0
    %2276 = vmatprep.subr.mxu0 0.0
    %2277 = vmatpush1.msra.mxu0 0.0
    %2278 = vmatprep.subr.mxu0 0.0
    %2279 = vmatpush1.msra.mxu0 0.0
    %2280 = vmatprep.subr.mxu0 0.0
    %2281 = vmatpush1.msra.mxu0 0.0
    %2282 = vmatprep.subr.mxu0 0.0
    %2283 = vmatpush1.msra.mxu0 0.0
    %2284 = vmatprep.subr.mxu0 0.0
    %2285 = vmatpush1.msra.mxu0 0.0
    %2286 = vmatprep.subr.mxu0 0.0
    %2287 = vmatpush1.msra.mxu0 0.0
    %2288 = vmatprep.subr.mxu0 0.0
    %2289 = vmatpush1.msra.mxu0 0.0
    %2290 = vmatprep.subr.mxu0 0.0
    %2291 = vmatpush1.msra.mxu0 0.0
    %2292 = vmatprep.subr.mxu0 0.0
    %2293 = vmatpush1.msra.mxu0 %v1911
    %2294 = vmatprep.subr.mxu0 0.0
    %2295 = vmatpush1.msra.mxu0 %v1910
    %2296 = vmatprep.subr.mxu0 0.0
    %2297 = vmatpush2.msra.mxu0 0.0
    %2298 = vmatprep.subr.mxu0 0.0
    %2299 = vmatpush2.msra.mxu0 0.0
    %2300 = vmatprep.subr.mxu0 0.0
    %2301 = vmatpush2.msra.mxu0 0.0
    %2302 = vmatprep.subr.mxu0 0.0
    %2303 = vmatpush2.msra.mxu0 0.0
    %2304 = vmatprep.subr.mxu0 0.0
    %2305 = vmatpush2.msra.mxu0 0.0
    %2306 = vmatprep.subr.mxu0 0.0
    %2307 = vmatpush2.msra.mxu0 0.0
    %2308 = vmatprep.subr.mxu0 0.0
    %2309 = vmatpush2.msra.mxu0 0.0
    %2310 = vmatprep.subr.mxu0 0.0
    %2311 = vmatpush2.msra.mxu0 0.0
    %2312 = vmatprep.subr.mxu0 0.0
    %2313 = vmatpush2.msra.mxu0 0.0
    %2314 = vmatprep.subr.mxu0 0.0
    %2315 = vmatpush2.msra.mxu0 0.0
    %2316 = vmatprep.subr.mxu0 0.0
    %2317 = vmatpush2.msra.mxu0 0.0
    %2318 = vmatprep.subr.mxu0 0.0
    %2319 = vmatpush2.msra.mxu0 0.0
    %2320 = vmatprep.subr.mxu0 0.0
    %2321 = vmatpush2.msra.mxu0 0.0
    %2322 = vmatprep.subr.mxu0 0.0
    %2323 = vmatpush2.msra.mxu0 0.0
    %2324 = vmatprep.subr.mxu0 0.0
    %2325 = vmatpush2.msra.mxu0 0.0
    %2326 = vmatprep.subr.mxu0 0.0
    %2327 = vmatpush2.msra.mxu0 0.0
    %2328 = vmatprep.mubr.f32.mxu0 0.0
    %2329 = vmatmul.mubr.f32.gmra.mxu0 %v2259
    %v2330 = vpop.f32.mrf.mxu0
    %v2331 = vadd.f32 0.0, %v2330
    %v2332 = vpop.f32.mrf.mxu0
    %2333 = vmatprep.mubr.f32.mxu0 0.0
    %2334 = vmatmul.mubr.f32.gmra.mxu0 %v2262
    %v2335 = vpop.f32.mrf.mxu0
    %v2336 = vadd.f32 0.0, %v2335
    %v2337 = vpop.f32.mrf.mxu0
    %2338 = vdwg.mxu0
    %v2339 = vld [vmem:[%s531] sm:$0xff]
    %v2340 = vld [vmem:[%s531 + $0x8] sm:$0xff]
    %v2341 = vld [vmem:[%s531 + $0x10] sm:$0xff]
    %v2342 = vld [vmem:[%s531 + $0x18] sm:$0xff]
    %v2343 = vld [vmem:[%s531 + $0x20] sm:$0xff]
    %v2344 = vld [vmem:[%s531 + $0x28] sm:$0xff]
    %v2345 = vld [vmem:[%s531 + $0x30] sm:$0xff]
    %v2346 = vld [vmem:[%s531 + $0x38] sm:$0xff]
    %v2348 = vsel %vm284, %v2331, 0
    %v2351 = vsel %vm284, %v2336, 0
    %2353 = vmatprep.subr.mxu0 0.0
    %2354 = vmatpush1.msra.mxu0 0.0
    %2355 = vmatprep.subr.mxu0 0.0
    %2356 = vmatpush1.msra.mxu0 0.0
    %2357 = vmatprep.subr.mxu0 0.0
    %2358 = vmatpush1.msra.mxu0 0.0
    %2359 = vmatprep.subr.mxu0 0.0
    %2360 = vmatpush1.msra.mxu0 0.0
    %2361 = vmatprep.subr.mxu0 0.0
    %2362 = vmatpush1.msra.mxu0 0.0
    %2363 = vmatprep.subr.mxu0 0.0
    %2364 = vmatpush1.msra.mxu0 0.0
    %2365 = vmatprep.subr.mxu0 0.0
    %2366 = vmatpush1.msra.mxu0 0.0
    %2367 = vmatprep.subr.mxu0 0.0
    %2368 = vmatpush1.msra.mxu0 0.0
    %2369 = vmatprep.subr.mxu0 0.0
    %2370 = vmatpush1.msra.mxu0 %v2346
    %2371 = vmatprep.subr.mxu0 0.0
    %2372 = vmatpush1.msra.mxu0 %v2345
    %2373 = vmatprep.subr.mxu0 0.0
    %2374 = vmatpush1.msra.mxu0 %v2344
    %2375 = vmatprep.subr.mxu0 0.0
    %2376 = vmatpush1.msra.mxu0 %v2343
    %2377 = vmatprep.subr.mxu0 0.0
    %2378 = vmatpush1.msra.mxu0 %v2342
    %2379 = vmatprep.subr.mxu0 0.0
    %2380 = vmatpush1.msra.mxu0 %v2341
    %2381 = vmatprep.subr.mxu0 0.0
    %2382 = vmatpush1.msra.mxu0 %v2340
    %2383 = vmatprep.subr.mxu0 0.0
    %2384 = vmatpush1.msra.mxu0 %v2339
    %2385 = vmatprep.subr.mxu0 0.0
    %2386 = vmatpush2.msra.mxu0 0.0
    %2387 = vmatprep.subr.mxu0 0.0
    %2388 = vmatpush2.msra.mxu0 0.0
    %2389 = vmatprep.subr.mxu0 0.0
    %2390 = vmatpush2.msra.mxu0 0.0
    %2391 = vmatprep.subr.mxu0 0.0
    %2392 = vmatpush2.msra.mxu0 0.0
    %2393 = vmatprep.subr.mxu0 0.0
    %2394 = vmatpush2.msra.mxu0 0.0
    %2395 = vmatprep.subr.mxu0 0.0
    %2396 = vmatpush2.msra.mxu0 0.0
    %2397 = vmatprep.subr.mxu0 0.0
    %2398 = vmatpush2.msra.mxu0 0.0
    %2399 = vmatprep.subr.mxu0 0.0
    %2400 = vmatpush2.msra.mxu0 0.0
    %2401 = vmatprep.subr.mxu0 0.0
    %2402 = vmatpush2.msra.mxu0 0.0
    %2403 = vmatprep.subr.mxu0 0.0
    %2404 = vmatpush2.msra.mxu0 0.0
    %2405 = vmatprep.subr.mxu0 0.0
    %2406 = vmatpush2.msra.mxu0 0.0
    %2407 = vmatprep.subr.mxu0 0.0
    %2408 = vmatpush2.msra.mxu0 0.0
    %2409 = vmatprep.subr.mxu0 0.0
    %2410 = vmatpush2.msra.mxu0 0.0
    %2411 = vmatprep.subr.mxu0 0.0
    %2412 = vmatpush2.msra.mxu0 0.0
    %2413 = vmatprep.subr.mxu0 0.0
    %2414 = vmatpush2.msra.mxu0 0.0
    %2415 = vmatprep.subr.mxu0 0.0
    %2416 = vmatpush2.msra.mxu0 0.0
    %2417 = vmatprep.mubr.f32.mxu0 0.0
    %2418 = vmatmul.mubr.f32.gmra.mxu0 %v2348
    %v2419 = vpop.f32.mrf.mxu0
    %v2420 = vadd.f32 0.0, %v2419
    %v2421 = vpop.f32.mrf.mxu0
    %2422 = vmatprep.mubr.f32.mxu0 0.0
    %2423 = vmatmul.mubr.f32.gmra.mxu0 %v2351
    %v2424 = vpop.f32.mrf.mxu0
    %v2425 = vadd.f32 0.0, %v2424
    %v2426 = vpop.f32.mrf.mxu0
    %2427 = vdwg.mxu0
    %v2428 = vadd.f32 %v2248, %v2420
    %v2429 = vadd.f32 %v2253, %v2425
    %v2430 = vadd.f32 %v2428, %v627
    %v2431 = vadd.f32 %v2429, %v627
    %v2432 = vmax.f32 %v2430, 0.0
    %v2433 = vmax.f32 %v2431, 0.0
    %2434 = vmatprep.subr.mxu0 0.0
    %2435 = vmatpush1.msra.mxu0 0.0
    %2436 = vmatprep.subr.mxu0 0.0
    %2437 = vmatpush1.msra.mxu0 0.0
    %2438 = vmatprep.subr.mxu0 0.0
    %2439 = vmatpush1.msra.mxu0 0.0
    %2440 = vmatprep.subr.mxu0 0.0
    %2441 = vmatpush1.msra.mxu0 0.0
    %2442 = vmatprep.subr.mxu0 0.0
    %2443 = vmatpush1.msra.mxu0 0.0
    %2444 = vmatprep.subr.mxu0 0.0
    %2445 = vmatpush1.msra.mxu0 0.0
    %2446 = vmatprep.subr.mxu0 0.0
    %2447 = vmatpush1.msra.mxu0 0.0
    %2448 = vmatprep.subr.mxu0 0.0
    %2449 = vmatpush1.msra.mxu0 0.0
    %2450 = vmatprep.subr.mxu0 0.0
    %2451 = vmatpush1.msra.mxu0 0.0
    %2452 = vmatprep.subr.mxu0 0.0
    %2453 = vmatpush1.msra.mxu0 0.0
    %2454 = vmatprep.subr.mxu0 0.0
    %2455 = vmatpush1.msra.mxu0 0.0
    %2456 = vmatprep.subr.mxu0 0.0
    %2457 = vmatpush1.msra.mxu0 0.0
    %2458 = vmatprep.subr.mxu0 0.0
    %2459 = vmatpush1.msra.mxu0 0.0
    %2460 = vmatprep.subr.mxu0 0.0
    %2461 = vmatpush1.msra.mxu0 0.0
    %2462 = vmatprep.subr.mxu0 0.0
    %2463 = vmatpush1.msra.mxu0 %v2433
    %2464 = vmatprep.subr.mxu0 0.0
    %2465 = vmatpush1.msra.mxu0 %v2432
    %2466 = vmatprep.subr.mxu0 0.0
    %2467 = vmatpush2.msra.mxu0 0.0
    %2468 = vmatprep.subr.mxu0 0.0
    %2469 = vmatpush2.msra.mxu0 0.0
    %2470 = vmatprep.subr.mxu0 0.0
    %2471 = vmatpush2.msra.mxu0 0.0
    %2472 = vmatprep.subr.mxu0 0.0
    %2473 = vmatpush2.msra.mxu0 0.0
    %2474 = vmatprep.subr.mxu0 0.0
    %2475 = vmatpush2.msra.mxu0 0.0
    %2476 = vmatprep.subr.mxu0 0.0
    %2477 = vmatpush2.msra.mxu0 0.0
    %2478 = vmatprep.subr.mxu0 0.0
    %2479 = vmatpush2.msra.mxu0 0.0
    %2480 = vmatprep.subr.mxu0 0.0
    %2481 = vmatpush2.msra.mxu0 0.0
    %2482 = vmatprep.subr.mxu0 0.0
    %2483 = vmatpush2.msra.mxu0 0.0
    %2484 = vmatprep.subr.mxu0 0.0
    %2485 = vmatpush2.msra.mxu0 0.0
    %2486 = vmatprep.subr.mxu0 0.0
    %2487 = vmatpush2.msra.mxu0 0.0
    %2488 = vmatprep.subr.mxu0 0.0
    %2489 = vmatpush2.msra.mxu0 0.0
    %2490 = vmatprep.subr.mxu0 0.0
    %2491 = vmatpush2.msra.mxu0 0.0
    %2492 = vmatprep.subr.mxu0 0.0
    %2493 = vmatpush2.msra.mxu0 0.0
    %2494 = vmatprep.subr.mxu0 0.0
    %2495 = vmatpush2.msra.mxu0 0.0
    %2496 = vmatprep.subr.mxu0 0.0
    %2497 = vmatpush2.msra.mxu0 0.0
    %2498 = vmatprep.mubr.f32.mxu0 0.0
    %2499 = vmatmul.mubr.f32.gmra.mxu0 %v634
    %v2500 = vpop.f32.mrf.mxu0
    %v2501 = vadd.f32 0.0, %v2500
    %v2502 = vpop.f32.mrf.mxu0
    %2503 = vdwg.mxu0
    %2504 = vmatprep.subr.mxu0 0.0
    %2505 = vmatpush1.msra.mxu0 0.0
    %2506 = vmatprep.subr.mxu0 0.0
    %2507 = vmatpush1.msra.mxu0 0.0
    %2508 = vmatprep.subr.mxu0 0.0
    %2509 = vmatpush1.msra.mxu0 0.0
    %2510 = vmatprep.subr.mxu0 0.0
    %2511 = vmatpush1.msra.mxu0 0.0
    %2512 = vmatprep.subr.mxu0 0.0
    %2513 = vmatpush1.msra.mxu0 0.0
    %2514 = vmatprep.subr.mxu0 0.0
    %2515 = vmatpush1.msra.mxu0 0.0
    %2516 = vmatprep.subr.mxu0 0.0
    %2517 = vmatpush1.msra.mxu0 0.0
    %2518 = vmatprep.subr.mxu0 0.0
    %2519 = vmatpush1.msra.mxu0 0.0
    %2520 = vmatprep.subr.mxu0 0.0
    %2521 = vmatpush1.msra.mxu0 0.0
    %2522 = vmatprep.subr.mxu0 0.0
    %2523 = vmatpush1.msra.mxu0 0.0
    %2524 = vmatprep.subr.mxu0 0.0
    %2525 = vmatpush1.msra.mxu0 0.0
    %2526 = vmatprep.subr.mxu0 0.0
    %2527 = vmatpush1.msra.mxu0 0.0
    %2528 = vmatprep.subr.mxu0 0.0
    %2529 = vmatpush1.msra.mxu0 0.0
    %2530 = vmatprep.subr.mxu0 0.0
    %2531 = vmatpush1.msra.mxu0 0.0
    %2532 = vmatprep.subr.mxu0 0.0
    %2533 = vmatpush1.msra.mxu0 %v2433
    %2534 = vmatprep.subr.mxu0 0.0
    %2535 = vmatpush1.msra.mxu0 %v2432
    %2536 = vmatprep.subr.mxu0 0.0
    %2537 = vmatpush2.msra.mxu0 0.0
    %2538 = vmatprep.subr.mxu0 0.0
    %2539 = vmatpush2.msra.mxu0 0.0
    %2540 = vmatprep.subr.mxu0 0.0
    %2541 = vmatpush2.msra.mxu0 0.0
    %2542 = vmatprep.subr.mxu0 0.0
    %2543 = vmatpush2.msra.mxu0 0.0
    %2544 = vmatprep.subr.mxu0 0.0
    %2545 = vmatpush2.msra.mxu0 0.0
    %2546 = vmatprep.subr.mxu0 0.0
    %2547 = vmatpush2.msra.mxu0 0.0
    %2548 = vmatprep.subr.mxu0 0.0
    %2549 = vmatpush2.msra.mxu0 0.0
    %2550 = vmatprep.subr.mxu0 0.0
    %2551 = vmatpush2.msra.mxu0 0.0
    %2552 = vmatprep.subr.mxu0 0.0
    %2553 = vmatpush2.msra.mxu0 0.0
    %2554 = vmatprep.subr.mxu0 0.0
    %2555 = vmatpush2.msra.mxu0 0.0
    %2556 = vmatprep.subr.mxu0 0.0
    %2557 = vmatpush2.msra.mxu0 0.0
    %2558 = vmatprep.subr.mxu0 0.0
    %2559 = vmatpush2.msra.mxu0 0.0
    %2560 = vmatprep.subr.mxu0 0.0
    %2561 = vmatpush2.msra.mxu0 0.0
    %2562 = vmatprep.subr.mxu0 0.0
    %2563 = vmatpush2.msra.mxu0 0.0
    %2564 = vmatprep.subr.mxu0 0.0
    %2565 = vmatpush2.msra.mxu0 0.0
    %2566 = vmatprep.subr.mxu0 0.0
    %2567 = vmatpush2.msra.mxu0 0.0
    %2568 = vmatprep.mubr.f32.mxu0 0.0
    %2569 = vmatmul.mubr.f32.gmra.mxu0 %v707
    %v2570 = vpop.f32.mrf.mxu0
    %v2571 = vadd.f32 0.0, %v2570
    %v2572 = vpop.f32.mrf.mxu0
    %2573 = vdwg.mxu0
    %v2574 = vmax.f32 %v2501, %v2571
    %2575 = vmatprep.subr.mxu0 0.0
    %2576 = vmatpush1.msra.mxu0 %v73
    %2577 = vmatprep.subr.mxu0 0.0
    %2578 = vmatpush1.msra.mxu0 %v72
    %2579 = vmatprep.subr.mxu0 0.0
    %2580 = vmatpush1.msra.mxu0 %v71
    %2581 = vmatprep.subr.mxu0 0.0
    %2582 = vmatpush1.msra.mxu0 %v70
    %2583 = vmatprep.subr.mxu0 0.0
    %2584 = vmatpush1.msra.mxu0 %v69
    %2585 = vmatprep.subr.mxu0 0.0
    %2586 = vmatpush1.msra.mxu0 %v68
    %2587 = vmatprep.subr.mxu0 0.0
    %2588 = vmatpush1.msra.mxu0 %v67
    %2589 = vmatprep.subr.mxu0 0.0
    %2590 = vmatpush1.msra.mxu0 %v66
    %2591 = vmatprep.subr.mxu0 0.0
    %2592 = vmatpush1.msra.mxu0 %v65
    %2593 = vmatprep.subr.mxu0 0.0
    %2594 = vmatpush1.msra.mxu0 %v64
    %2595 = vmatprep.subr.mxu0 0.0
    %2596 = vmatpush1.msra.mxu0 %v63
    %2597 = vmatprep.subr.mxu0 0.0
    %2598 = vmatpush1.msra.mxu0 %v62
    %2599 = vmatprep.subr.mxu0 0.0
    %2600 = vmatpush1.msra.mxu0 %v61
    %2601 = vmatprep.subr.mxu0 0.0
    %2602 = vmatpush1.msra.mxu0 %v60
    %2603 = vmatprep.subr.mxu0 0.0
    %2604 = vmatpush1.msra.mxu0 %v59
    %2605 = vmatprep.subr.mxu0 0.0
    %2606 = vmatpush1.msra.mxu0 %v58
    %2607 = vmatprep.subr.mxu0 0.0
    %2608 = vmatpush2.msra.mxu0 0.0
    %2609 = vmatprep.subr.mxu0 0.0
    %2610 = vmatpush2.msra.mxu0 0.0
    %2611 = vmatprep.subr.mxu0 0.0
    %2612 = vmatpush2.msra.mxu0 0.0
    %2613 = vmatprep.subr.mxu0 0.0
    %2614 = vmatpush2.msra.mxu0 0.0
    %2615 = vmatprep.subr.mxu0 0.0
    %2616 = vmatpush2.msra.mxu0 0.0
    %2617 = vmatprep.subr.mxu0 0.0
    %2618 = vmatpush2.msra.mxu0 0.0
    %2619 = vmatprep.subr.mxu0 0.0
    %2620 = vmatpush2.msra.mxu0 0.0
    %2621 = vmatprep.subr.mxu0 0.0
    %2622 = vmatpush2.msra.mxu0 0.0
    %2623 = vmatprep.subr.mxu0 0.0
    %2624 = vmatpush2.msra.mxu0 0.0
    %2625 = vmatprep.subr.mxu0 0.0
    %2626 = vmatpush2.msra.mxu0 0.0
    %2627 = vmatprep.subr.mxu0 0.0
    %2628 = vmatpush2.msra.mxu0 0.0
    %2629 = vmatprep.subr.mxu0 0.0
    %2630 = vmatpush2.msra.mxu0 0.0
    %2631 = vmatprep.subr.mxu0 0.0
    %2632 = vmatpush2.msra.mxu0 0.0
    %2633 = vmatprep.subr.mxu0 0.0
    %2634 = vmatpush2.msra.mxu0 0.0
    %2635 = vmatprep.subr.mxu0 0.0
    %2636 = vmatpush2.msra.mxu0 0.0
    %2637 = vmatprep.subr.mxu0 0.0
    %2638 = vmatpush2.msra.mxu0 0.0
    %2639 = vmatprep.mubr.f32.mxu0 0.0
    %2640 = vmatmul.mubr.f32.gmra.mxu0 %v2574
    %v2641 = vpop.f32.mrf.mxu0
    %v2642 = vadd.f32 0.0, %v2641
    %v2643 = vpop.f32.mrf.mxu0
    %2644 = vdwg.mxu0
    %2645 = vmatprep.subr.mxu0 0.0
    %2646 = vmatpush1.msra.mxu0 %v89
    %2647 = vmatprep.subr.mxu0 0.0
    %2648 = vmatpush1.msra.mxu0 %v88
    %2649 = vmatprep.subr.mxu0 0.0
    %2650 = vmatpush1.msra.mxu0 %v87
    %2651 = vmatprep.subr.mxu0 0.0
    %2652 = vmatpush1.msra.mxu0 %v86
    %2653 = vmatprep.subr.mxu0 0.0
    %2654 = vmatpush1.msra.mxu0 %v85
    %2655 = vmatprep.subr.mxu0 0.0
    %2656 = vmatpush1.msra.mxu0 %v84
    %2657 = vmatprep.subr.mxu0 0.0
    %2658 = vmatpush1.msra.mxu0 %v83
    %2659 = vmatprep.subr.mxu0 0.0
    %2660 = vmatpush1.msra.mxu0 %v82
    %2661 = vmatprep.subr.mxu0 0.0
    %2662 = vmatpush1.msra.mxu0 %v81
    %2663 = vmatprep.subr.mxu0 0.0
    %2664 = vmatpush1.msra.mxu0 %v80
    %2665 = vmatprep.subr.mxu0 0.0
    %2666 = vmatpush1.msra.mxu0 %v79
    %2667 = vmatprep.subr.mxu0 0.0
    %2668 = vmatpush1.msra.mxu0 %v78
    %2669 = vmatprep.subr.mxu0 0.0
    %2670 = vmatpush1.msra.mxu0 %v77
    %2671 = vmatprep.subr.mxu0 0.0
    %2672 = vmatpush1.msra.mxu0 %v76
    %2673 = vmatprep.subr.mxu0 0.0
    %2674 = vmatpush1.msra.mxu0 %v75
    %2675 = vmatprep.subr.mxu0 0.0
    %2676 = vmatpush1.msra.mxu0 %v74
    %2677 = vmatprep.subr.mxu0 0.0
    %2678 = vmatpush2.msra.mxu0 0.0
    %2679 = vmatprep.subr.mxu0 0.0
    %2680 = vmatpush2.msra.mxu0 0.0
    %2681 = vmatprep.subr.mxu0 0.0
    %2682 = vmatpush2.msra.mxu0 0.0
    %2683 = vmatprep.subr.mxu0 0.0
    %2684 = vmatpush2.msra.mxu0 0.0
    %2685 = vmatprep.subr.mxu0 0.0
    %2686 = vmatpush2.msra.mxu0 0.0
    %2687 = vmatprep.subr.mxu0 0.0
    %2688 = vmatpush2.msra.mxu0 0.0
    %2689 = vmatprep.subr.mxu0 0.0
    %2690 = vmatpush2.msra.mxu0 0.0
    %2691 = vmatprep.subr.mxu0 0.0
    %2692 = vmatpush2.msra.mxu0 0.0
    %2693 = vmatprep.subr.mxu0 0.0
    %2694 = vmatpush2.msra.mxu0 0.0
    %2695 = vmatprep.subr.mxu0 0.0
    %2696 = vmatpush2.msra.mxu0 0.0
    %2697 = vmatprep.subr.mxu0 0.0
    %2698 = vmatpush2.msra.mxu0 0.0
    %2699 = vmatprep.subr.mxu0 0.0
    %2700 = vmatpush2.msra.mxu0 0.0
    %2701 = vmatprep.subr.mxu0 0.0
    %2702 = vmatpush2.msra.mxu0 0.0
    %2703 = vmatprep.subr.mxu0 0.0
    %2704 = vmatpush2.msra.mxu0 0.0
    %2705 = vmatprep.subr.mxu0 0.0
    %2706 = vmatpush2.msra.mxu0 0.0
    %2707 = vmatprep.subr.mxu0 0.0
    %2708 = vmatpush2.msra.mxu0 0.0
    %2709 = vmatprep.mubr.f32.mxu0 0.0
    %2710 = vmatmul.mubr.f32.gmra.mxu0 %v2574
    %v2711 = vpop.f32.mrf.mxu0
    %v2712 = vadd.f32 0.0, %v2711
    %v2713 = vpop.f32.mrf.mxu0
    %2714 = vdwg.mxu0
    %v2715 = vmax.f32 %v2642, %v2712
    %v2716 = vld [vmem:[%s9] sm:$0xff]
    %v2718 = vsel %vm922, %v2716, 0
    %2720 = vmatprep.subr.mxu0 0.0
    %2721 = vmatpush1.msra.mxu0 0.0
    %2722 = vmatprep.subr.mxu0 0.0
    %2723 = vmatpush1.msra.mxu0 0.0
    %2724 = vmatprep.subr.mxu0 0.0
    %2725 = vmatpush1.msra.mxu0 0.0
    %2726 = vmatprep.subr.mxu0 0.0
    %2727 = vmatpush1.msra.mxu0 0.0
    %2728 = vmatprep.subr.mxu0 0.0
    %2729 = vmatpush1.msra.mxu0 0.0
    %2730 = vmatprep.subr.mxu0 0.0
    %2731 = vmatpush1.msra.mxu0 0.0
    %2732 = vmatprep.subr.mxu0 0.0
    %2733 = vmatpush1.msra.mxu0 0.0
    %2734 = vmatprep.subr.mxu0 0.0
    %2735 = vmatpush1.msra.mxu0 0.0
    %2736 = vmatprep.subr.mxu0 0.0
    %2737 = vmatpush1.msra.mxu0 0.0
    %2738 = vmatprep.subr.mxu0 0.0
    %2739 = vmatpush1.msra.mxu0 0.0
    %2740 = vmatprep.subr.mxu0 0.0
    %2741 = vmatpush1.msra.mxu0 0.0
    %2742 = vmatprep.subr.mxu0 0.0
    %2743 = vmatpush1.msra.mxu0 0.0
    %2744 = vmatprep.subr.mxu0 0.0
    %2745 = vmatpush1.msra.mxu0 0.0
    %2746 = vmatprep.subr.mxu0 0.0
    %2747 = vmatpush1.msra.mxu0 0.0
    %2748 = vmatprep.subr.mxu0 0.0
    %2749 = vmatpush1.msra.mxu0 0.0
    %2750 = vmatprep.subr.mxu0 0.0
    %2751 = vmatpush1.msra.mxu0 %v2715
    %2752 = vmatprep.subr.mxu0 0.0
    %2753 = vmatpush2.msra.mxu0 0.0
    %2754 = vmatprep.subr.mxu0 0.0
    %2755 = vmatpush2.msra.mxu0 0.0
    %2756 = vmatprep.subr.mxu0 0.0
    %2757 = vmatpush2.msra.mxu0 0.0
    %2758 = vmatprep.subr.mxu0 0.0
    %2759 = vmatpush2.msra.mxu0 0.0
    %2760 = vmatprep.subr.mxu0 0.0
    %2761 = vmatpush2.msra.mxu0 0.0
    %2762 = vmatprep.subr.mxu0 0.0
    %2763 = vmatpush2.msra.mxu0 0.0
    %2764 = vmatprep.subr.mxu0 0.0
    %2765 = vmatpush2.msra.mxu0 0.0
    %2766 = vmatprep.subr.mxu0 0.0
    %2767 = vmatpush2.msra.mxu0 0.0
    %2768 = vmatprep.subr.mxu0 0.0
    %2769 = vmatpush2.msra.mxu0 0.0
    %2770 = vmatprep.subr.mxu0 0.0
    %2771 = vmatpush2.msra.mxu0 0.0
    %2772 = vmatprep.subr.mxu0 0.0
    %2773 = vmatpush2.msra.mxu0 0.0
    %2774 = vmatprep.subr.mxu0 0.0
    %2775 = vmatpush2.msra.mxu0 0.0
    %2776 = vmatprep.subr.mxu0 0.0
    %2777 = vmatpush2.msra.mxu0 0.0
    %2778 = vmatprep.subr.mxu0 0.0
    %2779 = vmatpush2.msra.mxu0 0.0
    %2780 = vmatprep.subr.mxu0 0.0
    %2781 = vmatpush2.msra.mxu0 0.0
    %2782 = vmatprep.subr.mxu0 0.0
    %2783 = vmatpush2.msra.mxu0 0.0
    %2784 = vmatprep.mubr.f32.mxu0 0.0
    %2785 = vmatmul.mubr.f32.gmra.mxu0 %v2718
    %v2786 = vpop.f32.mrf.mxu0
    %v2787 = vadd.f32 0.0, %v2786
    %v2788 = vpop.f32.mrf.mxu0
    %2789 = vdwg.mxu0
    %v2790 = vld [vmem:[%s8] sm:$0xff]
    %v2791 = vld [vmem:[%s8 + $0x8] sm:$0xff]
    %v2792 = vld [vmem:[%s8 + $0x10] sm:$0xff]
    %v2793 = vld [vmem:[%s8 + $0x18] sm:$0xff]
    %v2794 = vld [vmem:[%s8 + $0x20] sm:$0xff]
    %v2795 = vld [vmem:[%s8 + $0x28] sm:$0xff]
    %v2796 = vld [vmem:[%s8 + $0x30] sm:$0xff]
    %v2797 = vld [vmem:[%s8 + $0x38] sm:$0xff]
    %v2798 = vld [vmem:[%s1004] sm:$0xff]
    %v2800 = vsel %vm922, %v2798, 0
    %2802 = vmatprep.subr.mxu0 0.0
    %2803 = vmatpush1.msra.mxu0 0.0
    %2804 = vmatprep.subr.mxu0 0.0
    %2805 = vmatpush1.msra.mxu0 0.0
    %2806 = vmatprep.subr.mxu0 0.0
    %2807 = vmatpush1.msra.mxu0 0.0
    %2808 = vmatprep.subr.mxu0 0.0
    %2809 = vmatpush1.msra.mxu0 0.0
    %2810 = vmatprep.subr.mxu0 0.0
    %2811 = vmatpush1.msra.mxu0 0.0
    %2812 = vmatprep.subr.mxu0 0.0
    %2813 = vmatpush1.msra.mxu0 0.0
    %2814 = vmatprep.subr.mxu0 0.0
    %2815 = vmatpush1.msra.mxu0 0.0
    %2816 = vmatprep.subr.mxu0 0.0
    %2817 = vmatpush1.msra.mxu0 0.0
    %2818 = vmatprep.subr.mxu0 0.0
    %2819 = vmatpush1.msra.mxu0 0.0
    %2820 = vmatprep.subr.mxu0 0.0
    %2821 = vmatpush1.msra.mxu0 0.0
    %2822 = vmatprep.subr.mxu0 0.0
    %2823 = vmatpush1.msra.mxu0 0.0
    %2824 = vmatprep.subr.mxu0 0.0
    %2825 = vmatpush1.msra.mxu0 0.0
    %2826 = vmatprep.subr.mxu0 0.0
    %2827 = vmatpush1.msra.mxu0 0.0
    %2828 = vmatprep.subr.mxu0 0.0
    %2829 = vmatpush1.msra.mxu0 0.0
    %2830 = vmatprep.subr.mxu0 0.0
    %2831 = vmatpush1.msra.mxu0 0.0
    %2832 = vmatprep.subr.mxu0 0.0
    %2833 = vmatpush1.msra.mxu0 %v2715
    %2834 = vmatprep.subr.mxu0 0.0
    %2835 = vmatpush2.msra.mxu0 0.0
    %2836 = vmatprep.subr.mxu0 0.0
    %2837 = vmatpush2.msra.mxu0 0.0
    %2838 = vmatprep.subr.mxu0 0.0
    %2839 = vmatpush2.msra.mxu0 0.0
    %2840 = vmatprep.subr.mxu0 0.0
    %2841 = vmatpush2.msra.mxu0 0.0
    %2842 = vmatprep.subr.mxu0 0.0
    %2843 = vmatpush2.msra.mxu0 0.0
    %2844 = vmatprep.subr.mxu0 0.0
    %2845 = vmatpush2.msra.mxu0 0.0
    %2846 = vmatprep.subr.mxu0 0.0
    %2847 = vmatpush2.msra.mxu0 0.0
    %2848 = vmatprep.subr.mxu0 0.0
    %2849 = vmatpush2.msra.mxu0 0.0
    %2850 = vmatprep.subr.mxu0 0.0
    %2851 = vmatpush2.msra.mxu0 0.0
    %2852 = vmatprep.subr.mxu0 0.0
    %2853 = vmatpush2.msra.mxu0 0.0
    %2854 = vmatprep.subr.mxu0 0.0
    %2855 = vmatpush2.msra.mxu0 0.0
    %2856 = vmatprep.subr.mxu0 0.0
    %2857 = vmatpush2.msra.mxu0 0.0
    %2858 = vmatprep.subr.mxu0 0.0
    %2859 = vmatpush2.msra.mxu0 0.0
    %2860 = vmatprep.subr.mxu0 0.0
    %2861 = vmatpush2.msra.mxu0 0.0
    %2862 = vmatprep.subr.mxu0 0.0
    %2863 = vmatpush2.msra.mxu0 0.0
    %2864 = vmatprep.subr.mxu0 0.0
    %2865 = vmatpush2.msra.mxu0 0.0
    %2866 = vmatprep.mubr.f32.mxu0 0.0
    %2867 = vmatmul.mubr.f32.gmra.mxu0 %v2800
    %v2868 = vpop.f32.mrf.mxu0
    %v2869 = vadd.f32 0.0, %v2868
    %v2870 = vpop.f32.mrf.mxu0
    %2871 = vdwg.mxu0
    %v2872 = vld [vmem:[%s1079] sm:$0xff]
    %v2873 = vld [vmem:[%s1079 + $0x8] sm:$0xff]
    %v2874 = vld [vmem:[%s1079 + $0x10] sm:$0xff]
    %v2875 = vld [vmem:[%s1079 + $0x18] sm:$0xff]
    %v2876 = vld [vmem:[%s1079 + $0x20] sm:$0xff]
    %v2877 = vld [vmem:[%s1079 + $0x28] sm:$0xff]
    %v2878 = vld [vmem:[%s1079 + $0x30] sm:$0xff]
    %v2879 = vld [vmem:[%s1079 + $0x38] sm:$0xff]
    %v2881 = vsel %vm284, %v2869, 0
    %2883 = vmatprep.subr.mxu0 0.0
    %2884 = vmatpush1.msra.mxu0 0.0
    %2885 = vmatprep.subr.mxu0 0.0
    %2886 = vmatpush1.msra.mxu0 0.0
    %2887 = vmatprep.subr.mxu0 0.0
    %2888 = vmatpush1.msra.mxu0 0.0
    %2889 = vmatprep.subr.mxu0 0.0
    %2890 = vmatpush1.msra.mxu0 0.0
    %2891 = vmatprep.subr.mxu0 0.0
    %2892 = vmatpush1.msra.mxu0 0.0
    %2893 = vmatprep.subr.mxu0 0.0
    %2894 = vmatpush1.msra.mxu0 0.0
    %2895 = vmatprep.subr.mxu0 0.0
    %2896 = vmatpush1.msra.mxu0 0.0
    %2897 = vmatprep.subr.mxu0 0.0
    %2898 = vmatpush1.msra.mxu0 0.0
    %2899 = vmatprep.subr.mxu0 0.0
    %2900 = vmatpush1.msra.mxu0 %v2879
    %2901 = vmatprep.subr.mxu0 0.0
    %2902 = vmatpush1.msra.mxu0 %v2878
    %2903 = vmatprep.subr.mxu0 0.0
    %2904 = vmatpush1.msra.mxu0 %v2877
    %2905 = vmatprep.subr.mxu0 0.0
    %2906 = vmatpush1.msra.mxu0 %v2876
    %2907 = vmatprep.subr.mxu0 0.0
    %2908 = vmatpush1.msra.mxu0 %v2875
    %2909 = vmatprep.subr.mxu0 0.0
    %2910 = vmatpush1.msra.mxu0 %v2874
    %2911 = vmatprep.subr.mxu0 0.0
    %2912 = vmatpush1.msra.mxu0 %v2873
    %2913 = vmatprep.subr.mxu0 0.0
    %2914 = vmatpush1.msra.mxu0 %v2872
    %2915 = vmatprep.subr.mxu0 0.0
    %2916 = vmatpush2.msra.mxu0 0.0
    %2917 = vmatprep.subr.mxu0 0.0
    %2918 = vmatpush2.msra.mxu0 0.0
    %2919 = vmatprep.subr.mxu0 0.0
    %2920 = vmatpush2.msra.mxu0 0.0
    %2921 = vmatprep.subr.mxu0 0.0
    %2922 = vmatpush2.msra.mxu0 0.0
    %2923 = vmatprep.subr.mxu0 0.0
    %2924 = vmatpush2.msra.mxu0 0.0
    %2925 = vmatprep.subr.mxu0 0.0
    %2926 = vmatpush2.msra.mxu0 0.0
    %2927 = vmatprep.subr.mxu0 0.0
    %2928 = vmatpush2.msra.mxu0 0.0
    %2929 = vmatprep.subr.mxu0 0.0
    %2930 = vmatpush2.msra.mxu0 0.0
    %2931 = vmatprep.subr.mxu0 0.0
    %2932 = vmatpush2.msra.mxu0 0.0
    %2933 = vmatprep.subr.mxu0 0.0
    %2934 = vmatpush2.msra.mxu0 0.0
    %2935 = vmatprep.subr.mxu0 0.0
    %2936 = vmatpush2.msra.mxu0 0.0
    %2937 = vmatprep.subr.mxu0 0.0
    %2938 = vmatpush2.msra.mxu0 0.0
    %2939 = vmatprep.subr.mxu0 0.0
    %2940 = vmatpush2.msra.mxu0 0.0
    %2941 = vmatprep.subr.mxu0 0.0
    %2942 = vmatpush2.msra.mxu0 0.0
    %2943 = vmatprep.subr.mxu0 0.0
    %2944 = vmatpush2.msra.mxu0 0.0
    %2945 = vmatprep.subr.mxu0 0.0
    %2946 = vmatpush2.msra.mxu0 0.0
    %2947 = vmatprep.mubr.f32.mxu0 0.0
    %2948 = vmatmul.mubr.f32.gmra.mxu0 %v2881
    %v2949 = vpop.f32.mrf.mxu0
    %v2950 = vadd.f32 0.0, %v2949
    %v2951 = vpop.f32.mrf.mxu0
    %2952 = vdwg.mxu0
    %v2954 = vsel %vm284, %v2787, 0
    %2956 = vmatprep.subr.mxu0 0.0
    %2957 = vmatpush1.msra.mxu0 0.0
    %2958 = vmatprep.subr.mxu0 0.0
    %2959 = vmatpush1.msra.mxu0 0.0
    %2960 = vmatprep.subr.mxu0 0.0
    %2961 = vmatpush1.msra.mxu0 0.0
    %2962 = vmatprep.subr.mxu0 0.0
    %2963 = vmatpush1.msra.mxu0 0.0
    %2964 = vmatprep.subr.mxu0 0.0
    %2965 = vmatpush1.msra.mxu0 0.0
    %2966 = vmatprep.subr.mxu0 0.0
    %2967 = vmatpush1.msra.mxu0 0.0
    %2968 = vmatprep.subr.mxu0 0.0
    %2969 = vmatpush1.msra.mxu0 0.0
    %2970 = vmatprep.subr.mxu0 0.0
    %2971 = vmatpush1.msra.mxu0 0.0
    %2972 = vmatprep.subr.mxu0 0.0
    %2973 = vmatpush1.msra.mxu0 %v2797
    %2974 = vmatprep.subr.mxu0 0.0
    %2975 = vmatpush1.msra.mxu0 %v2796
    %2976 = vmatprep.subr.mxu0 0.0
    %2977 = vmatpush1.msra.mxu0 %v2795
    %2978 = vmatprep.subr.mxu0 0.0
    %2979 = vmatpush1.msra.mxu0 %v2794
    %2980 = vmatprep.subr.mxu0 0.0
    %2981 = vmatpush1.msra.mxu0 %v2793
    %2982 = vmatprep.subr.mxu0 0.0
    %2983 = vmatpush1.msra.mxu0 %v2792
    %2984 = vmatprep.subr.mxu0 0.0
    %2985 = vmatpush1.msra.mxu0 %v2791
    %2986 = vmatprep.subr.mxu0 0.0
    %2987 = vmatpush1.msra.mxu0 %v2790
    %2988 = vmatprep.subr.mxu0 0.0
    %2989 = vmatpush2.msra.mxu0 0.0
    %2990 = vmatprep.subr.mxu0 0.0
    %2991 = vmatpush2.msra.mxu0 0.0
    %2992 = vmatprep.subr.mxu0 0.0
    %2993 = vmatpush2.msra.mxu0 0.0
    %2994 = vmatprep.subr.mxu0 0.0
    %2995 = vmatpush2.msra.mxu0 0.0
    %2996 = vmatprep.subr.mxu0 0.0
    %2997 = vmatpush2.msra.mxu0 0.0
    %2998 = vmatprep.subr.mxu0 0.0
    %2999 = vmatpush2.msra.mxu0 0.0
    %3000 = vmatprep.subr.mxu0 0.0
    %3001 = vmatpush2.msra.mxu0 0.0
    %3002 = vmatprep.subr.mxu0 0.0
    %3003 = vmatpush2.msra.mxu0 0.0
    %3004 = vmatprep.subr.mxu0 0.0
    %3005 = vmatpush2.msra.mxu0 0.0
    %3006 = vmatprep.subr.mxu0 0.0
    %3007 = vmatpush2.msra.mxu0 0.0
    %3008 = vmatprep.subr.mxu0 0.0
    %3009 = vmatpush2.msra.mxu0 0.0
    %3010 = vmatprep.subr.mxu0 0.0
    %3011 = vmatpush2.msra.mxu0 0.0
    %3012 = vmatprep.subr.mxu0 0.0
    %3013 = vmatpush2.msra.mxu0 0.0
    %3014 = vmatprep.subr.mxu0 0.0
    %3015 = vmatpush2.msra.mxu0 0.0
    %3016 = vmatprep.subr.mxu0 0.0
    %3017 = vmatpush2.msra.mxu0 0.0
    %3018 = vmatprep.subr.mxu0 0.0
    %3019 = vmatpush2.msra.mxu0 0.0
    %3020 = vmatprep.mubr.f32.mxu0 0.0
    %3021 = vmatmul.mubr.f32.gmra.mxu0 %v2954
    %v3022 = vpop.f32.mrf.mxu0
    %v3023 = vadd.f32 %v2950, %v3022
    %v3024 = vpop.f32.mrf.mxu0
    %3025 = vdwg.mxu0
    %v3026 = vld [vmem:[%s1234] sm:$0xff]
    %v3028 = vsel %vm922, %v3026, 0
    %3030 = vmatprep.subr.mxu0 0.0
    %3031 = vmatpush1.msra.mxu0 0.0
    %3032 = vmatprep.subr.mxu0 0.0
    %3033 = vmatpush1.msra.mxu0 0.0
    %3034 = vmatprep.subr.mxu0 0.0
    %3035 = vmatpush1.msra.mxu0 0.0
    %3036 = vmatprep.subr.mxu0 0.0
    %3037 = vmatpush1.msra.mxu0 0.0
    %3038 = vmatprep.subr.mxu0 0.0
    %3039 = vmatpush1.msra.mxu0 0.0
    %3040 = vmatprep.subr.mxu0 0.0
    %3041 = vmatpush1.msra.mxu0 0.0
    %3042 = vmatprep.subr.mxu0 0.0
    %3043 = vmatpush1.msra.mxu0 0.0
    %3044 = vmatprep.subr.mxu0 0.0
    %3045 = vmatpush1.msra.mxu0 0.0
    %3046 = vmatprep.subr.mxu0 0.0
    %3047 = vmatpush1.msra.mxu0 0.0
    %3048 = vmatprep.subr.mxu0 0.0
    %3049 = vmatpush1.msra.mxu0 0.0
    %3050 = vmatprep.subr.mxu0 0.0
    %3051 = vmatpush1.msra.mxu0 0.0
    %3052 = vmatprep.subr.mxu0 0.0
    %3053 = vmatpush1.msra.mxu0 0.0
    %3054 = vmatprep.subr.mxu0 0.0
    %3055 = vmatpush1.msra.mxu0 0.0
    %3056 = vmatprep.subr.mxu0 0.0
    %3057 = vmatpush1.msra.mxu0 0.0
    %3058 = vmatprep.subr.mxu0 0.0
    %3059 = vmatpush1.msra.mxu0 0.0
    %3060 = vmatprep.subr.mxu0 0.0
    %3061 = vmatpush1.msra.mxu0 %v2715
    %3062 = vmatprep.subr.mxu0 0.0
    %3063 = vmatpush2.msra.mxu0 0.0
    %3064 = vmatprep.subr.mxu0 0.0
    %3065 = vmatpush2.msra.mxu0 0.0
    %3066 = vmatprep.subr.mxu0 0.0
    %3067 = vmatpush2.msra.mxu0 0.0
    %3068 = vmatprep.subr.mxu0 0.0
    %3069 = vmatpush2.msra.mxu0 0.0
    %3070 = vmatprep.subr.mxu0 0.0
    %3071 = vmatpush2.msra.mxu0 0.0
    %3072 = vmatprep.subr.mxu0 0.0
    %3073 = vmatpush2.msra.mxu0 0.0
    %3074 = vmatprep.subr.mxu0 0.0
    %3075 = vmatpush2.msra.mxu0 0.0
    %3076 = vmatprep.subr.mxu0 0.0
    %3077 = vmatpush2.msra.mxu0 0.0
    %3078 = vmatprep.subr.mxu0 0.0
    %3079 = vmatpush2.msra.mxu0 0.0
    %3080 = vmatprep.subr.mxu0 0.0
    %3081 = vmatpush2.msra.mxu0 0.0
    %3082 = vmatprep.subr.mxu0 0.0
    %3083 = vmatpush2.msra.mxu0 0.0
    %3084 = vmatprep.subr.mxu0 0.0
    %3085 = vmatpush2.msra.mxu0 0.0
    %3086 = vmatprep.subr.mxu0 0.0
    %3087 = vmatpush2.msra.mxu0 0.0
    %3088 = vmatprep.subr.mxu0 0.0
    %3089 = vmatpush2.msra.mxu0 0.0
    %3090 = vmatprep.subr.mxu0 0.0
    %3091 = vmatpush2.msra.mxu0 0.0
    %3092 = vmatprep.subr.mxu0 0.0
    %3093 = vmatpush2.msra.mxu0 0.0
    %3094 = vmatprep.mubr.f32.mxu0 0.0
    %3095 = vmatmul.mubr.f32.gmra.mxu0 %v3028
    %v3096 = vpop.f32.mrf.mxu0
    %v3097 = vadd.f32 0.0, %v3096
    %v3098 = vpop.f32.mrf.mxu0
    %3099 = vdwg.mxu0
    %v3100 = vld [vmem:[%s1309] sm:$0xff]
    %v3101 = vld [vmem:[%s1309 + $0x8] sm:$0xff]
    %v3102 = vld [vmem:[%s1309 + $0x10] sm:$0xff]
    %v3103 = vld [vmem:[%s1309 + $0x18] sm:$0xff]
    %v3104 = vld [vmem:[%s1309 + $0x20] sm:$0xff]
    %v3105 = vld [vmem:[%s1309 + $0x28] sm:$0xff]
    %v3106 = vld [vmem:[%s1309 + $0x30] sm:$0xff]
    %v3107 = vld [vmem:[%s1309 + $0x38] sm:$0xff]
    %v3109 = vsel %vm284, %v3097, 0
    %3111 = vmatprep.subr.mxu0 0.0
    %3112 = vmatpush1.msra.mxu0 0.0
    %3113 = vmatprep.subr.mxu0 0.0
    %3114 = vmatpush1.msra.mxu0 0.0
    %3115 = vmatprep.subr.mxu0 0.0
    %3116 = vmatpush1.msra.mxu0 0.0
    %3117 = vmatprep.subr.mxu0 0.0
    %3118 = vmatpush1.msra.mxu0 0.0
    %3119 = vmatprep.subr.mxu0 0.0
    %3120 = vmatpush1.msra.mxu0 0.0
    %3121 = vmatprep.subr.mxu0 0.0
    %3122 = vmatpush1.msra.mxu0 0.0
    %3123 = vmatprep.subr.mxu0 0.0
    %3124 = vmatpush1.msra.mxu0 0.0
    %3125 = vmatprep.subr.mxu0 0.0
    %3126 = vmatpush1.msra.mxu0 0.0
    %3127 = vmatprep.subr.mxu0 0.0
    %3128 = vmatpush1.msra.mxu0 %v3107
    %3129 = vmatprep.subr.mxu0 0.0
    %3130 = vmatpush1.msra.mxu0 %v3106
    %3131 = vmatprep.subr.mxu0 0.0
    %3132 = vmatpush1.msra.mxu0 %v3105
    %3133 = vmatprep.subr.mxu0 0.0
    %3134 = vmatpush1.msra.mxu0 %v3104
    %3135 = vmatprep.subr.mxu0 0.0
    %3136 = vmatpush1.msra.mxu0 %v3103
    %3137 = vmatprep.subr.mxu0 0.0
    %3138 = vmatpush1.msra.mxu0 %v3102
    %3139 = vmatprep.subr.mxu0 0.0
    %3140 = vmatpush1.msra.mxu0 %v3101
    %3141 = vmatprep.subr.mxu0 0.0
    %3142 = vmatpush1.msra.mxu0 %v3100
    %3143 = vmatprep.subr.mxu0 0.0
    %3144 = vmatpush2.msra.mxu0 0.0
    %3145 = vmatprep.subr.mxu0 0.0
    %3146 = vmatpush2.msra.mxu0 0.0
    %3147 = vmatprep.subr.mxu0 0.0
    %3148 = vmatpush2.msra.mxu0 0.0
    %3149 = vmatprep.subr.mxu0 0.0
    %3150 = vmatpush2.msra.mxu0 0.0
    %3151 = vmatprep.subr.mxu0 0.0
    %3152 = vmatpush2.msra.mxu0 0.0
    %3153 = vmatprep.subr.mxu0 0.0
    %3154 = vmatpush2.msra.mxu0 0.0
    %3155 = vmatprep.subr.mxu0 0.0
    %3156 = vmatpush2.msra.mxu0 0.0
    %3157 = vmatprep.subr.mxu0 0.0
    %3158 = vmatpush2.msra.mxu0 0.0
    %3159 = vmatprep.subr.mxu0 0.0
    %3160 = vmatpush2.msra.mxu0 0.0
    %3161 = vmatprep.subr.mxu0 0.0
    %3162 = vmatpush2.msra.mxu0 0.0
    %3163 = vmatprep.subr.mxu0 0.0
    %3164 = vmatpush2.msra.mxu0 0.0
    %3165 = vmatprep.subr.mxu0 0.0
    %3166 = vmatpush2.msra.mxu0 0.0
    %3167 = vmatprep.subr.mxu0 0.0
    %3168 = vmatpush2.msra.mxu0 0.0
    %3169 = vmatprep.subr.mxu0 0.0
    %3170 = vmatpush2.msra.mxu0 0.0
    %3171 = vmatprep.subr.mxu0 0.0
    %3172 = vmatpush2.msra.mxu0 0.0
    %3173 = vmatprep.subr.mxu0 0.0
    %3174 = vmatpush2.msra.mxu0 0.0
    %3175 = vmatprep.mubr.f32.mxu0 0.0
    %3176 = vmatmul.mubr.f32.gmra.mxu0 %v3109
    %v3177 = vpop.f32.mrf.mxu0
    %v3178 = vadd.f32 0.0, %v3177
    %v3179 = vpop.f32.mrf.mxu0
    %3180 = vdwg.mxu0
    %v3181 = vadd.f32 %v3023, %v3178
    %v3182 = vadd.f32 %v3181, %v1396
    %v3183 = vmax.f32 %v3182, 0.0
    %v3184 = vmin.f32 %v3183, 6.0
    %3185 = vmatprep.subr.mxu0 0.0
    %3186 = vmatpush1.msra.mxu0 0.0
    %3187 = vmatprep.subr.mxu0 0.0
    %3188 = vmatpush1.msra.mxu0 0.0
    %3189 = vmatprep.subr.mxu0 0.0
    %3190 = vmatpush1.msra.mxu0 0.0
    %3191 = vmatprep.subr.mxu0 0.0
    %3192 = vmatpush1.msra.mxu0 0.0
    %3193 = vmatprep.subr.mxu0 0.0
    %3194 = vmatpush1.msra.mxu0 0.0
    %3195 = vmatprep.subr.mxu0 0.0
    %3196 = vmatpush1.msra.mxu0 0.0
    %3197 = vmatprep.subr.mxu0 0.0
    %3198 = vmatpush1.msra.mxu0 0.0
    %3199 = vmatprep.subr.mxu0 0.0
    %3200 = vmatpush1.msra.mxu0 0.0
    %3201 = vmatprep.subr.mxu0 0.0
    %3202 = vmatpush1.msra.mxu0 0.0
    %3203 = vmatprep.subr.mxu0 0.0
    %3204 = vmatpush1.msra.mxu0 0.0
    %3205 = vmatprep.subr.mxu0 0.0
    %3206 = vmatpush1.msra.mxu0 0.0
    %3207 = vmatprep.subr.mxu0 0.0
    %3208 = vmatpush1.msra.mxu0 0.0
    %3209 = vmatprep.subr.mxu0 0.0
    %3210 = vmatpush1.msra.mxu0 0.0
    %3211 = vmatprep.subr.mxu0 0.0
    %3212 = vmatpush1.msra.mxu0 0.0
    %3213 = vmatprep.subr.mxu0 0.0
    %3214 = vmatpush1.msra.mxu0 0.0
    %3215 = vmatprep.subr.mxu0 0.0
    %3216 = vmatpush1.msra.mxu0 %v3184
    %3217 = vmatprep.subr.mxu0 0.0
    %3218 = vmatpush2.msra.mxu0 0.0
    %3219 = vmatprep.subr.mxu0 0.0
    %3220 = vmatpush2.msra.mxu0 0.0
    %3221 = vmatprep.subr.mxu0 0.0
    %3222 = vmatpush2.msra.mxu0 0.0
    %3223 = vmatprep.subr.mxu0 0.0
    %3224 = vmatpush2.msra.mxu0 0.0
    %3225 = vmatprep.subr.mxu0 0.0
    %3226 = vmatpush2.msra.mxu0 0.0
    %3227 = vmatprep.subr.mxu0 0.0
    %3228 = vmatpush2.msra.mxu0 0.0
    %3229 = vmatprep.subr.mxu0 0.0
    %3230 = vmatpush2.msra.mxu0 0.0
    %3231 = vmatprep.subr.mxu0 0.0
    %3232 = vmatpush2.msra.mxu0 0.0
    %3233 = vmatprep.subr.mxu0 0.0
    %3234 = vmatpush2.msra.mxu0 0.0
    %3235 = vmatprep.subr.mxu0 0.0
    %3236 = vmatpush2.msra.mxu0 0.0
    %3237 = vmatprep.subr.mxu0 0.0
    %3238 = vmatpush2.msra.mxu0 0.0
    %3239 = vmatprep.subr.mxu0 0.0
    %3240 = vmatpush2.msra.mxu0 0.0
    %3241 = vmatprep.subr.mxu0 0.0
    %3242 = vmatpush2.msra.mxu0 0.0
    %3243 = vmatprep.subr.mxu0 0.0
    %3244 = vmatpush2.msra.mxu0 0.0
    %3245 = vmatprep.subr.mxu0 0.0
    %3246 = vmatpush2.msra.mxu0 0.0
    %3247 = vmatprep.subr.mxu0 0.0
    %3248 = vmatpush2.msra.mxu0 0.0
    %3249 = vmatprep.mubr.f32.mxu0 0.0
    %3250 = vmatmul.mubr.f32.gmra.mxu0 %v1402
    %v3251 = vpop.f32.mrf.mxu0
    %v3252 = vadd.f32 0.0, %v3251
    %v3253 = vpop.f32.mrf.mxu0
    %3254 = vdwg.mxu0
    %v3255 = vld [vmem:[%s12] sm:$0xff]
    %v3256 = vld [vmem:[%s12 + $0x8] sm:$0xff]
    %v3257 = vld [vmem:[%s12 + $0x10] sm:$0xff]
    %v3258 = vld [vmem:[%s12 + $0x18] sm:$0xff]
    %v3259 = vld [vmem:[%s12 + $0x20] sm:$0xff]
    %v3260 = vld [vmem:[%s12 + $0x28] sm:$0xff]
    %v3261 = vld [vmem:[%s12 + $0x30] sm:$0xff]
    %v3262 = vld [vmem:[%s12 + $0x38] sm:$0xff]
    %v3263 = vld [vmem:[%s12 + $0x40] sm:$0xff]
    %v3264 = vld [vmem:[%s12 + $0x48] sm:$0xff]
    %v3265 = vld [vmem:[%s12 + $0x50] sm:$0xff]
    %v3266 = vld [vmem:[%s12 + $0x58] sm:$0xff]
    %v3267 = vld [vmem:[%s12 + $0x60] sm:$0xff]
    %v3268 = vld [vmem:[%s12 + $0x68] sm:$0xff]
    %v3269 = vld [vmem:[%s12 + $0x70] sm:$0xff]
    %v3270 = vld [vmem:[%s12 + $0x78] sm:$0xff]
    %3271 = vmatprep.subr.mxu0 0.0
    %3272 = vmatpush1.msra.mxu0 %v3270
    %3273 = vmatprep.subr.mxu0 0.0
    %3274 = vmatpush1.msra.mxu0 %v3269
    %3275 = vmatprep.subr.mxu0 0.0
    %3276 = vmatpush1.msra.mxu0 %v3268
    %3277 = vmatprep.subr.mxu0 0.0
    %3278 = vmatpush1.msra.mxu0 %v3267
    %3279 = vmatprep.subr.mxu0 0.0
    %3280 = vmatpush1.msra.mxu0 %v3266
    %3281 = vmatprep.subr.mxu0 0.0
    %3282 = vmatpush1.msra.mxu0 %v3265
    %3283 = vmatprep.subr.mxu0 0.0
    %3284 = vmatpush1.msra.mxu0 %v3264
    %3285 = vmatprep.subr.mxu0 0.0
    %3286 = vmatpush1.msra.mxu0 %v3263
    %3287 = vmatprep.subr.mxu0 0.0
    %3288 = vmatpush1.msra.mxu0 %v3262
    %3289 = vmatprep.subr.mxu0 0.0
    %3290 = vmatpush1.msra.mxu0 %v3261
    %3291 = vmatprep.subr.mxu0 0.0
    %3292 = vmatpush1.msra.mxu0 %v3260
    %3293 = vmatprep.subr.mxu0 0.0
    %3294 = vmatpush1.msra.mxu0 %v3259
    %3295 = vmatprep.subr.mxu0 0.0
    %3296 = vmatpush1.msra.mxu0 %v3258
    %3297 = vmatprep.subr.mxu0 0.0
    %3298 = vmatpush1.msra.mxu0 %v3257
    %3299 = vmatprep.subr.mxu0 0.0
    %3300 = vmatpush1.msra.mxu0 %v3256
    %3301 = vmatprep.subr.mxu0 0.0
    %3302 = vmatpush1.msra.mxu0 %v3255
    %3303 = vmatprep.subr.mxu0 0.0
    %3304 = vmatpush2.msra.mxu0 0.0
    %3305 = vmatprep.subr.mxu0 0.0
    %3306 = vmatpush2.msra.mxu0 0.0
    %3307 = vmatprep.subr.mxu0 0.0
    %3308 = vmatpush2.msra.mxu0 0.0
    %3309 = vmatprep.subr.mxu0 0.0
    %3310 = vmatpush2.msra.mxu0 0.0
    %3311 = vmatprep.subr.mxu0 0.0
    %3312 = vmatpush2.msra.mxu0 0.0
    %3313 = vmatprep.subr.mxu0 0.0
    %3314 = vmatpush2.msra.mxu0 0.0
    %3315 = vmatprep.subr.mxu0 0.0
    %3316 = vmatpush2.msra.mxu0 0.0
    %3317 = vmatprep.subr.mxu0 0.0
    %3318 = vmatpush2.msra.mxu0 0.0
    %3319 = vmatprep.subr.mxu0 0.0
    %3320 = vmatpush2.msra.mxu0 0.0
    %3321 = vmatprep.subr.mxu0 0.0
    %3322 = vmatpush2.msra.mxu0 0.0
    %3323 = vmatprep.subr.mxu0 0.0
    %3324 = vmatpush2.msra.mxu0 0.0
    %3325 = vmatprep.subr.mxu0 0.0
    %3326 = vmatpush2.msra.mxu0 0.0
    %3327 = vmatprep.subr.mxu0 0.0
    %3328 = vmatpush2.msra.mxu0 0.0
    %3329 = vmatprep.subr.mxu0 0.0
    %3330 = vmatpush2.msra.mxu0 0.0
    %3331 = vmatprep.subr.mxu0 0.0
    %3332 = vmatpush2.msra.mxu0 0.0
    %3333 = vmatprep.subr.mxu0 0.0
    %3334 = vmatpush2.msra.mxu0 0.0
    %3335 = vmatprep.mubr.f32.mxu0 0.0
    %3336 = vmatmul.mubr.f32.gmra.mxu0 %v3252
    %v3337 = vpop.f32.mrf.mxu0
    %v3338 = vadd.f32 0.0, %v3337
    %v3339 = vpop.f32.mrf.mxu0
    %3340 = vdwg.mxu0
    %v3341 = vadd.f32 %v91, %v3338
    %v3342 = vld [vmem:[%s1561] sm:$0xff]
    %v3343 = vld [vmem:[%s1561 + $0x8] sm:$0xff]
    %v3344 = vld [vmem:[%s1561 + $0x10] sm:$0xff]
    %v3345 = vld [vmem:[%s1561 + $0x18] sm:$0xff]
    %v3346 = vld [vmem:[%s1561 + $0x20] sm:$0xff]
    %v3347 = vld [vmem:[%s1561 + $0x28] sm:$0xff]
    %v3348 = vld [vmem:[%s1561 + $0x30] sm:$0xff]
    %v3349 = vld [vmem:[%s1561 + $0x38] sm:$0xff]
    %v3350 = vld [vmem:[%s1561 + $0x40] sm:$0xff]
    %v3351 = vld [vmem:[%s1561 + $0x48] sm:$0xff]
    %v3352 = vld [vmem:[%s1561 + $0x50] sm:$0xff]
    %v3353 = vld [vmem:[%s1561 + $0x58] sm:$0xff]
    %v3354 = vld [vmem:[%s1561 + $0x60] sm:$0xff]
    %v3355 = vld [vmem:[%s1561 + $0x68] sm:$0xff]
    %v3356 = vld [vmem:[%s1561 + $0x70] sm:$0xff]
    %v3357 = vld [vmem:[%s1561 + $0x78] sm:$0xff]
    %v3359 = vrot.slane %v3252, 1
    %3361 = vmatprep.subr.mxu0 0.0
    %3362 = vmatpush1.msra.mxu0 %v3357
    %3363 = vmatprep.subr.mxu0 0.0
    %3364 = vmatpush1.msra.mxu0 %v3356
    %3365 = vmatprep.subr.mxu0 0.0
    %3366 = vmatpush1.msra.mxu0 %v3355
    %3367 = vmatprep.subr.mxu0 0.0
    %3368 = vmatpush1.msra.mxu0 %v3354
    %3369 = vmatprep.subr.mxu0 0.0
    %3370 = vmatpush1.msra.mxu0 %v3353
    %3371 = vmatprep.subr.mxu0 0.0
    %3372 = vmatpush1.msra.mxu0 %v3352
    %3373 = vmatprep.subr.mxu0 0.0
    %3374 = vmatpush1.msra.mxu0 %v3351
    %3375 = vmatprep.subr.mxu0 0.0
    %3376 = vmatpush1.msra.mxu0 %v3350
    %3377 = vmatprep.subr.mxu0 0.0
    %3378 = vmatpush1.msra.mxu0 %v3349
    %3379 = vmatprep.subr.mxu0 0.0
    %3380 = vmatpush1.msra.mxu0 %v3348
    %3381 = vmatprep.subr.mxu0 0.0
    %3382 = vmatpush1.msra.mxu0 %v3347
    %3383 = vmatprep.subr.mxu0 0.0
    %3384 = vmatpush1.msra.mxu0 %v3346
    %3385 = vmatprep.subr.mxu0 0.0
    %3386 = vmatpush1.msra.mxu0 %v3345
    %3387 = vmatprep.subr.mxu0 0.0
    %3388 = vmatpush1.msra.mxu0 %v3344
    %3389 = vmatprep.subr.mxu0 0.0
    %3390 = vmatpush1.msra.mxu0 %v3343
    %3391 = vmatprep.subr.mxu0 0.0
    %3392 = vmatpush1.msra.mxu0 %v3342
    %3393 = vmatprep.subr.mxu0 0.0
    %3394 = vmatpush2.msra.mxu0 0.0
    %3395 = vmatprep.subr.mxu0 0.0
    %3396 = vmatpush2.msra.mxu0 0.0
    %3397 = vmatprep.subr.mxu0 0.0
    %3398 = vmatpush2.msra.mxu0 0.0
    %3399 = vmatprep.subr.mxu0 0.0
    %3400 = vmatpush2.msra.mxu0 0.0
    %3401 = vmatprep.subr.mxu0 0.0
    %3402 = vmatpush2.msra.mxu0 0.0
    %3403 = vmatprep.subr.mxu0 0.0
    %3404 = vmatpush2.msra.mxu0 0.0
    %3405 = vmatprep.subr.mxu0 0.0
    %3406 = vmatpush2.msra.mxu0 0.0
    %3407 = vmatprep.subr.mxu0 0.0
    %3408 = vmatpush2.msra.mxu0 0.0
    %3409 = vmatprep.subr.mxu0 0.0
    %3410 = vmatpush2.msra.mxu0 0.0
    %3411 = vmatprep.subr.mxu0 0.0
    %3412 = vmatpush2.msra.mxu0 0.0
    %3413 = vmatprep.subr.mxu0 0.0
    %3414 = vmatpush2.msra.mxu0 0.0
    %3415 = vmatprep.subr.mxu0 0.0
    %3416 = vmatpush2.msra.mxu0 0.0
    %3417 = vmatprep.subr.mxu0 0.0
    %3418 = vmatpush2.msra.mxu0 0.0
    %3419 = vmatprep.subr.mxu0 0.0
    %3420 = vmatpush2.msra.mxu0 0.0
    %3421 = vmatprep.subr.mxu0 0.0
    %3422 = vmatpush2.msra.mxu0 0.0
    %3423 = vmatprep.subr.mxu0 0.0
    %3424 = vmatpush2.msra.mxu0 0.0
    %3425 = vmatprep.mubr.f32.mxu0 0.0
    %3426 = vmatmul.mubr.f32.gmra.mxu0 %v3359
    %v3427 = vpop.f32.mrf.mxu0
    %v3428 = vadd.f32 0.0, %v3427
    %v3429 = vpop.f32.mrf.mxu0
    %3430 = vdwg.mxu0
    %v3431 = vadd.f32 %v3341, %v3428
    %v3432 = vld [vmem:[%s1652] sm:$0xff]
    %v3433 = vld [vmem:[%s1652 + $0x8] sm:$0xff]
    %v3434 = vld [vmem:[%s1652 + $0x10] sm:$0xff]
    %v3435 = vld [vmem:[%s1652 + $0x18] sm:$0xff]
    %v3436 = vld [vmem:[%s1652 + $0x20] sm:$0xff]
    %v3437 = vld [vmem:[%s1652 + $0x28] sm:$0xff]
    %v3438 = vld [vmem:[%s1652 + $0x30] sm:$0xff]
    %v3439 = vld [vmem:[%s1652 + $0x38] sm:$0xff]
    %v3440 = vld [vmem:[%s1652 + $0x40] sm:$0xff]
    %v3441 = vld [vmem:[%s1652 + $0x48] sm:$0xff]
    %v3442 = vld [vmem:[%s1652 + $0x50] sm:$0xff]
    %v3443 = vld [vmem:[%s1652 + $0x58] sm:$0xff]
    %v3444 = vld [vmem:[%s1652 + $0x60] sm:$0xff]
    %v3445 = vld [vmem:[%s1652 + $0x68] sm:$0xff]
    %v3446 = vld [vmem:[%s1652 + $0x70] sm:$0xff]
    %v3447 = vld [vmem:[%s1652 + $0x78] sm:$0xff]
    %v3448 = vrot.slane %v3252, 2
    %3450 = vmatprep.subr.mxu0 0.0
    %3451 = vmatpush1.msra.mxu0 %v3447
    %3452 = vmatprep.subr.mxu0 0.0
    %3453 = vmatpush1.msra.mxu0 %v3446
    %3454 = vmatprep.subr.mxu0 0.0
    %3455 = vmatpush1.msra.mxu0 %v3445
    %3456 = vmatprep.subr.mxu0 0.0
    %3457 = vmatpush1.msra.mxu0 %v3444
    %3458 = vmatprep.subr.mxu0 0.0
    %3459 = vmatpush1.msra.mxu0 %v3443
    %3460 = vmatprep.subr.mxu0 0.0
    %3461 = vmatpush1.msra.mxu0 %v3442
    %3462 = vmatprep.subr.mxu0 0.0
    %3463 = vmatpush1.msra.mxu0 %v3441
    %3464 = vmatprep.subr.mxu0 0.0
    %3465 = vmatpush1.msra.mxu0 %v3440
    %3466 = vmatprep.subr.mxu0 0.0
    %3467 = vmatpush1.msra.mxu0 %v3439
    %3468 = vmatprep.subr.mxu0 0.0
    %3469 = vmatpush1.msra.mxu0 %v3438
    %3470 = vmatprep.subr.mxu0 0.0
    %3471 = vmatpush1.msra.mxu0 %v3437
    %3472 = vmatprep.subr.mxu0 0.0
    %3473 = vmatpush1.msra.mxu0 %v3436
    %3474 = vmatprep.subr.mxu0 0.0
    %3475 = vmatpush1.msra.mxu0 %v3435
    %3476 = vmatprep.subr.mxu0 0.0
    %3477 = vmatpush1.msra.mxu0 %v3434
    %3478 = vmatprep.subr.mxu0 0.0
    %3479 = vmatpush1.msra.mxu0 %v3433
    %3480 = vmatprep.subr.mxu0 0.0
    %3481 = vmatpush1.msra.mxu0 %v3432
    %3482 = vmatprep.subr.mxu0 0.0
    %3483 = vmatpush2.msra.mxu0 0.0
    %3484 = vmatprep.subr.mxu0 0.0
    %3485 = vmatpush2.msra.mxu0 0.0
    %3486 = vmatprep.subr.mxu0 0.0
    %3487 = vmatpush2.msra.mxu0 0.0
    %3488 = vmatprep.subr.mxu0 0.0
    %3489 = vmatpush2.msra.mxu0 0.0
    %3490 = vmatprep.subr.mxu0 0.0
    %3491 = vmatpush2.msra.mxu0 0.0
    %3492 = vmatprep.subr.mxu0 0.0
    %3493 = vmatpush2.msra.mxu0 0.0
    %3494 = vmatprep.subr.mxu0 0.0
    %3495 = vmatpush2.msra.mxu0 0.0
    %3496 = vmatprep.subr.mxu0 0.0
    %3497 = vmatpush2.msra.mxu0 0.0
    %3498 = vmatprep.subr.mxu0 0.0
    %3499 = vmatpush2.msra.mxu0 0.0
    %3500 = vmatprep.subr.mxu0 0.0
    %3501 = vmatpush2.msra.mxu0 0.0
    %3502 = vmatprep.subr.mxu0 0.0
    %3503 = vmatpush2.msra.mxu0 0.0
    %3504 = vmatprep.subr.mxu0 0.0
    %3505 = vmatpush2.msra.mxu0 0.0
    %3506 = vmatprep.subr.mxu0 0.0
    %3507 = vmatpush2.msra.mxu0 0.0
    %3508 = vmatprep.subr.mxu0 0.0
    %3509 = vmatpush2.msra.mxu0 0.0
    %3510 = vmatprep.subr.mxu0 0.0
    %3511 = vmatpush2.msra.mxu0 0.0
    %3512 = vmatprep.subr.mxu0 0.0
    %3513 = vmatpush2.msra.mxu0 0.0
    %3514 = vmatprep.mubr.f32.mxu0 0.0
    %3515 = vmatmul.mubr.f32.gmra.mxu0 %v3448
    %v3516 = vpop.f32.mrf.mxu0
    %v3517 = vadd.f32 0.0, %v3516
    %v3518 = vpop.f32.mrf.mxu0
    %3519 = vdwg.mxu0
    %v3520 = vadd.f32 %v3431, %v3517
    %v3521 = vld [vmem:[%s1742] sm:$0xff]
    %v3522 = vld [vmem:[%s1742 + $0x8] sm:$0xff]
    %v3523 = vld [vmem:[%s1742 + $0x10] sm:$0xff]
    %v3524 = vld [vmem:[%s1742 + $0x18] sm:$0xff]
    %v3525 = vld [vmem:[%s1742 + $0x20] sm:$0xff]
    %v3526 = vld [vmem:[%s1742 + $0x28] sm:$0xff]
    %v3527 = vld [vmem:[%s1742 + $0x30] sm:$0xff]
    %v3528 = vld [vmem:[%s1742 + $0x38] sm:$0xff]
    %v3529 = vld [vmem:[%s1742 + $0x40] sm:$0xff]
    %v3530 = vld [vmem:[%s1742 + $0x48] sm:$0xff]
    %v3531 = vld [vmem:[%s1742 + $0x50] sm:$0xff]
    %v3532 = vld [vmem:[%s1742 + $0x58] sm:$0xff]
    %v3533 = vld [vmem:[%s1742 + $0x60] sm:$0xff]
    %v3534 = vld [vmem:[%s1742 + $0x68] sm:$0xff]
    %v3535 = vld [vmem:[%s1742 + $0x70] sm:$0xff]
    %v3536 = vld [vmem:[%s1742 + $0x78] sm:$0xff]
    %v3537 = vrot.slane %v3252, 3
    %3539 = vmatprep.subr.mxu0 0.0
    %3540 = vmatpush1.msra.mxu0 %v3536
    %3541 = vmatprep.subr.mxu0 0.0
    %3542 = vmatpush1.msra.mxu0 %v3535
    %3543 = vmatprep.subr.mxu0 0.0
    %3544 = vmatpush1.msra.mxu0 %v3534
    %3545 = vmatprep.subr.mxu0 0.0
    %3546 = vmatpush1.msra.mxu0 %v3533
    %3547 = vmatprep.subr.mxu0 0.0
    %3548 = vmatpush1.msra.mxu0 %v3532
    %3549 = vmatprep.subr.mxu0 0.0
    %3550 = vmatpush1.msra.mxu0 %v3531
    %3551 = vmatprep.subr.mxu0 0.0
    %3552 = vmatpush1.msra.mxu0 %v3530
    %3553 = vmatprep.subr.mxu0 0.0
    %3554 = vmatpush1.msra.mxu0 %v3529
    %3555 = vmatprep.subr.mxu0 0.0
    %3556 = vmatpush1.msra.mxu0 %v3528
    %3557 = vmatprep.subr.mxu0 0.0
    %3558 = vmatpush1.msra.mxu0 %v3527
    %3559 = vmatprep.subr.mxu0 0.0
    %3560 = vmatpush1.msra.mxu0 %v3526
    %3561 = vmatprep.subr.mxu0 0.0
    %3562 = vmatpush1.msra.mxu0 %v3525
    %3563 = vmatprep.subr.mxu0 0.0
    %3564 = vmatpush1.msra.mxu0 %v3524
    %3565 = vmatprep.subr.mxu0 0.0
    %3566 = vmatpush1.msra.mxu0 %v3523
    %3567 = vmatprep.subr.mxu0 0.0
    %3568 = vmatpush1.msra.mxu0 %v3522
    %3569 = vmatprep.subr.mxu0 0.0
    %3570 = vmatpush1.msra.mxu0 %v3521
    %3571 = vmatprep.subr.mxu0 0.0
    %3572 = vmatpush2.msra.mxu0 0.0
    %3573 = vmatprep.subr.mxu0 0.0
    %3574 = vmatpush2.msra.mxu0 0.0
    %3575 = vmatprep.subr.mxu0 0.0
    %3576 = vmatpush2.msra.mxu0 0.0
    %3577 = vmatprep.subr.mxu0 0.0
    %3578 = vmatpush2.msra.mxu0 0.0
    %3579 = vmatprep.subr.mxu0 0.0
    %3580 = vmatpush2.msra.mxu0 0.0
    %3581 = vmatprep.subr.mxu0 0.0
    %3582 = vmatpush2.msra.mxu0 0.0
    %3583 = vmatprep.subr.mxu0 0.0
    %3584 = vmatpush2.msra.mxu0 0.0
    %3585 = vmatprep.subr.mxu0 0.0
    %3586 = vmatpush2.msra.mxu0 0.0
    %3587 = vmatprep.subr.mxu0 0.0
    %3588 = vmatpush2.msra.mxu0 0.0
    %3589 = vmatprep.subr.mxu0 0.0
    %3590 = vmatpush2.msra.mxu0 0.0
    %3591 = vmatprep.subr.mxu0 0.0
    %3592 = vmatpush2.msra.mxu0 0.0
    %3593 = vmatprep.subr.mxu0 0.0
    %3594 = vmatpush2.msra.mxu0 0.0
    %3595 = vmatprep.subr.mxu0 0.0
    %3596 = vmatpush2.msra.mxu0 0.0
    %3597 = vmatprep.subr.mxu0 0.0
    %3598 = vmatpush2.msra.mxu0 0.0
    %3599 = vmatprep.subr.mxu0 0.0
    %3600 = vmatpush2.msra.mxu0 0.0
    %3601 = vmatprep.subr.mxu0 0.0
    %3602 = vmatpush2.msra.mxu0 0.0
    %3603 = vmatprep.mubr.f32.mxu0 0.0
    %3604 = vmatmul.mubr.f32.gmra.mxu0 %v3537
    %v3605 = vpop.f32.mrf.mxu0
    %v3606 = vadd.f32 0.0, %v3605
    %v3607 = vpop.f32.mrf.mxu0
    %3608 = vdwg.mxu0
    %v3609 = vadd.f32 %v3520, %v3606
    %v3610 = vmax.f32 %v3609, 0.0
    %v3612 = vsel %vm1833, %v3610, 0
    %3614 = vmatprep.subr.mxu0 0.0
    %3615 = vmatpush1.msra.mxu0 0.0
    %3616 = vmatprep.subr.mxu0 0.0
    %3617 = vmatpush1.msra.mxu0 0.0
    %3618 = vmatprep.subr.mxu0 0.0
    %3619 = vmatpush1.msra.mxu0 0.0
    %3620 = vmatprep.subr.mxu0 0.0
    %3621 = vmatpush1.msra.mxu0 0.0
    %3622 = vmatprep.subr.mxu0 0.0
    %3623 = vmatpush1.msra.mxu0 0.0
    %3624 = vmatprep.subr.mxu0 0.0
    %3625 = vmatpush1.msra.mxu0 0.0
    %3626 = vmatprep.subr.mxu0 0.0
    %3627 = vmatpush1.msra.mxu0 0.0
    %3628 = vmatprep.subr.mxu0 0.0
    %3629 = vmatpush1.msra.mxu0 0.0
    %3630 = vmatprep.subr.mxu0 0.0
    %3631 = vmatpush1.msra.mxu0 0.0
    %3632 = vmatprep.subr.mxu0 0.0
    %3633 = vmatpush1.msra.mxu0 0.0
    %3634 = vmatprep.subr.mxu0 0.0
    %3635 = vmatpush1.msra.mxu0 0.0
    %3636 = vmatprep.subr.mxu0 0.0
    %3637 = vmatpush1.msra.mxu0 0.0
    %3638 = vmatprep.subr.mxu0 0.0
    %3639 = vmatpush1.msra.mxu0 %v95
    %3640 = vmatprep.subr.mxu0 0.0
    %3641 = vmatpush1.msra.mxu0 %v94
    %3642 = vmatprep.subr.mxu0 0.0
    %3643 = vmatpush1.msra.mxu0 %v93
    %3644 = vmatprep.subr.mxu0 0.0
    %3645 = vmatpush1.msra.mxu0 %v92
    %3646 = vmatprep.subr.mxu0 0.0
    %3647 = vmatpush2.msra.mxu0 0.0
    %3648 = vmatprep.subr.mxu0 0.0
    %3649 = vmatpush2.msra.mxu0 0.0
    %3650 = vmatprep.subr.mxu0 0.0
    %3651 = vmatpush2.msra.mxu0 0.0
    %3652 = vmatprep.subr.mxu0 0.0
    %3653 = vmatpush2.msra.mxu0 0.0
    %3654 = vmatprep.subr.mxu0 0.0
    %3655 = vmatpush2.msra.mxu0 0.0
    %3656 = vmatprep.subr.mxu0 0.0
    %3657 = vmatpush2.msra.mxu0 0.0
    %3658 = vmatprep.subr.mxu0 0.0
    %3659 = vmatpush2.msra.mxu0 0.0
    %3660 = vmatprep.subr.mxu0 0.0
    %3661 = vmatpush2.msra.mxu0 0.0
    %3662 = vmatprep.subr.mxu0 0.0
    %3663 = vmatpush2.msra.mxu0 0.0
    %3664 = vmatprep.subr.mxu0 0.0
    %3665 = vmatpush2.msra.mxu0 0.0
    %3666 = vmatprep.subr.mxu0 0.0
    %3667 = vmatpush2.msra.mxu0 0.0
    %3668 = vmatprep.subr.mxu0 0.0
    %3669 = vmatpush2.msra.mxu0 0.0
    %3670 = vmatprep.subr.mxu0 0.0
    %3671 = vmatpush2.msra.mxu0 0.0
    %3672 = vmatprep.subr.mxu0 0.0
    %3673 = vmatpush2.msra.mxu0 0.0
    %3674 = vmatprep.subr.mxu0 0.0
    %3675 = vmatpush2.msra.mxu0 0.0
    %3676 = vmatprep.subr.mxu0 0.0
    %3677 = vmatpush2.msra.mxu0 0.0
    %3678 = vmatprep.mubr.f32.mxu0 0.0
    %3679 = vmatmul.mubr.f32.gmra.mxu0 %v3612
    %v3680 = vpop.f32.mrf.mxu0
    %v3681 = vadd.f32 %v96, %v3680
    %v3682 = vpop.f32.mrf.mxu0
    %3683 = vdwg.mxu0
    %3684 = vst.msk [vmem:[#allocation2 + $0x1] sm:$0x1] %vm1907, %v3681
    // Predicated region
    $region66: #{cnn1_forward.1} parent=1 // pred_check
      _
    $region67: #{cnn1_forward.1} parent=1 // pred_check_branch
      %3686 = sbr.rel (0) target = $region69
    $region68: #{cnn1_forward.1} parent=1 // pred_region
      %s3688 = ssub.s32 32, 32
      %3689 = vsyncadd [#allocation3], %s3688
      %s3691 = sshll.u32 [#allocation2], 4
      %s3692 = int_to_ptr.vmem [resolvable:$true] %s3691
      %3694 = dma.vmem_to_hbm [thread:$0]  %s3692, 32, %s16, [#allocation3]
    $region69: #{cnn1_forward.1} parent=1 // pred_fallthru
      _
    // Predicated region
    $region70: #{cnn1_forward.1} parent=1 // pred_check
      _
    $region71: #{cnn1_forward.1} parent=1 // pred_check_branch
      %3696 = sbr.rel (0) target = $region73
    $region72: #{cnn1_forward.1} parent=1 // pred_region
      %3697 = dma.done [#allocation3], 32
    $region73: #{cnn1_forward.1} parent=1 // pred_fallthru
      _
    %3698 = vsyncpa [#allocation3], 1

</llo_original>
